<compile_context>
chip_gen: v7x
topology: tpu7x:2x2x1
jax: 0.10.0
libtpu: 0.0.40
codegen_flags: <defaults>
</compile_context>

<pallas_src>
import functools

import jax
import jax.numpy as jnp
from jax import lax
from jax.experimental import pallas as pl
from jax.experimental.pallas import tpu as pltpu

F32 = jnp.float32
BF16 = jnp.bfloat16


# --------------------------------------------------------------------------
# Fused Linear(+bias)+activation, tiled over rows (bf16 operands, f32 accum)
# --------------------------------------------------------------------------
def _linear_kernel(act, x_ref, w_ref, b_ref, o_ref):
    y = jnp.dot(x_ref[...].astype(BF16), w_ref[...].astype(BF16),
                preferred_element_type=F32) + b_ref[...]
    if act == "relu":
        y = jnp.maximum(y, 0.0)
    elif act == "tanh":
        y = jnp.tanh(y)
    o_ref[...] = y


def linear(x, w, b, act="none", block_m=256):
    M, K = x.shape
    N = w.shape[1]
    bm = M if M <= block_m else block_m
    return pl.pallas_call(
        functools.partial(_linear_kernel, act),
        grid=(pl.cdiv(M, bm),),
        in_specs=[pl.BlockSpec((bm, K), lambda i: (i, 0)),
                  pl.BlockSpec((K, N), lambda i: (0, 0)),
                  pl.BlockSpec((1, N), lambda i: (0, 0))],
        out_specs=pl.BlockSpec((bm, N), lambda i: (i, 0)),
        out_shape=jax.ShapeDtypeStruct((M, N), F32),
        compiler_params=pltpu.CompilerParams(dimension_semantics=("parallel",)),
    )(x, w, b)


# --------------------------------------------------------------------------
# Fused bidirectional LSTM recurrence.
# Input gates gx = [x @ W_ih_fwd + b_fwd | x_rev @ W_ih_bwd + b_bwd] are
# precomputed outside (one big matmul).  The recurrence does a single
# block-diagonal h @ W_hh per step; state for both directions lives in one
# (B, 2H) carry.  Time is chunked over an "arbitrary" grid axis with (h, c)
# carried in VMEM scratch (v7x-safe for long sequences).
# --------------------------------------------------------------------------
def _bilstm_core_kernel(gx_ref, whh_ref, o_ref, h_ref, c_ref):
    Tc = gx_ref.shape[0]
    H2 = whh_ref.shape[0]                     # 2H (fwd H | bwd H)

    @pl.when(pl.program_id(0) == 0)
    def _():
        h_ref[...] = jnp.zeros_like(h_ref)
        c_ref[...] = jnp.zeros_like(c_ref)

    w = whh_ref[...]                          # (2H, 8H) bf16, block-diagonal

    def step(t, carry):
        h, c = carry                          # (B, 2H) f32 each
        gates = gx_ref[t] + jnp.dot(h.astype(BF16), w, preferred_element_type=F32)
        i = jax.nn.sigmoid(gates[:, 0 * H2:1 * H2])
        f = jax.nn.sigmoid(gates[:, 1 * H2:2 * H2])
        g = jnp.tanh(gates[:, 2 * H2:3 * H2])
        o = jax.nn.sigmoid(gates[:, 3 * H2:4 * H2])
        c = f * c + i * g
        h = o * jnp.tanh(c)
        o_ref[t] = h
        return (h, c)

    h, c = lax.fori_loop(0, Tc, step, (h_ref[...], c_ref[...]))
    h_ref[...] = h
    c_ref[...] = c


def lstm_core(gx, w_hh, block_t=128):
    T, B, G = gx.shape
    H2 = w_hh.shape[0]
    bt = T if T <= block_t else block_t
    return pl.pallas_call(
        _bilstm_core_kernel,
        grid=(pl.cdiv(T, bt),),
        in_specs=[pl.BlockSpec((bt, B, G), lambda i: (i, 0, 0)),
                  pl.BlockSpec((H2, G), lambda i: (0, 0))],
        out_specs=pl.BlockSpec((bt, B, H2), lambda i: (i, 0, 0)),
        out_shape=jax.ShapeDtypeStruct((T, B, H2), F32),
        scratch_shapes=[pltpu.VMEM((B, H2), F32), pltpu.VMEM((B, H2), F32)],
        compiler_params=pltpu.CompilerParams(
            dimension_semantics=("arbitrary",),
            vmem_limit_bytes=32 * 1024 * 1024),
    )(gx, w_hh)


# --------------------------------------------------------------------------
# Soft-alignment attention: bf16 score matmul, masked softmax both ways
# (no transposes: dot_general contracts directly), approx reciprocal.
# --------------------------------------------------------------------------
def _attention_kernel(p_ref, h_ref, pm_ref, hmr_ref, hmc_ref, ap_ref, ah_ref):
    P = p_ref[0]                              # (Tp, D)
    Hh = h_ref[0]                             # (Th, D)
    pm = pm_ref[0]                            # (Tp, 1)
    hmr = hmr_ref[0]                          # (1, Th)
    hmc = hmc_ref[0]                          # (Th, 1)

    scores = lax.dot_general(P.astype(BF16), Hh.astype(BF16),
                             (((1,), (1,)), ((), ())),
                             preferred_element_type=F32)        # (Tp, Th)

    # softmax over hypothesis positions (masked), f32 math
    s1 = scores + (hmr - 1.0) * 1e7
    s1 = s1 - jnp.max(s1, axis=-1, keepdims=True)
    e1 = jnp.exp(s1) * hmr
    alpha = e1 * pl.reciprocal(jnp.sum(e1, axis=-1, keepdims=True) + 1e-13,
                               approx=True)
    ap_ref[0] = lax.dot_general(alpha.astype(BF16), Hh.astype(BF16),
                                (((1,), (0,)), ((), ())),
                                preferred_element_type=F32) * pm

    # softmax over premise positions (axis 0 of scores, no transpose)
    s2 = scores + (pm - 1.0) * 1e7
    s2 = s2 - jnp.max(s2, axis=0, keepdims=True)
    e2 = jnp.exp(s2) * pm
    beta = e2 * pl.reciprocal(jnp.sum(e2, axis=0, keepdims=True) + 1e-13,
                              approx=True)
    ah_ref[0] = lax.dot_general(beta.astype(BF16), P.astype(BF16),
                                (((0,), (0,)), ((), ())),
                                preferred_element_type=F32) * hmc


def softmax_attention(enc_p, enc_h, pmask, hmask):
    B, Tp, D = enc_p.shape
    Th = enc_h.shape[1]
    pm = pmask[:, :, None]                    # (B, Tp, 1)
    hm_row = hmask[:, None, :]                # (B, 1, Th)
    hm_col = hmask[:, :, None]                # (B, Th, 1)
    ap, ah = pl.pallas_call(
        _attention_kernel,
        grid=(B,),
        in_specs=[pl.BlockSpec((1, Tp, D), lambda b: (b, 0, 0)),
                  pl.BlockSpec((1, Th, D), lambda b: (b, 0, 0)),
                  pl.BlockSpec((1, Tp, 1), lambda b: (b, 0, 0)),
                  pl.BlockSpec((1, 1, Th), lambda b: (b, 0, 0)),
                  pl.BlockSpec((1, Th, 1), lambda b: (b, 0, 0))],
        out_specs=[pl.BlockSpec((1, Tp, D), lambda b: (b, 0, 0)),
                   pl.BlockSpec((1, Th, D), lambda b: (b, 0, 0))],
        out_shape=(jax.ShapeDtypeStruct((B, Tp, D), F32),
                   jax.ShapeDtypeStruct((B, Th, D), F32)),
        compiler_params=pltpu.CompilerParams(dimension_semantics=("parallel",)),
    )(enc_p, enc_h, pm, hm_row, hm_col)
    return ap, ah


# --------------------------------------------------------------------------
# Fused projection chain: relu(feat@W1+b1) -> relu(lc@W2a + mem@W2b + b2)
# (proj_{concat,sub,mul} and proj_mem fused into one kernel, concat avoided)
# --------------------------------------------------------------------------
def _proj_chain_kernel(feat_ref, w1_ref, b1_ref, mem_ref, w2a_ref, w2b_ref, b2_ref, o_ref):
    lc = jnp.dot(feat_ref[...].astype(BF16), w1_ref[...].astype(BF16),
                 preferred_element_type=F32) + b1_ref[...]
    lc = jnp.maximum(lc, 0.0)
    y = (jnp.dot(lc.astype(BF16), w2a_ref[...].astype(BF16), preferred_element_type=F32)
         + jnp.dot(mem_ref[...].astype(BF16), w2b_ref[...].astype(BF16),
                   preferred_element_type=F32)
         + b2_ref[...])
    o_ref[...] = jnp.maximum(y, 0.0)


def proj_chain(feat, mem, w1, b1, w2a, w2b, b2, block_m=256):
    M, K1 = feat.shape
    D2 = mem.shape[1]
    H = w1.shape[1]
    bm = M if M <= block_m else block_m
    return pl.pallas_call(
        _proj_chain_kernel,
        grid=(pl.cdiv(M, bm),),
        in_specs=[pl.BlockSpec((bm, K1), lambda i: (i, 0)),
                  pl.BlockSpec((K1, H), lambda i: (0, 0)),
                  pl.BlockSpec((1, H), lambda i: (0, 0)),
                  pl.BlockSpec((bm, D2), lambda i: (i, 0)),
                  pl.BlockSpec((H, H), lambda i: (0, 0)),
                  pl.BlockSpec((D2, H), lambda i: (0, 0)),
                  pl.BlockSpec((1, H), lambda i: (0, 0))],
        out_specs=pl.BlockSpec((bm, H), lambda i: (i, 0)),
        out_shape=jax.ShapeDtypeStruct((M, H), F32),
        compiler_params=pltpu.CompilerParams(dimension_semantics=("parallel",)),
    )(feat, w1, b1, mem, w2a, w2b, b2)


# --------------------------------------------------------------------------
# Gated memory update (sigmoid projection + convex combination), in place on prev_mem
# --------------------------------------------------------------------------
def _gated_kernel(x_ref, w_ref, b_ref, mem_ref, o_ref):
    x = x_ref[...]
    mem = mem_ref[...]
    g = jax.nn.sigmoid(jnp.dot(x.astype(BF16), w_ref[...].astype(BF16),
                               preferred_element_type=F32) + b_ref[...])
    o_ref[...] = g * x + (1.0 - g) * mem


def gated_update(x, w, b, mem, block_m=256):
    M, D = x.shape
    bm = M if M <= block_m else block_m
    return pl.pallas_call(
        _gated_kernel,
        grid=(pl.cdiv(M, bm),),
        in_specs=[pl.BlockSpec((bm, D), lambda i: (i, 0)),
                  pl.BlockSpec((D, D), lambda i: (0, 0)),
                  pl.BlockSpec((1, D), lambda i: (0, 0)),
                  pl.BlockSpec((bm, D), lambda i: (i, 0))],
        out_specs=pl.BlockSpec((bm, D), lambda i: (i, 0)),
        out_shape=jax.ShapeDtypeStruct((M, D), F32),
        input_output_aliases={3: 0},
        compiler_params=pltpu.CompilerParams(dimension_semantics=("parallel",)),
    )(x, w, b, mem)


# --------------------------------------------------------------------------
# Masked average + max pooling over time, fused into a single 2D-wide store
# --------------------------------------------------------------------------
def _pool_kernel(v_ref, m_ref, o_ref):
    v = v_ref[0]                              # (T, D)
    m = m_ref[0]                              # (T, 1)
    cnt = jnp.sum(m, axis=0, keepdims=True)   # (1, 1)
    avg = jnp.sum(v * m, axis=0, keepdims=True) * pl.reciprocal(cnt, approx=True)
    mx = jnp.max(v * m + (-1e7) * (1.0 - m), axis=0, keepdims=True)
    o_ref[0] = jnp.concatenate([avg, mx], axis=-1)     # (1, 2D) lane-dense


def masked_pool(v, mask):
    B, T, D = v.shape
    m = mask[:, :, None]
    out = pl.pallas_call(
        _pool_kernel,
        grid=(B,),
        in_specs=[pl.BlockSpec((1, T, D), lambda b: (b, 0, 0)),
                  pl.BlockSpec((1, T, 1), lambda b: (b, 0, 0))],
        out_specs=pl.BlockSpec((1, 1, 2 * D), lambda b: (b, 0, 0)),
        out_shape=jax.ShapeDtypeStruct((B, 1, 2 * D), F32),
        compiler_params=pltpu.CompilerParams(dimension_semantics=("parallel",)),
    )(v, m)
    return out[:, 0, :]                       # (B, 2D) = [avg | max]


# --------------------------------------------------------------------------
# Model wrappers (plain-JAX glue around the kernels)
# --------------------------------------------------------------------------
def bilstm(x, lengths, lp):
    """Bidirectional LSTM with pack_padded-style semantics.  x: (B,T,D) -> (B,T,2H).
    Outputs at padded positions are zero; the backward direction starts at the true
    sequence end (per-length reversal done with gathers in the wrapper)."""
    B, T, D = x.shape
    H = lp["w_hh"].shape[0] // 2
    mask = (jnp.arange(T)[None, :] < lengths[:, None]).astype(F32)

    # per-length reversed copy of the input for the backward direction
    idx = lengths[:, None] - 1 - jnp.arange(T)[None, :]
    idx = jnp.where(idx < 0, jnp.arange(T)[None, :], idx)
    x_rev = jnp.take_along_axis(x, jnp.broadcast_to(idx[:, :, None], (B, T, D)), axis=1)

    # hoisted input projections: one big matmul per direction
    x_t = jnp.transpose(x, (1, 0, 2)).reshape(T * B, D)
    xr_t = jnp.transpose(x_rev, (1, 0, 2)).reshape(T * B, D)
    gx_f = linear(x_t, lp["w_ih_f"], lp["b_f"])            # (T*B, 4H)
    gx_b = linear(xr_t, lp["w_ih_b"], lp["b_b"])           # (T*B, 4H)
    gx = jnp.concatenate([gx_f.reshape(T * B, 4, H),
                          gx_b.reshape(T * B, 4, H)], axis=-1).reshape(T, B, 8 * H)

    out = lstm_core(gx, lp["w_hh"])                        # (T, B, 2H)
    out = jnp.transpose(out, (1, 0, 2))                    # (B, T, 2H)

    out_f = out[:, :, :H]
    out_b = jnp.take_along_axis(out[:, :, H:],
                                jnp.broadcast_to(idx[:, :, None], (B, T, H)), axis=1)
    res = jnp.concatenate([out_f, out_b], axis=-1)
    return res * mask[:, :, None]


def multi_turn_inference(enc, att, lengths, params):
    B, T, D2 = enc.shape
    H = D2 // 2
    feats = [(jnp.concatenate([enc, att], axis=-1), "concat"),
             (enc - att, "sub"),
             (enc * att, "mul")]

    prev_mem = jnp.zeros_like(enc)                         # (B, T, 2H)
    for feat, name in feats:
        pm = proj_chain(feat.reshape(B * T, -1), prev_mem.reshape(B * T, D2),
                        params[f"proj_{name}_w"], params[f"proj_{name}_b"],
                        params["proj_mem_w_a"], params["proj_mem_w_b"],
                        params["proj_mem_b"])
        lstm_out = bilstm(pm.reshape(B, T, H), lengths, params["comp"])
        prev_mem = gated_update(lstm_out.reshape(B * T, D2),
                                params["proj_comp_w"], params["proj_comp_b"],
                                prev_mem.reshape(B * T, D2)).reshape(B, T, D2)
    return prev_mem


def mimn_forward(params, premises, prem_len, hypotheses, hyp_len):
    B, Tp = premises.shape
    Th = hypotheses.shape[1]
    T = max(Tp, Th)

    pmask = (jnp.arange(Tp)[None, :] < prem_len[:, None]).astype(F32)
    hmask = (jnp.arange(Th)[None, :] < hyp_len[:, None]).astype(F32)

    emb_p = params["embedding"][premises]                  # (B, Tp, E)
    emb_h = params["embedding"][hypotheses]                # (B, Th, E)

    # --- batch-fused encoding (premise + hypothesis share the encoder) ---
    emb_all = jnp.concatenate([jnp.pad(emb_p, ((0, 0), (0, T - Tp), (0, 0))),
                               jnp.pad(emb_h, ((0, 0), (0, T - Th), (0, 0)))], axis=0)
    len_all = jnp.concatenate([prem_len, hyp_len], axis=0)
    enc_all = bilstm(emb_all, len_all, params["enc"])      # (2B, T, 2H)
    enc_p = enc_all[:B, :Tp]
    enc_h = enc_all[B:, :Th]

    att_p, att_h = softmax_attention(enc_p, enc_h, pmask, hmask)

    # --- batch-fused multi-turn inference (both branches share parameters) ---
    enc_cat = jnp.concatenate([jnp.pad(enc_p, ((0, 0), (0, T - Tp), (0, 0))),
                               jnp.pad(enc_h, ((0, 0), (0, T - Th), (0, 0)))], axis=0)
    att_cat = jnp.concatenate([jnp.pad(att_p, ((0, 0), (0, T - Tp), (0, 0))),
                               jnp.pad(att_h, ((0, 0), (0, T - Th), (0, 0)))], axis=0)
    v_all = multi_turn_inference(enc_cat, att_cat, len_all, params)   # (2B, T, 2H)

    # --- batch-fused masked pooling ---
    mask_all = jnp.concatenate([jnp.pad(pmask, ((0, 0), (0, T - Tp))),
                                jnp.pad(hmask, ((0, 0), (0, T - Th)))], axis=0)
    pooled = masked_pool(v_all, mask_all)                  # (2B, 4H) = [avg | max]
    D2 = v_all.shape[-1]
    v_a_avg, v_a_max = pooled[:B, :D2], pooled[:B, D2:]
    v_b_avg, v_b_max = pooled[B:, :D2], pooled[B:, D2:]

    v = jnp.concatenate([v_a_avg, v_a_max, v_b_avg, v_b_max], axis=1)  # (B, 8H)

    hid = linear(v, params["cls_w1"], params["cls_b1"], act="tanh")
    logits = linear(hid, params["cls_w2"], params["cls_b2"], act="none")
    probabilities = jax.nn.softmax(logits, axis=-1)
    return logits, probabilities


# --------------------------------------------------------------------------
# Parameter preparation: bf16 weight casts, block-diagonal fused LSTM W_hh,
# proj_mem weight split (done once, outside the jitted forward).
# --------------------------------------------------------------------------
def prepare_params(p):
    H = p["comp"]["fwd"]["w_hh"].shape[0]

    def combine_whh(whh_f, whh_b):
        Hh = whh_f.shape[0]
        wf = whh_f.reshape(Hh, 4, Hh)
        wb = whh_b.reshape(Hh, 4, Hh)
        w = jnp.zeros((2 * Hh, 4, 2 * Hh), F32)
        w = w.at[:Hh, :, :Hh].set(wf)
        w = w.at[Hh:, :, Hh:].set(wb)
        return w.reshape(2 * Hh, 8 * Hh).astype(BF16)

    def prep_lstm(d):
        return {"w_ih_f": d["fwd"]["w_ih"].astype(BF16), "b_f": d["fwd"]["b"],
                "w_ih_b": d["bwd"]["w_ih"].astype(BF16), "b_b": d["bwd"]["b"],
                "w_hh": combine_whh(d["fwd"]["w_hh"], d["bwd"]["w_hh"])}

    return {
        "embedding": p["embedding"],
        "enc": prep_lstm(p["enc"]),
        "comp": prep_lstm(p["comp"]),
        "proj_concat_w": p["proj_concat_w"].astype(BF16), "proj_concat_b": p["proj_concat_b"],
        "proj_sub_w": p["proj_sub_w"].astype(BF16),       "proj_sub_b": p["proj_sub_b"],
        "proj_mul_w": p["proj_mul_w"].astype(BF16),       "proj_mul_b": p["proj_mul_b"],
        "proj_mem_w_a": p["proj_mem_w"][:H].astype(BF16),
        "proj_mem_w_b": p["proj_mem_w"][H:].astype(BF16),
        "proj_mem_b": p["proj_mem_b"],
        "proj_comp_w": p["proj_comp_w"].astype(BF16), "proj_comp_b": p["proj_comp_b"],
        "cls_w1": p["cls_w1"].astype(BF16), "cls_b1": p["cls_b1"],
        "cls_w2": p["cls_w2"].astype(BF16), "cls_b2": p["cls_b2"],
    }


# --------------------------------------------------------------------------
# Deterministic parameter initialisation (synthetic, shapes match the module)
# --------------------------------------------------------------------------
def init_params(key, vocab_size, embedding_dim, hidden_size, num_classes):
    E, H, C = embedding_dim, hidden_size, num_classes
    keys = iter(jax.random.split(key, 40))

    def dense(fan_in, fan_out):
        lim = (6.0 / (fan_in + fan_out)) ** 0.5
        return jax.random.uniform(next(keys), (fan_in, fan_out), F32, -lim, lim)

    def lstm_params(D, Hh):
        b = jnp.zeros((1, 4 * Hh), F32).at[0, Hh:2 * Hh].set(1.0)  # forget bias = 1
        return {"w_ih": dense(D, 4 * Hh), "w_hh": dense(Hh, 4 * Hh), "b": b}

    emb = jax.random.normal(next(keys), (vocab_size, E), F32)
    emb = emb.at[0].set(0.0)                                       # padding_idx = 0

    return {
        "embedding": emb,
        "enc": {"fwd": lstm_params(E, H), "bwd": lstm_params(E, H)},
        "comp": {"fwd": lstm_params(H, H), "bwd": lstm_params(H, H)},
        "proj_concat_w": dense(4 * H, H), "proj_concat_b": jnp.zeros((1, H), F32),
        "proj_sub_w": dense(2 * H, H),    "proj_sub_b": jnp.zeros((1, H), F32),
        "proj_mul_w": dense(2 * H, H),    "proj_mul_b": jnp.zeros((1, H), F32),
        "proj_mem_w": dense(3 * H, H),    "proj_mem_b": jnp.zeros((1, H), F32),
        "proj_comp_w": dense(2 * H, 2 * H), "proj_comp_b": jnp.zeros((1, 2 * H), F32),
        "cls_w1": dense(8 * H, H), "cls_b1": jnp.zeros((1, H), F32),
        "cls_w2": dense(H, C),     "cls_b2": jnp.zeros((1, C), F32),
    }


# --------------------------------------------------------------------------
if __name__ == "__main__":
    vocab_size, embedding_dim, hidden_size, num_classes = 50, 16, 32, 3
    B, Tp, Th = 2, 8, 6

    key = jax.random.PRNGKey(0)
    kp, kh, kw = jax.random.split(key, 3)

    prem_len = jnp.array([8, 5], jnp.int32)
    hyp_len = jnp.array([6, 4], jnp.int32)

    premises = jax.random.randint(kp, (B, Tp), 1, vocab_size, jnp.int32)
    hypotheses = jax.random.randint(kh, (B, Th), 1, vocab_size, jnp.int32)
    premises = premises * (jnp.arange(Tp)[None, :] < prem_len[:, None]).astype(jnp.int32)
    hypotheses = hypotheses * (jnp.arange(Th)[None, :] < hyp_len[:, None]).astype(jnp.int32)

    params = prepare_params(init_params(kw, vocab_size, embedding_dim, hidden_size, num_classes))

    fwd = jax.jit(mimn_forward)
    logits, probs = fwd(params, premises, prem_len, hypotheses, hyp_len)
    jax.block_until_ready((logits, probs))

    assert logits.shape == (B, num_classes)
    assert probs.shape == (B, num_classes)
    assert bool(jnp.all(jnp.isfinite(logits)))
    assert bool(jnp.allclose(jnp.sum(probs, axis=-1), 1.0, atol=1e-5))
    print("KERNEL_OK")
</pallas_src>

<mosaic_0001>
module attributes {stable_mosaic.version = 11 : i64} {
  func.func @_linear_kernel(%arg0: i32, %arg1: memref<32x16xf32, #tpu.memory_space<vmem>>, %arg2: memref<16x128xbf16, #tpu.memory_space<vmem>>, %arg3: memref<1x128xf32, #tpu.memory_space<vmem>>, %arg4: memref<32x128xf32, #tpu.memory_space<vmem>>) attributes {dimension_semantics = [#tpu.dimension_semantics<parallel>], iteration_bounds = array<i64: 1>, scalar_prefetch = 0 : i64, scratch_operands = 0 : i64, tpu.core_type = #tpu.core_type<tc>, window_params = [{transform_indices = @transform_0, window_bounds = array<i64: 32, 16>}, {pipeline_mode = #tpu.pipeline_mode<synchronous>, transform_indices = @transform_1, window_bounds = array<i64: 16, 128>}, {pipeline_mode = #tpu.pipeline_mode<synchronous>, transform_indices = @transform_2, window_bounds = array<i64: 1, 128>}, {transform_indices = @transform_3, window_bounds = array<i64: 32, 128>}]} {
    %c0 = arith.constant 0 : index
    %c0_0 = arith.constant 0 : index
    %0 = vector.load %arg1[%c0, %c0_0] : memref<32x16xf32, #tpu.memory_space<vmem>>, vector<32x16xf32>
    %1 = arith.truncf %0 : vector<32x16xf32> to vector<32x16xbf16>
    %c0_1 = arith.constant 0 : index
    %c0_2 = arith.constant 0 : index
    %2 = vector.load %arg2[%c0_1, %c0_2] : memref<16x128xbf16, #tpu.memory_space<vmem>>, vector<16x128xbf16>
    %cst = arith.constant dense<0.000000e+00> : vector<32x128xf32>
    %3 = tpu.matmul %1, %2, %cst {dimension_numbers = #tpu.dot_dimension_numbers<[1], [0], [0], [1], [0, 0, 1, 1], [], []>} : vector<32x16xbf16>, vector<16x128xbf16>, vector<32x128xf32> -> vector<32x128xf32>
    %c0_3 = arith.constant 0 : index
    %c0_4 = arith.constant 0 : index
    %4 = vector.load %arg3[%c0_3, %c0_4] : memref<1x128xf32, #tpu.memory_space<vmem>>, vector<1x128xf32>
    %5 = vector.broadcast %4 : vector<1x128xf32> to vector<32x128xf32>
    %6 = arith.addf %3, %5 : vector<32x128xf32>
    %c0_5 = arith.constant 0 : index
    %c0_6 = arith.constant 0 : index
    %7 = vector.load %arg4[%c0_5, %c0_6] : memref<32x128xf32, #tpu.memory_space<vmem>>, vector<32x128xf32>
    tpu.vector_store %arg4[%c0_5, %c0_6], %6 {strides = array<i32>} : memref<32x128xf32, #tpu.memory_space<vmem>>, vector<32x128xf32>,
    return
  }
  func.func @transform_0(%arg0: i32) -> (i32, i32) {
    %c0_i32 = arith.constant 0 : i32
    %c0_i32_0 = arith.constant 0 : i32
    return %arg0, %c0_i32 : i32, i32
  }
  func.func @transform_1(%arg0: i32) -> (i32, i32) {
    %c0_i32 = arith.constant 0 : i32
    %c0_i32_0 = arith.constant 0 : i32
    %c0_i32_1 = arith.constant 0 : i32
    return %c0_i32, %c0_i32_0 : i32, i32
  }
  func.func @transform_2(%arg0: i32) -> (i32, i32) {
    %c0_i32 = arith.constant 0 : i32
    %c0_i32_0 = arith.constant 0 : i32
    %c0_i32_1 = arith.constant 0 : i32
    return %c0_i32, %c0_i32_0 : i32, i32
  }
  func.func @transform_3(%arg0: i32) -> (i32, i32) {
    %c0_i32 = arith.constant 0 : i32
    %c0_i32_0 = arith.constant 0 : i32
    return %arg0, %c0_i32 : i32, i32
  }
}

module attributes {stable_mosaic.version = 11 : i64} {
  func.func @_bilstm_core_kernel(%arg0: i32, %arg1: memref<8x4x256xf32, #tpu.memory_space<vmem>>, %arg2: memref<64x256xbf16, #tpu.memory_space<vmem>>, %arg3: memref<8x4x64xf32, #tpu.memory_space<vmem>>, %arg4: memref<4x64xf32, #tpu.memory_space<vmem>>, %arg5: memref<4x64xf32, #tpu.memory_space<vmem>>) attributes {dimension_semantics = [#tpu.dimension_semantics<arbitrary>], iteration_bounds = array<i64: 1>, scalar_prefetch = 0 : i64, scratch_operands = 2 : i64, tpu.core_type = #tpu.core_type<tc>, window_params = [{transform_indices = @transform_0, window_bounds = array<i64: 8, 4, 256>}, {pipeline_mode = #tpu.pipeline_mode<synchronous>, transform_indices = @transform_1, window_bounds = array<i64: 64, 256>}, {transform_indices = @transform_2, window_bounds = array<i64: 8, 4, 64>}]} {
    %c0_i32 = arith.constant 0 : i32
    %0 = arith.cmpi eq, %arg0, %c0_i32 : i32
    %1 = arith.extui %0 : i1 to i32
    %c0_i32_0 = arith.constant 0 : i32
    %2 = arith.cmpi ne, %1, %c0_i32_0 : i32
    scf.if %2 {
      %cst = arith.constant 0.000000e+00 : f32
      %10 = vector.broadcast %cst : f32 to vector<4x64xf32>
      %c0_12 = arith.constant 0 : index
      %c0_13 = arith.constant 0 : index
      %11 = vector.load %arg4[%c0_12, %c0_13] : memref<4x64xf32, #tpu.memory_space<vmem>>, vector<4x64xf32>
      tpu.vector_store %arg4[%c0_12, %c0_13], %10 {strides = array<i32>} : memref<4x64xf32, #tpu.memory_space<vmem>>, vector<4x64xf32>,
      %cst_14 = arith.constant 0.000000e+00 : f32
      %12 = vector.broadcast %cst_14 : f32 to vector<4x64xf32>
      %c0_15 = arith.constant 0 : index
      %c0_16 = arith.constant 0 : index
      %13 = vector.load %arg5[%c0_15, %c0_16] : memref<4x64xf32, #tpu.memory_space<vmem>>, vector<4x64xf32>
      tpu.vector_store %arg5[%c0_15, %c0_16], %12 {strides = array<i32>} : memref<4x64xf32, #tpu.memory_space<vmem>>, vector<4x64xf32>,
    } else {
    }
    %c0 = arith.constant 0 : index
    %c0_1 = arith.constant 0 : index
    %3 = vector.load %arg2[%c0, %c0_1] : memref<64x256xbf16, #tpu.memory_space<vmem>>, vector<64x256xbf16>
    %c0_2 = arith.constant 0 : index
    %c0_3 = arith.constant 0 : index
    %4 = vector.load %arg4[%c0_2, %c0_3] : memref<4x64xf32, #tpu.memory_space<vmem>>, vector<4x64xf32>
    %c0_4 = arith.constant 0 : index
    %c0_5 = arith.constant 0 : index
    %5 = vector.load %arg5[%c0_4, %c0_5] : memref<4x64xf32, #tpu.memory_space<vmem>>, vector<4x64xf32>
    %c0_i32_6 = arith.constant 0 : i32
    %c8_i32 = arith.constant 8 : i32
    %6 = arith.addi %c0_i32_6, %c8_i32 : i32
    %c1_i32 = arith.constant 1 : i32
    %7:2 = scf.for %arg6 = %c0_i32_6 to %6 step %c1_i32 iter_args(%arg7 = %4, %arg8 = %5) -> (vector<4x64xf32>, vector<4x64xf32>)  : i32 {
      %10 = arith.index_cast %arg6 : i32 to index
      %c0_12 = arith.constant 0 : index
      %c0_13 = arith.constant 0 : index
      %11 = vector.load %arg1[%10, %c0_12, %c0_13] : memref<8x4x256xf32, #tpu.memory_space<vmem>>, vector<1x4x256xf32>
      %12 = vector.shape_cast %11 : vector<1x4x256xf32> to vector<4x256xf32>
      %13 = arith.truncf %arg7 : vector<4x64xf32> to vector<4x64xbf16>
      %cst = arith.constant dense<0.000000e+00> : vector<4x256xf32>
      %14 = tpu.matmul %13, %3, %cst {dimension_numbers = #tpu.dot_dimension_numbers<[1], [0], [0], [1], [0, 0, 1, 1], [], []>} : vector<4x64xbf16>, vector<64x256xbf16>, vector<4x256xf32> -> vector<4x256xf32>
      %15 = arith.addf %12, %14 : vector<4x256xf32>
      %16 = vector.extract_strided_slice %15 {offsets = [0, 0], sizes = [4, 64], strides = [1, 1]} : vector<4x256xf32> to vector<4x64xf32>
      %17 = arith.negf %16 : vector<4x64xf32>
      %18 = math.exp %17 : vector<4x64xf32>
      %cst_14 = arith.constant 1.000000e+00 : f32
      %19 = vector.broadcast %cst_14 : f32 to vector<4x64xf32>
      %20 = arith.addf %19, %18 : vector<4x64xf32>
      %21 = arith.divf %19, %20 : vector<4x64xf32>
      %22 = vector.extract_strided_slice %15 {offsets = [0, 64], sizes = [4, 64], strides = [1, 1]} : vector<4x256xf32> to vector<4x64xf32>
      %23 = arith.negf %22 : vector<4x64xf32>
      %24 = math.exp %23 : vector<4x64xf32>
      %cst_15 = arith.constant 1.000000e+00 : f32
      %25 = vector.broadcast %cst_15 : f32 to vector<4x64xf32>
      %26 = arith.addf %25, %24 : vector<4x64xf32>
      %27 = arith.divf %25, %26 : vector<4x64xf32>
      %28 = vector.extract_strided_slice %15 {offsets = [0, 128], sizes = [4, 64], strides = [1, 1]} : vector<4x256xf32> to vector<4x64xf32>
      %29 = math.tanh %28 : vector<4x64xf32>
      %30 = vector.extract_strided_slice %15 {offsets = [0, 192], sizes = [4, 64], strides = [1, 1]} : vector<4x256xf32> to vector<4x64xf32>
      %31 = arith.negf %30 : vector<4x64xf32>
      %32 = math.exp %31 : vector<4x64xf32>
      %cst_16 = arith.constant 1.000000e+00 : f32
      %33 = vector.broadcast %cst_16 : f32 to vector<4x64xf32>
      %34 = arith.addf %33, %32 : vector<4x64xf32>
      %35 = arith.divf %33, %34 : vector<4x64xf32>
      %36 = arith.mulf %27, %arg8 : vector<4x64xf32>
      %37 = arith.mulf %21, %29 : vector<4x64xf32>
      %38 = arith.addf %36, %37 : vector<4x64xf32>
      %39 = math.tanh %38 : vector<4x64xf32>
      %40 = arith.mulf %35, %39 : vector<4x64xf32>
      %41 = arith.index_cast %arg6 : i32 to index
      %c0_17 = arith.constant 0 : index
      %c0_18 = arith.constant 0 : index
      %42 = vector.load %arg3[%41, %c0_17, %c0_18] : memref<8x4x64xf32, #tpu.memory_space<vmem>>, vector<1x4x64xf32>
      %43 = vector.shape_cast %42 : vector<1x4x64xf32> to vector<4x64xf32>
      %44 = vector.shape_cast %40 : vector<4x64xf32> to vector<1x4x64xf32>
      tpu.vector_store %arg3[%41, %c0_17, %c0_18], %44 {strides = array<i32>} : memref<8x4x64xf32, #tpu.memory_space<vmem>>, vector<1x4x64xf32>,
      scf.yield %40, %38 : vector<4x64xf32>, vector<4x64xf32>
    }
    %c8_i32_7 = arith.constant 8 : i32
    %c0_8 = arith.constant 0 : index
    %c0_9 = arith.constant 0 : index
    %8 = vector.load %arg4[%c0_8, %c0_9] : memref<4x64xf32, #tpu.memory_space<vmem>>, vector<4x64xf32>
    tpu.vector_store %arg4[%c0_8, %c0_9], %7#0 {strides = array<i32>} : memref<4x64xf32, #tpu.memory_space<vmem>>, vector<4x64xf32>,
    %c0_10 = arith.constant 0 : index
    %c0_11 = arith.constant 0 : index
    %9 = vector.load %arg5[%c0_10, %c0_11] : memref<4x64xf32, #tpu.memory_space<vmem>>, vector<4x64xf32>
    tpu.vector_store %arg5[%c0_10, %c0_11], %7#1 {strides = array<i32>} : memref<4x64xf32, #tpu.memory_space<vmem>>, vector<4x64xf32>,
    return
  }
  func.func @transform_0(%arg0: i32) -> (i32, i32, i32) {
    %c0_i32 = arith.constant 0 : i32
    %c0_i32_0 = arith.constant 0 : i32
    %c0_i32_1 = arith.constant 0 : i32
    return %arg0, %c0_i32, %c0_i32_0 : i32, i32, i32
  }
  func.func @transform_1(%arg0: i32) -> (i32, i32) {
    %c0_i32 = arith.constant 0 : i32
    %c0_i32_0 = arith.constant 0 : i32
    %c0_i32_1 = arith.constant 0 : i32
    return %c0_i32, %c0_i32_0 : i32, i32
  }
  func.func @transform_2(%arg0: i32) -> (i32, i32, i32) {
    %c0_i32 = arith.constant 0 : i32
    %c0_i32_0 = arith.constant 0 : i32
    %c0_i32_1 = arith.constant 0 : i32
    return %arg0, %c0_i32, %c0_i32_0 : i32, i32, i32
  }
}

module attributes {stable_mosaic.version = 11 : i64} {
  func.func @_attention_kernel(%arg0: i32, %arg1: memref<1x8x64xf32, #tpu.memory_space<vmem>>, %arg2: memref<1x6x64xf32, #tpu.memory_space<vmem>>, %arg3: memref<1x8x1xf32, #tpu.memory_space<vmem>>, %arg4: memref<1x1x6xf32, #tpu.memory_space<vmem>>, %arg5: memref<1x6x1xf32, #tpu.memory_space<vmem>>, %arg6: memref<1x8x64xf32, #tpu.memory_space<vmem>>, %arg7: memref<1x6x64xf32, #tpu.memory_space<vmem>>) attributes {dimension_semantics = [#tpu.dimension_semantics<parallel>], iteration_bounds = array<i64: 2>, scalar_prefetch = 0 : i64, scratch_operands = 0 : i64, tpu.core_type = #tpu.core_type<tc>, window_params = [{transform_indices = @transform_0, window_bounds = array<i64: 1, 8, 64>}, {transform_indices = @transform_1, window_bounds = array<i64: 1, 6, 64>}, {transform_indices = @transform_2, window_bounds = array<i64: 1, 8, 1>}, {transform_indices = @transform_3, window_bounds = array<i64: 1, 1, 6>}, {transform_indices = @transform_4, window_bounds = array<i64: 1, 6, 1>}, {transform_indices = @transform_5, window_bounds = array<i64: 1, 8, 64>}, {transform_indices = @transform_6, window_bounds = array<i64: 1, 6, 64>}]} {
    %c0 = arith.constant 0 : index
    %c0_0 = arith.constant 0 : index
    %c0_1 = arith.constant 0 : index
    %0 = vector.load %arg1[%c0, %c0_0, %c0_1] : memref<1x8x64xf32, #tpu.memory_space<vmem>>, vector<1x8x64xf32>
    %1 = vector.shape_cast %0 : vector<1x8x64xf32> to vector<8x64xf32>
    %c0_2 = arith.constant 0 : index
    %c0_3 = arith.constant 0 : index
    %c0_4 = arith.constant 0 : index
    %2 = vector.load %arg2[%c0_2, %c0_3, %c0_4] : memref<1x6x64xf32, #tpu.memory_space<vmem>>, vector<1x6x64xf32>
    %3 = vector.shape_cast %2 : vector<1x6x64xf32> to vector<6x64xf32>
    %c0_5 = arith.constant 0 : index
    %c0_6 = arith.constant 0 : index
    %c0_7 = arith.constant 0 : index
    %4 = vector.load %arg3[%c0_5, %c0_6, %c0_7] : memref<1x8x1xf32, #tpu.memory_space<vmem>>, vector<1x8x1xf32>
    %5 = vector.shape_cast %4 : vector<1x8x1xf32> to vector<8x1xf32>
    %c0_8 = arith.constant 0 : index
    %c0_9 = arith.constant 0 : index
    %c0_10 = arith.constant 0 : index
    %6 = vector.load %arg4[%c0_8, %c0_9, %c0_10] : memref<1x1x6xf32, #tpu.memory_space<vmem>>, vector<1x1x6xf32>
    %7 = vector.shape_cast %6 : vector<1x1x6xf32> to vector<1x6xf32>
    %c0_11 = arith.constant 0 : index
    %c0_12 = arith.constant 0 : index
    %c0_13 = arith.constant 0 : index
    %8 = vector.load %arg5[%c0_11, %c0_12, %c0_13] : memref<1x6x1xf32, #tpu.memory_space<vmem>>, vector<1x6x1xf32>
    %9 = vector.shape_cast %8 : vector<1x6x1xf32> to vector<6x1xf32>
    %10 = arith.truncf %1 : vector<8x64xf32> to vector<8x64xbf16>
    %11 = arith.truncf %3 : vector<6x64xf32> to vector<6x64xbf16>
    %cst = arith.constant dense<0.000000e+00> : vector<8x6xf32>
    %12 = tpu.matmul %10, %11, %cst {dimension_numbers = #tpu.dot_dimension_numbers<[1], [1], [0], [0], [0, 0, 1, 0], [], []>} : vector<8x64xbf16>, vector<6x64xbf16>, vector<8x6xf32> -> vector<8x6xf32>
    %cst_14 = arith.constant 1.000000e+00 : f32
    %13 = vector.broadcast %cst_14 : f32 to vector<1x6xf32>
    %14 = arith.subf %7, %13 : vector<1x6xf32>
    %cst_15 = arith.constant 1.000000e+07 : f32
    %15 = vector.broadcast %cst_15 : f32 to vector<1x6xf32>
    %16 = arith.mulf %14, %15 : vector<1x6xf32>
    %17 = vector.broadcast %16 : vector<1x6xf32> to vector<8x6xf32>
    %18 = arith.addf %12, %17 : vector<8x6xf32>
    %cst_16 = arith.constant dense<0xFF800000> : vector<8xf32>
    %19 = vector.multi_reduction <maximumf>, %18, %cst_16 [1] : vector<8x6xf32> to vector<8xf32>
    %20 = vector.shape_cast %19 : vector<8xf32> to vector<8x1xf32>
    %21 = vector.broadcast %20 : vector<8x1xf32> to vector<8x6xf32>
    %22 = arith.subf %18, %21 : vector<8x6xf32>
    %23 = math.exp %22 : vector<8x6xf32>
    %24 = vector.broadcast %7 : vector<1x6xf32> to vector<8x6xf32>
    %25 = arith.mulf %23, %24 : vector<8x6xf32>
    %cst_17 = arith.constant dense<0.000000e+00> : vector<8xf32>
    %26 = vector.multi_reduction <add>, %25, %cst_17 [1] : vector<8x6xf32> to vector<8xf32>
    %27 = vector.shape_cast %26 : vector<8xf32> to vector<8x1xf32>
    %cst_18 = arith.constant 9.99999982E-14 : f32
    %28 = vector.broadcast %cst_18 : f32 to vector<8x1xf32>
    %29 = arith.addf %27, %28 : vector<8x1xf32>
    %30 = tpu.reciprocal %29 {approx = true} : vector<8x1xf32> -> vector<8x1xf32>
    %31 = vector.broadcast %30 : vector<8x1xf32> to vector<8x6xf32>
    %32 = arith.mulf %25, %31 : vector<8x6xf32>
    %33 = arith.truncf %32 : vector<8x6xf32> to vector<8x6xbf16>
    %34 = arith.truncf %3 : vector<6x64xf32> to vector<6x64xbf16>
    %cst_19 = arith.constant dense<0.000000e+00> : vector<8x64xf32>
    %35 = tpu.matmul %33, %34, %cst_19 {dimension_numbers = #tpu.dot_dimension_numbers<[1], [0], [0], [1], [0, 0, 1, 1], [], []>} : vector<8x6xbf16>, vector<6x64xbf16>, vector<8x64xf32> -> vector<8x64xf32>
    %36 = vector.broadcast %5 : vector<8x1xf32> to vector<8x64xf32>
    %37 = arith.mulf %35, %36 : vector<8x64xf32>
    %c0_20 = arith.constant 0 : index
    %c0_21 = arith.constant 0 : index
    %c0_22 = arith.constant 0 : index
    %38 = vector.load %arg6[%c0_20, %c0_21, %c0_22] : memref<1x8x64xf32, #tpu.memory_space<vmem>>, vector<1x8x64xf32>
    %39 = vector.shape_cast %38 : vector<1x8x64xf32> to vector<8x64xf32>
    %40 = vector.shape_cast %37 : vector<8x64xf32> to vector<1x8x64xf32>
    tpu.vector_store %arg6[%c0_20, %c0_21, %c0_22], %40 {strides = array<i32>} : memref<1x8x64xf32, #tpu.memory_space<vmem>>, vector<1x8x64xf32>,
    %cst_23 = arith.constant 1.000000e+00 : f32
    %41 = vector.broadcast %cst_23 : f32 to vector<8x1xf32>
    %42 = arith.subf %5, %41 : vector<8x1xf32>
    %cst_24 = arith.constant 1.000000e+07 : f32
    %43 = vector.broadcast %cst_24 : f32 to vector<8x1xf32>
    %44 = arith.mulf %42, %43 : vector<8x1xf32>
    %45 = vector.broadcast %44 : vector<8x1xf32> to vector<8x6xf32>
    %46 = arith.addf %12, %45 : vector<8x6xf32>
    %cst_25 = arith.constant dense<0xFF800000> : vector<6xf32>
    %47 = vector.multi_reduction <maximumf>, %46, %cst_25 [0] : vector<8x6xf32> to vector<6xf32>
    %48 = vector.shape_cast %47 : vector<6xf32> to vector<1x6xf32>
    %49 = vector.broadcast %48 : vector<1x6xf32> to vector<8x6xf32>
    %50 = arith.subf %46, %49 : vector<8x6xf32>
    %51 = math.exp %50 : vector<8x6xf32>
    %52 = vector.broadcast %5 : vector<8x1xf32> to vector<8x6xf32>
    %53 = arith.mulf %51, %52 : vector<8x6xf32>
    %cst_26 = arith.constant dense<0.000000e+00> : vector<6xf32>
    %54 = vector.multi_reduction <add>, %53, %cst_26 [0] : vector<8x6xf32> to vector<6xf32>
    %55 = vector.shape_cast %54 : vector<6xf32> to vector<1x6xf32>
    %cst_27 = arith.constant 9.99999982E-14 : f32
    %56 = vector.broadcast %cst_27 : f32 to vector<1x6xf32>
    %57 = arith.addf %55, %56 : vector<1x6xf32>
    %58 = tpu.reciprocal %57 {approx = true} : vector<1x6xf32> -> vector<1x6xf32>
    %59 = vector.broadcast %58 : vector<1x6xf32> to vector<8x6xf32>
    %60 = arith.mulf %53, %59 : vector<8x6xf32>
    %61 = arith.truncf %60 : vector<8x6xf32> to vector<8x6xbf16>
    %62 = arith.truncf %1 : vector<8x64xf32> to vector<8x64xbf16>
    %cst_28 = arith.constant dense<0.000000e+00> : vector<6x64xf32>
    %63 = tpu.matmul %61, %62, %cst_28 {dimension_numbers = #tpu.dot_dimension_numbers<[0], [0], [1], [1], [0, 1, 1, 1], [], []>} : vector<8x6xbf16>, vector<8x64xbf16>, vector<6x64xf32> -> vector<6x64xf32>
    %64 = vector.broadcast %9 : vector<6x1xf32> to vector<6x64xf32>
    %65 = arith.mulf %63, %64 : vector<6x64xf32>
    %c0_29 = arith.constant 0 : index
    %c0_30 = arith.constant 0 : index
    %c0_31 = arith.constant 0 : index
    %66 = vector.load %arg7[%c0_29, %c0_30, %c0_31] : memref<1x6x64xf32, #tpu.memory_space<vmem>>, vector<1x6x64xf32>
    %67 = vector.shape_cast %66 : vector<1x6x64xf32> to vector<6x64xf32>
    %68 = vector.shape_cast %65 : vector<6x64xf32> to vector<1x6x64xf32>
    tpu.vector_store %arg7[%c0_29, %c0_30, %c0_31], %68 {strides = array<i32>} : memref<1x6x64xf32, #tpu.memory_space<vmem>>, vector<1x6x64xf32>,
    return
  }
  func.func @transform_0(%arg0: i32) -> (i32, i32, i32) {
    %c0_i32 = arith.constant 0 : i32
    %c0_i32_0 = arith.constant 0 : i32
    %c0_i32_1 = arith.constant 0 : i32
    return %arg0, %c0_i32, %c0_i32_0 : i32, i32, i32
  }
  func.func @transform_1(%arg0: i32) -> (i32, i32, i32) {
    %c0_i32 = arith.constant 0 : i32
    %c0_i32_0 = arith.constant 0 : i32
    %c0_i32_1 = arith.constant 0 : i32
    return %arg0, %c0_i32, %c0_i32_0 : i32, i32, i32
  }
  func.func @transform_2(%arg0: i32) -> (i32, i32, i32) {
    %c0_i32 = arith.constant 0 : i32
    %c0_i32_0 = arith.constant 0 : i32
    %c0_i32_1 = arith.constant 0 : i32
    return %arg0, %c0_i32, %c0_i32_0 : i32, i32, i32
  }
  func.func @transform_3(%arg0: i32) -> (i32, i32, i32) {
    %c0_i32 = arith.constant 0 : i32
    %c0_i32_0 = arith.constant 0 : i32
    %c0_i32_1 = arith.constant 0 : i32
    return %arg0, %c0_i32, %c0_i32_0 : i32, i32, i32
  }
  func.func @transform_4(%arg0: i32) -> (i32, i32, i32) {
    %c0_i32 = arith.constant 0 : i32
    %c0_i32_0 = arith.constant 0 : i32
    %c0_i32_1 = arith.constant 0 : i32
    return %arg0, %c0_i32, %c0_i32_0 : i32, i32, i32
  }
  func.func @transform_5(%arg0: i32) -> (i32, i32, i32) {
    %c0_i32 = arith.constant 0 : i32
    %c0_i32_0 = arith.constant 0 : i32
    %c0_i32_1 = arith.constant 0 : i32
    return %arg0, %c0_i32, %c0_i32_0 : i32, i32, i32
  }
  func.func @transform_6(%arg0: i32) -> (i32, i32, i32) {
    %c0_i32 = arith.constant 0 : i32
    %c0_i32_0 = arith.constant 0 : i32
    %c0_i32_1 = arith.constant 0 : i32
    return %arg0, %c0_i32, %c0_i32_0 : i32, i32, i32
  }
}

module attributes {stable_mosaic.version = 11 : i64} {
  func.func @_proj_chain_kernel(%arg0: i32, %arg1: memref<32x128xf32, #tpu.memory_space<vmem>>, %arg2: memref<128x32xbf16, #tpu.memory_space<vmem>>, %arg3: memref<1x32xf32, #tpu.memory_space<vmem>>, %arg4: memref<32x64xf32, #tpu.memory_space<vmem>>, %arg5: memref<32x32xbf16, #tpu.memory_space<vmem>>, %arg6: memref<64x32xbf16, #tpu.memory_space<vmem>>, %arg7: memref<1x32xf32, #tpu.memory_space<vmem>>, %arg8: memref<32x32xf32, #tpu.memory_space<vmem>>) attributes {dimension_semantics = [#tpu.dimension_semantics<parallel>], iteration_bounds = array<i64: 1>, scalar_prefetch = 0 : i64, scratch_operands = 0 : i64, tpu.core_type = #tpu.core_type<tc>, window_params = [{transform_indices = @transform_0, window_bounds = array<i64: 32, 128>}, {pipeline_mode = #tpu.pipeline_mode<synchronous>, transform_indices = @transform_1, window_bounds = array<i64: 128, 32>}, {pipeline_mode = #tpu.pipeline_mode<synchronous>, transform_indices = @transform_2, window_bounds = array<i64: 1, 32>}, {transform_indices = @transform_3, window_bounds = array<i64: 32, 64>}, {pipeline_mode = #tpu.pipeline_mode<synchronous>, transform_indices = @transform_4, window_bounds = array<i64: 32, 32>}, {pipeline_mode = #tpu.pipeline_mode<synchronous>, transform_indices = @transform_5, window_bounds = array<i64: 64, 32>}, {pipeline_mode = #tpu.pipeline_mode<synchronous>, transform_indices = @transform_6, window_bounds = array<i64: 1, 32>}, {transform_indices = @transform_7, window_bounds = array<i64: 32, 32>}]} {
    %c0 = arith.constant 0 : index
    %c0_0 = arith.constant 0 : index
    %0 = vector.load %arg1[%c0, %c0_0] : memref<32x128xf32, #tpu.memory_space<vmem>>, vector<32x128xf32>
    %1 = arith.truncf %0 : vector<32x128xf32> to vector<32x128xbf16>
    %c0_1 = arith.constant 0 : index
    %c0_2 = arith.constant 0 : index
    %2 = vector.load %arg2[%c0_1, %c0_2] : memref<128x32xbf16, #tpu.memory_space<vmem>>, vector<128x32xbf16>
    %cst = arith.constant dense<0.000000e+00> : vector<32x32xf32>
    %3 = tpu.matmul %1, %2, %cst {dimension_numbers = #tpu.dot_dimension_numbers<[1], [0], [0], [1], [0, 0, 1, 1], [], []>} : vector<32x128xbf16>, vector<128x32xbf16>, vector<32x32xf32> -> vector<32x32xf32>
    %c0_3 = arith.constant 0 : index
    %c0_4 = arith.constant 0 : index
    %4 = vector.load %arg3[%c0_3, %c0_4] : memref<1x32xf32, #tpu.memory_space<vmem>>, vector<1x32xf32>
    %5 = vector.broadcast %4 : vector<1x32xf32> to vector<32x32xf32>
    %6 = arith.addf %3, %5 : vector<32x32xf32>
    %cst_5 = arith.constant 0.000000e+00 : f32
    %7 = vector.broadcast %cst_5 : f32 to vector<32x32xf32>
    %8 = arith.maximumf %6, %7 : vector<32x32xf32>
    %9 = arith.truncf %8 : vector<32x32xf32> to vector<32x32xbf16>
    %c0_6 = arith.constant 0 : index
    %c0_7 = arith.constant 0 : index
    %10 = vector.load %arg5[%c0_6, %c0_7] : memref<32x32xbf16, #tpu.memory_space<vmem>>, vector<32x32xbf16>
    %cst_8 = arith.constant dense<0.000000e+00> : vector<32x32xf32>
    %11 = tpu.matmul %9, %10, %cst_8 {dimension_numbers = #tpu.dot_dimension_numbers<[1], [0], [0], [1], [0, 0, 1, 1], [], []>} : vector<32x32xbf16>, vector<32x32xbf16>, vector<32x32xf32> -> vector<32x32xf32>
    %c0_9 = arith.constant 0 : index
    %c0_10 = arith.constant 0 : index
    %12 = vector.load %arg4[%c0_9, %c0_10] : memref<32x64xf32, #tpu.memory_space<vmem>>, vector<32x64xf32>
    %13 = arith.truncf %12 : vector<32x64xf32> to vector<32x64xbf16>
    %c0_11 = arith.constant 0 : index
    %c0_12 = arith.constant 0 : index
    %14 = vector.load %arg6[%c0_11, %c0_12] : memref<64x32xbf16, #tpu.memory_space<vmem>>, vector<64x32xbf16>
    %cst_13 = arith.constant dense<0.000000e+00> : vector<32x32xf32>
    %15 = tpu.matmul %13, %14, %cst_13 {dimension_numbers = #tpu.dot_dimension_numbers<[1], [0], [0], [1], [0, 0, 1, 1], [], []>} : vector<32x64xbf16>, vector<64x32xbf16>, vector<32x32xf32> -> vector<32x32xf32>
    %16 = arith.addf %11, %15 : vector<32x32xf32>
    %c0_14 = arith.constant 0 : index
    %c0_15 = arith.constant 0 : index
    %17 = vector.load %arg7[%c0_14, %c0_15] : memref<1x32xf32, #tpu.memory_space<vmem>>, vector<1x32xf32>
    %18 = vector.broadcast %17 : vector<1x32xf32> to vector<32x32xf32>
    %19 = arith.addf %16, %18 : vector<32x32xf32>
    %cst_16 = arith.constant 0.000000e+00 : f32
    %20 = vector.broadcast %cst_16 : f32 to vector<32x32xf32>
    %21 = arith.maximumf %19, %20 : vector<32x32xf32>
    %c0_17 = arith.constant 0 : index
    %c0_18 = arith.constant 0 : index
    %22 = vector.load %arg8[%c0_17, %c0_18] : memref<32x32xf32, #tpu.memory_space<vmem>>, vector<32x32xf32>
    tpu.vector_store %arg8[%c0_17, %c0_18], %21 {strides = array<i32>} : memref<32x32xf32, #tpu.memory_space<vmem>>, vector<32x32xf32>,
    return
  }
  func.func @transform_0(%arg0: i32) -> (i32, i32) {
    %c0_i32 = arith.constant 0 : i32
    %c0_i32_0 = arith.constant 0 : i32
    return %arg0, %c0_i32 : i32, i32
  }
  func.func @transform_1(%arg0: i32) -> (i32, i32) {
    %c0_i32 = arith.constant 0 : i32
    %c0_i32_0 = arith.constant 0 : i32
    %c0_i32_1 = arith.constant 0 : i32
    return %c0_i32, %c0_i32_0 : i32, i32
  }
  func.func @transform_2(%arg0: i32) -> (i32, i32) {
    %c0_i32 = arith.constant 0 : i32
    %c0_i32_0 = arith.constant 0 : i32
    %c0_i32_1 = arith.constant 0 : i32
    return %c0_i32, %c0_i32_0 : i32, i32
  }
  func.func @transform_3(%arg0: i32) -> (i32, i32) {
    %c0_i32 = arith.constant 0 : i32
    %c0_i32_0 = arith.constant 0 : i32
    return %arg0, %c0_i32 : i32, i32
  }
  func.func @transform_4(%arg0: i32) -> (i32, i32) {
    %c0_i32 = arith.constant 0 : i32
    %c0_i32_0 = arith.constant 0 : i32
    %c0_i32_1 = arith.constant 0 : i32
    return %c0_i32, %c0_i32_0 : i32, i32
  }
  func.func @transform_5(%arg0: i32) -> (i32, i32) {
    %c0_i32 = arith.constant 0 : i32
    %c0_i32_0 = arith.constant 0 : i32
    %c0_i32_1 = arith.constant 0 : i32
    return %c0_i32, %c0_i32_0 : i32, i32
  }
  func.func @transform_6(%arg0: i32) -> (i32, i32) {
    %c0_i32 = arith.constant 0 : i32
    %c0_i32_0 = arith.constant 0 : i32
    %c0_i32_1 = arith.constant 0 : i32
    return %c0_i32, %c0_i32_0 : i32, i32
  }
  func.func @transform_7(%arg0: i32) -> (i32, i32) {
    %c0_i32 = arith.constant 0 : i32
    %c0_i32_0 = arith.constant 0 : i32
    return %arg0, %c0_i32 : i32, i32
  }
}

module attributes {stable_mosaic.version = 11 : i64} {
  func.func @_linear_kernel(%arg0: i32, %arg1: memref<32x32xf32, #tpu.memory_space<vmem>>, %arg2: memref<32x128xbf16, #tpu.memory_space<vmem>>, %arg3: memref<1x128xf32, #tpu.memory_space<vmem>>, %arg4: memref<32x128xf32, #tpu.memory_space<vmem>>) attributes {dimension_semantics = [#tpu.dimension_semantics<parallel>], iteration_bounds = array<i64: 1>, scalar_prefetch = 0 : i64, scratch_operands = 0 : i64, tpu.core_type = #tpu.core_type<tc>, window_params = [{transform_indices = @transform_0, window_bounds = array<i64: 32, 32>}, {pipeline_mode = #tpu.pipeline_mode<synchronous>, transform_indices = @transform_1, window_bounds = array<i64: 32, 128>}, {pipeline_mode = #tpu.pipeline_mode<synchronous>, transform_indices = @transform_2, window_bounds = array<i64: 1, 128>}, {transform_indices = @transform_3, window_bounds = array<i64: 32, 128>}]} {
    %c0 = arith.constant 0 : index
    %c0_0 = arith.constant 0 : index
    %0 = vector.load %arg1[%c0, %c0_0] : memref<32x32xf32, #tpu.memory_space<vmem>>, vector<32x32xf32>
    %1 = arith.truncf %0 : vector<32x32xf32> to vector<32x32xbf16>
    %c0_1 = arith.constant 0 : index
    %c0_2 = arith.constant 0 : index
    %2 = vector.load %arg2[%c0_1, %c0_2] : memref<32x128xbf16, #tpu.memory_space<vmem>>, vector<32x128xbf16>
    %cst = arith.constant dense<0.000000e+00> : vector<32x128xf32>
    %3 = tpu.matmul %1, %2, %cst {dimension_numbers = #tpu.dot_dimension_numbers<[1], [0], [0], [1], [0, 0, 1, 1], [], []>} : vector<32x32xbf16>, vector<32x128xbf16>, vector<32x128xf32> -> vector<32x128xf32>
    %c0_3 = arith.constant 0 : index
    %c0_4 = arith.constant 0 : index
    %4 = vector.load %arg3[%c0_3, %c0_4] : memref<1x128xf32, #tpu.memory_space<vmem>>, vector<1x128xf32>
    %5 = vector.broadcast %4 : vector<1x128xf32> to vector<32x128xf32>
    %6 = arith.addf %3, %5 : vector<32x128xf32>
    %c0_5 = arith.constant 0 : index
    %c0_6 = arith.constant 0 : index
    %7 = vector.load %arg4[%c0_5, %c0_6] : memref<32x128xf32, #tpu.memory_space<vmem>>, vector<32x128xf32>
    tpu.vector_store %arg4[%c0_5, %c0_6], %6 {strides = array<i32>} : memref<32x128xf32, #tpu.memory_space<vmem>>, vector<32x128xf32>,
    return
  }
  func.func @transform_0(%arg0: i32) -> (i32, i32) {
    %c0_i32 = arith.constant 0 : i32
    %c0_i32_0 = arith.constant 0 : i32
    return %arg0, %c0_i32 : i32, i32
  }
  func.func @transform_1(%arg0: i32) -> (i32, i32) {
    %c0_i32 = arith.constant 0 : i32
    %c0_i32_0 = arith.constant 0 : i32
    %c0_i32_1 = arith.constant 0 : i32
    return %c0_i32, %c0_i32_0 : i32, i32
  }
  func.func @transform_2(%arg0: i32) -> (i32, i32) {
    %c0_i32 = arith.constant 0 : i32
    %c0_i32_0 = arith.constant 0 : i32
    %c0_i32_1 = arith.constant 0 : i32
    return %c0_i32, %c0_i32_0 : i32, i32
  }
  func.func @transform_3(%arg0: i32) -> (i32, i32) {
    %c0_i32 = arith.constant 0 : i32
    %c0_i32_0 = arith.constant 0 : i32
    return %arg0, %c0_i32 : i32, i32
  }
}

module attributes {stable_mosaic.version = 11 : i64} {
  func.func @_gated_kernel(%arg0: i32, %arg1: memref<32x64xf32, #tpu.memory_space<vmem>>, %arg2: memref<64x64xbf16, #tpu.memory_space<vmem>>, %arg3: memref<1x64xf32, #tpu.memory_space<vmem>>, %arg4: memref<32x64xf32, #tpu.memory_space<vmem>>, %arg5: memref<32x64xf32, #tpu.memory_space<vmem>>) attributes {dimension_semantics = [#tpu.dimension_semantics<parallel>], iteration_bounds = array<i64: 1>, scalar_prefetch = 0 : i64, scratch_operands = 0 : i64, tpu.core_type = #tpu.core_type<tc>, window_params = [{transform_indices = @transform_0, window_bounds = array<i64: 32, 64>}, {pipeline_mode = #tpu.pipeline_mode<synchronous>, transform_indices = @transform_1, window_bounds = array<i64: 64, 64>}, {pipeline_mode = #tpu.pipeline_mode<synchronous>, transform_indices = @transform_2, window_bounds = array<i64: 1, 64>}, {transform_indices = @transform_3, window_bounds = array<i64: 32, 64>}, {transform_indices = @transform_4, window_bounds = array<i64: 32, 64>}]} {
    %c0 = arith.constant 0 : index
    %c0_0 = arith.constant 0 : index
    %0 = vector.load %arg1[%c0, %c0_0] : memref<32x64xf32, #tpu.memory_space<vmem>>, vector<32x64xf32>
    %c0_1 = arith.constant 0 : index
    %c0_2 = arith.constant 0 : index
    %1 = vector.load %arg4[%c0_1, %c0_2] : memref<32x64xf32, #tpu.memory_space<vmem>>, vector<32x64xf32>
    %2 = arith.truncf %0 : vector<32x64xf32> to vector<32x64xbf16>
    %c0_3 = arith.constant 0 : index
    %c0_4 = arith.constant 0 : index
    %3 = vector.load %arg2[%c0_3, %c0_4] : memref<64x64xbf16, #tpu.memory_space<vmem>>, vector<64x64xbf16>
    %cst = arith.constant dense<0.000000e+00> : vector<32x64xf32>
    %4 = tpu.matmul %2, %3, %cst {dimension_numbers = #tpu.dot_dimension_numbers<[1], [0], [0], [1], [0, 0, 1, 1], [], []>} : vector<32x64xbf16>, vector<64x64xbf16>, vector<32x64xf32> -> vector<32x64xf32>
    %c0_5 = arith.constant 0 : index
    %c0_6 = arith.constant 0 : index
    %5 = vector.load %arg3[%c0_5, %c0_6] : memref<1x64xf32, #tpu.memory_space<vmem>>, vector<1x64xf32>
    %6 = vector.broadcast %5 : vector<1x64xf32> to vector<32x64xf32>
    %7 = arith.addf %4, %6 : vector<32x64xf32>
    %8 = arith.negf %7 : vector<32x64xf32>
    %9 = math.exp %8 : vector<32x64xf32>
    %cst_7 = arith.constant 1.000000e+00 : f32
    %10 = vector.broadcast %cst_7 : f32 to vector<32x64xf32>
    %11 = arith.addf %10, %9 : vector<32x64xf32>
    %12 = arith.divf %10, %11 : vector<32x64xf32>
    %13 = arith.mulf %12, %0 : vector<32x64xf32>
    %cst_8 = arith.constant 1.000000e+00 : f32
    %14 = vector.broadcast %cst_8 : f32 to vector<32x64xf32>
    %15 = arith.subf %14, %12 : vector<32x64xf32>
    %16 = arith.mulf %15, %1 : vector<32x64xf32>
    %17 = arith.addf %13, %16 : vector<32x64xf32>
    %c0_9 = arith.constant 0 : index
    %c0_10 = arith.constant 0 : index
    %18 = vector.load %arg5[%c0_9, %c0_10] : memref<32x64xf32, #tpu.memory_space<vmem>>, vector<32x64xf32>
    tpu.vector_store %arg5[%c0_9, %c0_10], %17 {strides = array<i32>} : memref<32x64xf32, #tpu.memory_space<vmem>>, vector<32x64xf32>,
    return
  }
  func.func @transform_0(%arg0: i32) -> (i32, i32) {
    %c0_i32 = arith.constant 0 : i32
    %c0_i32_0 = arith.constant 0 : i32
    return %arg0, %c0_i32 : i32, i32
  }
  func.func @transform_1(%arg0: i32) -> (i32, i32) {
    %c0_i32 = arith.constant 0 : i32
    %c0_i32_0 = arith.constant 0 : i32
    %c0_i32_1 = arith.constant 0 : i32
    return %c0_i32, %c0_i32_0 : i32, i32
  }
  func.func @transform_2(%arg0: i32) -> (i32, i32) {
    %c0_i32 = arith.constant 0 : i32
    %c0_i32_0 = arith.constant 0 : i32
    %c0_i32_1 = arith.constant 0 : i32
    return %c0_i32, %c0_i32_0 : i32, i32
  }
  func.func @transform_3(%arg0: i32) -> (i32, i32) {
    %c0_i32 = arith.constant 0 : i32
    %c0_i32_0 = arith.constant 0 : i32
    return %arg0, %c0_i32 : i32, i32
  }
  func.func @transform_4(%arg0: i32) -> (i32, i32) {
    %c0_i32 = arith.constant 0 : i32
    %c0_i32_0 = arith.constant 0 : i32
    return %arg0, %c0_i32 : i32, i32
  }
}

module attributes {stable_mosaic.version = 11 : i64} {
  func.func @_proj_chain_kernel(%arg0: i32, %arg1: memref<32x64xf32, #tpu.memory_space<vmem>>, %arg2: memref<64x32xbf16, #tpu.memory_space<vmem>>, %arg3: memref<1x32xf32, #tpu.memory_space<vmem>>, %arg4: memref<32x64xf32, #tpu.memory_space<vmem>>, %arg5: memref<32x32xbf16, #tpu.memory_space<vmem>>, %arg6: memref<64x32xbf16, #tpu.memory_space<vmem>>, %arg7: memref<1x32xf32, #tpu.memory_space<vmem>>, %arg8: memref<32x32xf32, #tpu.memory_space<vmem>>) attributes {dimension_semantics = [#tpu.dimension_semantics<parallel>], iteration_bounds = array<i64: 1>, scalar_prefetch = 0 : i64, scratch_operands = 0 : i64, tpu.core_type = #tpu.core_type<tc>, window_params = [{transform_indices = @transform_0, window_bounds = array<i64: 32, 64>}, {pipeline_mode = #tpu.pipeline_mode<synchronous>, transform_indices = @transform_1, window_bounds = array<i64: 64, 32>}, {pipeline_mode = #tpu.pipeline_mode<synchronous>, transform_indices = @transform_2, window_bounds = array<i64: 1, 32>}, {transform_indices = @transform_3, window_bounds = array<i64: 32, 64>}, {pipeline_mode = #tpu.pipeline_mode<synchronous>, transform_indices = @transform_4, window_bounds = array<i64: 32, 32>}, {pipeline_mode = #tpu.pipeline_mode<synchronous>, transform_indices = @transform_5, window_bounds = array<i64: 64, 32>}, {pipeline_mode = #tpu.pipeline_mode<synchronous>, transform_indices = @transform_6, window_bounds = array<i64: 1, 32>}, {transform_indices = @transform_7, window_bounds = array<i64: 32, 32>}]} {
    %c0 = arith.constant 0 : index
    %c0_0 = arith.constant 0 : index
    %0 = vector.load %arg1[%c0, %c0_0] : memref<32x64xf32, #tpu.memory_space<vmem>>, vector<32x64xf32>
    %1 = arith.truncf %0 : vector<32x64xf32> to vector<32x64xbf16>
    %c0_1 = arith.constant 0 : index
    %c0_2 = arith.constant 0 : index
    %2 = vector.load %arg2[%c0_1, %c0_2] : memref<64x32xbf16, #tpu.memory_space<vmem>>, vector<64x32xbf16>
    %cst = arith.constant dense<0.000000e+00> : vector<32x32xf32>
    %3 = tpu.matmul %1, %2, %cst {dimension_numbers = #tpu.dot_dimension_numbers<[1], [0], [0], [1], [0, 0, 1, 1], [], []>} : vector<32x64xbf16>, vector<64x32xbf16>, vector<32x32xf32> -> vector<32x32xf32>
    %c0_3 = arith.constant 0 : index
    %c0_4 = arith.constant 0 : index
    %4 = vector.load %arg3[%c0_3, %c0_4] : memref<1x32xf32, #tpu.memory_space<vmem>>, vector<1x32xf32>
    %5 = vector.broadcast %4 : vector<1x32xf32> to vector<32x32xf32>
    %6 = arith.addf %3, %5 : vector<32x32xf32>
    %cst_5 = arith.constant 0.000000e+00 : f32
    %7 = vector.broadcast %cst_5 : f32 to vector<32x32xf32>
    %8 = arith.maximumf %6, %7 : vector<32x32xf32>
    %9 = arith.truncf %8 : vector<32x32xf32> to vector<32x32xbf16>
    %c0_6 = arith.constant 0 : index
    %c0_7 = arith.constant 0 : index
    %10 = vector.load %arg5[%c0_6, %c0_7] : memref<32x32xbf16, #tpu.memory_space<vmem>>, vector<32x32xbf16>
    %cst_8 = arith.constant dense<0.000000e+00> : vector<32x32xf32>
    %11 = tpu.matmul %9, %10, %cst_8 {dimension_numbers = #tpu.dot_dimension_numbers<[1], [0], [0], [1], [0, 0, 1, 1], [], []>} : vector<32x32xbf16>, vector<32x32xbf16>, vector<32x32xf32> -> vector<32x32xf32>
    %c0_9 = arith.constant 0 : index
    %c0_10 = arith.constant 0 : index
    %12 = vector.load %arg4[%c0_9, %c0_10] : memref<32x64xf32, #tpu.memory_space<vmem>>, vector<32x64xf32>
    %13 = arith.truncf %12 : vector<32x64xf32> to vector<32x64xbf16>
    %c0_11 = arith.constant 0 : index
    %c0_12 = arith.constant 0 : index
    %14 = vector.load %arg6[%c0_11, %c0_12] : memref<64x32xbf16, #tpu.memory_space<vmem>>, vector<64x32xbf16>
    %cst_13 = arith.constant dense<0.000000e+00> : vector<32x32xf32>
    %15 = tpu.matmul %13, %14, %cst_13 {dimension_numbers = #tpu.dot_dimension_numbers<[1], [0], [0], [1], [0, 0, 1, 1], [], []>} : vector<32x64xbf16>, vector<64x32xbf16>, vector<32x32xf32> -> vector<32x32xf32>
    %16 = arith.addf %11, %15 : vector<32x32xf32>
    %c0_14 = arith.constant 0 : index
    %c0_15 = arith.constant 0 : index
    %17 = vector.load %arg7[%c0_14, %c0_15] : memref<1x32xf32, #tpu.memory_space<vmem>>, vector<1x32xf32>
    %18 = vector.broadcast %17 : vector<1x32xf32> to vector<32x32xf32>
    %19 = arith.addf %16, %18 : vector<32x32xf32>
    %cst_16 = arith.constant 0.000000e+00 : f32
    %20 = vector.broadcast %cst_16 : f32 to vector<32x32xf32>
    %21 = arith.maximumf %19, %20 : vector<32x32xf32>
    %c0_17 = arith.constant 0 : index
    %c0_18 = arith.constant 0 : index
    %22 = vector.load %arg8[%c0_17, %c0_18] : memref<32x32xf32, #tpu.memory_space<vmem>>, vector<32x32xf32>
    tpu.vector_store %arg8[%c0_17, %c0_18], %21 {strides = array<i32>} : memref<32x32xf32, #tpu.memory_space<vmem>>, vector<32x32xf32>,
    return
  }
  func.func @transform_0(%arg0: i32) -> (i32, i32) {
    %c0_i32 = arith.constant 0 : i32
    %c0_i32_0 = arith.constant 0 : i32
    return %arg0, %c0_i32 : i32, i32
  }
  func.func @transform_1(%arg0: i32) -> (i32, i32) {
    %c0_i32 = arith.constant 0 : i32
    %c0_i32_0 = arith.constant 0 : i32
    %c0_i32_1 = arith.constant 0 : i32
    return %c0_i32, %c0_i32_0 : i32, i32
  }
  func.func @transform_2(%arg0: i32) -> (i32, i32) {
    %c0_i32 = arith.constant 0 : i32
    %c0_i32_0 = arith.constant 0 : i32
    %c0_i32_1 = arith.constant 0 : i32
    return %c0_i32, %c0_i32_0 : i32, i32
  }
  func.func @transform_3(%arg0: i32) -> (i32, i32) {
    %c0_i32 = arith.constant 0 : i32
    %c0_i32_0 = arith.constant 0 : i32
    return %arg0, %c0_i32 : i32, i32
  }
  func.func @transform_4(%arg0: i32) -> (i32, i32) {
    %c0_i32 = arith.constant 0 : i32
    %c0_i32_0 = arith.constant 0 : i32
    %c0_i32_1 = arith.constant 0 : i32
    return %c0_i32, %c0_i32_0 : i32, i32
  }
  func.func @transform_5(%arg0: i32) -> (i32, i32) {
    %c0_i32 = arith.constant 0 : i32
    %c0_i32_0 = arith.constant 0 : i32
    %c0_i32_1 = arith.constant 0 : i32
    return %c0_i32, %c0_i32_0 : i32, i32
  }
  func.func @transform_6(%arg0: i32) -> (i32, i32) {
    %c0_i32 = arith.constant 0 : i32
    %c0_i32_0 = arith.constant 0 : i32
    %c0_i32_1 = arith.constant 0 : i32
    return %c0_i32, %c0_i32_0 : i32, i32
  }
  func.func @transform_7(%arg0: i32) -> (i32, i32) {
    %c0_i32 = arith.constant 0 : i32
    %c0_i32_0 = arith.constant 0 : i32
    return %arg0, %c0_i32 : i32, i32
  }
}

module attributes {stable_mosaic.version = 11 : i64} {
  func.func @_pool_kernel(%arg0: i32, %arg1: memref<1x8x64xf32, #tpu.memory_space<vmem>>, %arg2: memref<1x8x1xf32, #tpu.memory_space<vmem>>, %arg3: memref<1x1x128xf32, #tpu.memory_space<vmem>>) attributes {dimension_semantics = [#tpu.dimension_semantics<parallel>], iteration_bounds = array<i64: 4>, scalar_prefetch = 0 : i64, scratch_operands = 0 : i64, tpu.core_type = #tpu.core_type<tc>, window_params = [{transform_indices = @transform_0, window_bounds = array<i64: 1, 8, 64>}, {transform_indices = @transform_1, window_bounds = array<i64: 1, 8, 1>}, {transform_indices = @transform_2, window_bounds = array<i64: 1, 1, 128>}]} {
    %c0 = arith.constant 0 : index
    %c0_0 = arith.constant 0 : index
    %c0_1 = arith.constant 0 : index
    %0 = vector.load %arg1[%c0, %c0_0, %c0_1] : memref<1x8x64xf32, #tpu.memory_space<vmem>>, vector<1x8x64xf32>
    %1 = vector.shape_cast %0 : vector<1x8x64xf32> to vector<8x64xf32>
    %c0_2 = arith.constant 0 : index
    %c0_3 = arith.constant 0 : index
    %c0_4 = arith.constant 0 : index
    %2 = vector.load %arg2[%c0_2, %c0_3, %c0_4] : memref<1x8x1xf32, #tpu.memory_space<vmem>>, vector<1x8x1xf32>
    %3 = vector.shape_cast %2 : vector<1x8x1xf32> to vector<8x1xf32>
    %cst = arith.constant dense<0.000000e+00> : vector<1xf32>
    %4 = vector.multi_reduction <add>, %3, %cst [0] : vector<8x1xf32> to vector<1xf32>
    %5 = vector.shape_cast %4 : vector<1xf32> to vector<1x1xf32>
    %6 = vector.broadcast %3 : vector<8x1xf32> to vector<8x64xf32>
    %7 = arith.mulf %1, %6 : vector<8x64xf32>
    %cst_5 = arith.constant dense<0.000000e+00> : vector<64xf32>
    %8 = vector.multi_reduction <add>, %7, %cst_5 [0] : vector<8x64xf32> to vector<64xf32>
    %9 = vector.shape_cast %8 : vector<64xf32> to vector<1x64xf32>
    %10 = tpu.reciprocal %5 {approx = true} : vector<1x1xf32> -> vector<1x1xf32>
    %11 = vector.broadcast %10 : vector<1x1xf32> to vector<1x64xf32>
    %12 = arith.mulf %9, %11 : vector<1x64xf32>
    %13 = vector.broadcast %3 : vector<8x1xf32> to vector<8x64xf32>
    %14 = arith.mulf %1, %13 : vector<8x64xf32>
    %cst_6 = arith.constant 1.000000e+00 : f32
    %15 = vector.broadcast %cst_6 : f32 to vector<8x1xf32>
    %16 = arith.subf %15, %3 : vector<8x1xf32>
    %cst_7 = arith.constant -1.000000e+07 : f32
    %17 = vector.broadcast %cst_7 : f32 to vector<8x1xf32>
    %18 = arith.mulf %17, %16 : vector<8x1xf32>
    %19 = vector.broadcast %18 : vector<8x1xf32> to vector<8x64xf32>
    %20 = arith.addf %14, %19 : vector<8x64xf32>
    %cst_8 = arith.constant dense<0xFF800000> : vector<64xf32>
    %21 = vector.multi_reduction <maximumf>, %20, %cst_8 [0] : vector<8x64xf32> to vector<64xf32>
    %22 = vector.shape_cast %21 : vector<64xf32> to vector<1x64xf32>
    %23 = tpu.concatenate %12, %22 in 1 : vector<1x64xf32>, vector<1x64xf32> -> vector<1x128xf32>
    %c0_9 = arith.constant 0 : index
    %c0_10 = arith.constant 0 : index
    %c0_11 = arith.constant 0 : index
    %24 = vector.load %arg3[%c0_9, %c0_10, %c0_11] : memref<1x1x128xf32, #tpu.memory_space<vmem>>, vector<1x1x128xf32>
    %25 = vector.shape_cast %24 : vector<1x1x128xf32> to vector<1x128xf32>
    %26 = vector.shape_cast %23 : vector<1x128xf32> to vector<1x1x128xf32>
    tpu.vector_store %arg3[%c0_9, %c0_10, %c0_11], %26 {strides = array<i32>} : memref<1x1x128xf32, #tpu.memory_space<vmem>>, vector<1x1x128xf32>,
    return
  }
  func.func @transform_0(%arg0: i32) -> (i32, i32, i32) {
    %c0_i32 = arith.constant 0 : i32
    %c0_i32_0 = arith.constant 0 : i32
    %c0_i32_1 = arith.constant 0 : i32
    return %arg0, %c0_i32, %c0_i32_0 : i32, i32, i32
  }
  func.func @transform_1(%arg0: i32) -> (i32, i32, i32) {
    %c0_i32 = arith.constant 0 : i32
    %c0_i32_0 = arith.constant 0 : i32
    %c0_i32_1 = arith.constant 0 : i32
    return %arg0, %c0_i32, %c0_i32_0 : i32, i32, i32
  }
  func.func @transform_2(%arg0: i32) -> (i32, i32, i32) {
    %c0_i32 = arith.constant 0 : i32
    %c0_i32_0 = arith.constant 0 : i32
    %c0_i32_1 = arith.constant 0 : i32
    return %arg0, %c0_i32, %c0_i32_0 : i32, i32, i32
  }
}

module attributes {stable_mosaic.version = 11 : i64} {
  func.func @_linear_kernel(%arg0: i32, %arg1: memref<2x256xf32, #tpu.memory_space<vmem>>, %arg2: memref<256x32xbf16, #tpu.memory_space<vmem>>, %arg3: memref<1x32xf32, #tpu.memory_space<vmem>>, %arg4: memref<2x32xf32, #tpu.memory_space<vmem>>) attributes {dimension_semantics = [#tpu.dimension_semantics<parallel>], iteration_bounds = array<i64: 1>, scalar_prefetch = 0 : i64, scratch_operands = 0 : i64, tpu.core_type = #tpu.core_type<tc>, window_params = [{transform_indices = @transform_0, window_bounds = array<i64: 2, 256>}, {pipeline_mode = #tpu.pipeline_mode<synchronous>, transform_indices = @transform_1, window_bounds = array<i64: 256, 32>}, {pipeline_mode = #tpu.pipeline_mode<synchronous>, transform_indices = @transform_2, window_bounds = array<i64: 1, 32>}, {transform_indices = @transform_3, window_bounds = array<i64: 2, 32>}]} {
    %c0 = arith.constant 0 : index
    %c0_0 = arith.constant 0 : index
    %0 = vector.load %arg1[%c0, %c0_0] : memref<2x256xf32, #tpu.memory_space<vmem>>, vector<2x256xf32>
    %1 = arith.truncf %0 : vector<2x256xf32> to vector<2x256xbf16>
    %c0_1 = arith.constant 0 : index
    %c0_2 = arith.constant 0 : index
    %2 = vector.load %arg2[%c0_1, %c0_2] : memref<256x32xbf16, #tpu.memory_space<vmem>>, vector<256x32xbf16>
    %cst = arith.constant dense<0.000000e+00> : vector<2x32xf32>
    %3 = tpu.matmul %1, %2, %cst {dimension_numbers = #tpu.dot_dimension_numbers<[1], [0], [0], [1], [0, 0, 1, 1], [], []>} : vector<2x256xbf16>, vector<256x32xbf16>, vector<2x32xf32> -> vector<2x32xf32>
    %c0_3 = arith.constant 0 : index
    %c0_4 = arith.constant 0 : index
    %4 = vector.load %arg3[%c0_3, %c0_4] : memref<1x32xf32, #tpu.memory_space<vmem>>, vector<1x32xf32>
    %5 = vector.broadcast %4 : vector<1x32xf32> to vector<2x32xf32>
    %6 = arith.addf %3, %5 : vector<2x32xf32>
    %7 = math.tanh %6 : vector<2x32xf32>
    %c0_5 = arith.constant 0 : index
    %c0_6 = arith.constant 0 : index
    %8 = vector.load %arg4[%c0_5, %c0_6] : memref<2x32xf32, #tpu.memory_space<vmem>>, vector<2x32xf32>
    tpu.vector_store %arg4[%c0_5, %c0_6], %7 {strides = array<i32>} : memref<2x32xf32, #tpu.memory_space<vmem>>, vector<2x32xf32>,
    return
  }
  func.func @transform_0(%arg0: i32) -> (i32, i32) {
    %c0_i32 = arith.constant 0 : i32
    %c0_i32_0 = arith.constant 0 : i32
    return %arg0, %c0_i32 : i32, i32
  }
  func.func @transform_1(%arg0: i32) -> (i32, i32) {
    %c0_i32 = arith.constant 0 : i32
    %c0_i32_0 = arith.constant 0 : i32
    %c0_i32_1 = arith.constant 0 : i32
    return %c0_i32, %c0_i32_0 : i32, i32
  }
  func.func @transform_2(%arg0: i32) -> (i32, i32) {
    %c0_i32 = arith.constant 0 : i32
    %c0_i32_0 = arith.constant 0 : i32
    %c0_i32_1 = arith.constant 0 : i32
    return %c0_i32, %c0_i32_0 : i32, i32
  }
  func.func @transform_3(%arg0: i32) -> (i32, i32) {
    %c0_i32 = arith.constant 0 : i32
    %c0_i32_0 = arith.constant 0 : i32
    return %arg0, %c0_i32 : i32, i32
  }
}

module attributes {stable_mosaic.version = 11 : i64} {
  func.func @_linear_kernel(%arg0: i32, %arg1: memref<2x32xf32, #tpu.memory_space<vmem>>, %arg2: memref<32x3xbf16, #tpu.memory_space<vmem>>, %arg3: memref<1x3xf32, #tpu.memory_space<vmem>>, %arg4: memref<2x3xf32, #tpu.memory_space<vmem>>) attributes {dimension_semantics = [#tpu.dimension_semantics<parallel>], iteration_bounds = array<i64: 1>, scalar_prefetch = 0 : i64, scratch_operands = 0 : i64, tpu.core_type = #tpu.core_type<tc>, window_params = [{transform_indices = @transform_0, window_bounds = array<i64: 2, 32>}, {pipeline_mode = #tpu.pipeline_mode<synchronous>, transform_indices = @transform_1, window_bounds = array<i64: 32, 3>}, {pipeline_mode = #tpu.pipeline_mode<synchronous>, transform_indices = @transform_2, window_bounds = array<i64: 1, 3>}, {transform_indices = @transform_3, window_bounds = array<i64: 2, 3>}]} {
    %c0 = arith.constant 0 : index
    %c0_0 = arith.constant 0 : index
    %0 = vector.load %arg1[%c0, %c0_0] : memref<2x32xf32, #tpu.memory_space<vmem>>, vector<2x32xf32>
    %1 = arith.truncf %0 : vector<2x32xf32> to vector<2x32xbf16>
    %c0_1 = arith.constant 0 : index
    %c0_2 = arith.constant 0 : index
    %2 = vector.load %arg2[%c0_1, %c0_2] : memref<32x3xbf16, #tpu.memory_space<vmem>>, vector<32x3xbf16>
    %cst = arith.constant dense<0.000000e+00> : vector<2x3xf32>
    %3 = tpu.matmul %1, %2, %cst {dimension_numbers = #tpu.dot_dimension_numbers<[1], [0], [0], [1], [0, 0, 1, 1], [], []>} : vector<2x32xbf16>, vector<32x3xbf16>, vector<2x3xf32> -> vector<2x3xf32>
    %c0_3 = arith.constant 0 : index
    %c0_4 = arith.constant 0 : index
    %4 = vector.load %arg3[%c0_3, %c0_4] : memref<1x3xf32, #tpu.memory_space<vmem>>, vector<1x3xf32>
    %5 = vector.broadcast %4 : vector<1x3xf32> to vector<2x3xf32>
    %6 = arith.addf %3, %5 : vector<2x3xf32>
    %c0_5 = arith.constant 0 : index
    %c0_6 = arith.constant 0 : index
    %7 = vector.load %arg4[%c0_5, %c0_6] : memref<2x3xf32, #tpu.memory_space<vmem>>, vector<2x3xf32>
    tpu.vector_store %arg4[%c0_5, %c0_6], %6 {strides = array<i32>} : memref<2x3xf32, #tpu.memory_space<vmem>>, vector<2x3xf32>,
    return
  }
  func.func @transform_0(%arg0: i32) -> (i32, i32) {
    %c0_i32 = arith.constant 0 : i32
    %c0_i32_0 = arith.constant 0 : i32
    return %arg0, %c0_i32 : i32, i32
  }
  func.func @transform_1(%arg0: i32) -> (i32, i32) {
    %c0_i32 = arith.constant 0 : i32
    %c0_i32_0 = arith.constant 0 : i32
    %c0_i32_1 = arith.constant 0 : i32
    return %c0_i32, %c0_i32_0 : i32, i32
  }
  func.func @transform_2(%arg0: i32) -> (i32, i32) {
    %c0_i32 = arith.constant 0 : i32
    %c0_i32_0 = arith.constant 0 : i32
    %c0_i32_1 = arith.constant 0 : i32
    return %c0_i32, %c0_i32_0 : i32, i32
  }
  func.func @transform_3(%arg0: i32) -> (i32, i32) {
    %c0_i32 = arith.constant 0 : i32
    %c0_i32_0 = arith.constant 0 : i32
    return %arg0, %c0_i32 : i32, i32
  }
}

</mosaic_0001>

<llo_original>
// kernel: mimn_forward.23
$region0: #{mimn_forward.23}
  #allocation0 [shape = 'u32[]', space=smem, size = 0x4, offset = 0x4, fixed_abs, tag = 'smem constant byte address 0x4 - core index']
  #allocation1 [shape = 'u32[144,128]{1,0:T(1,128)}', space=vmem, size = 0x12000, scoped, tag = 'internal scratch']
  %s0 = inlined_call_operand.vmem [shape: f32[32,16], index: 0, kind: input, shape index: {}]
  %s1 = inlined_call_operand.vmem [shape: bf16[16,128], index: 1, kind: input, shape index: {}]
  %s2 = inlined_call_operand.vmem [shape: f32[1,128], index: 2, kind: input, shape index: {}]
  %s3 = inlined_call_operand.vmem [shape: f32[32,128], index: 3, kind: output, shape index: {}]
  %s4 = sld [smem:[#allocation0]]
  $region22: #{mimn_forward.23} parent=0
    _
  %s6 = ssub.s32 1, %s4
  %s7 = scalar_select 0, %s6, %s4
  // Predicated region
  $region2: #{mimn_forward.23} parent=0 // pred_check
    _
  $region3: #{mimn_forward.23} parent=0 // pred_check_branch
    %9 = sbr.rel (0) target = $region5
  $region4: #{mimn_forward.23} parent=0 // pred_region
    _
  $region5: #{mimn_forward.23} parent=0 // pred_fallthru
    _
  // Predicated region
  $region6: #{mimn_forward.23} parent=0 // pred_check
    _
  $region7: #{mimn_forward.23} parent=0 // pred_check_branch
    %11 = sbr.rel (0) target = $region9
  $region8: #{mimn_forward.23} parent=0 // pred_region
    _
  $region9: #{mimn_forward.23} parent=0 // pred_fallthru
    _
  // Predicated region
  $region10: #{mimn_forward.23} parent=0 // pred_check
    _
  $region11: #{mimn_forward.23} parent=0 // pred_check_branch
    %13 = sbr.rel (0) target = $region13
  $region12: #{mimn_forward.23} parent=0 // pred_region
    _
  $region13: #{mimn_forward.23} parent=0 // pred_fallthru
    _
  %v15 = vld [vmem:[%s0] sm:$0xff]
  %v16 = vld [vmem:[%s0 + $0x8] sm:$0xff]
  %v17 = vld [vmem:[%s0 + $0x10] sm:$0xff]
  %v18 = vld [vmem:[%s0 + $0x18] sm:$0xff]
  %v19 = vpack.c.bf16 %v16, %v15
  %v20 = vpack.c.bf16 %v18, %v17
  %v21 = vld [vmem:[%s1] sm:$0xf]
  %v22 = vld [vmem:[%s1 + $0x4] sm:$0xf]
  %v23 = vld [vmem:[%s2] sm:$0x1]
  %v25 = vlaneseq
  %v26 = vshrl.u32 %v25, 7
  %v27 = vsub.s32 0, %v26
  %v28 = vrot.slane %v23, %v27
  %v32 = vunpack.c.l.b16 %v21
  %v33 = vunpack.c.l.b16 %v22
  %v34 = vpack.c.b16 %v33, %v32
  %vm36 = vcmask 130048
  %v38 = vsel %vm36, %v19, 0
  %v41 = vsel %vm36, %v20, 0
  %43 = vmatprep.subr.bf16.mxu0 0
  %44 = vmatpush1.bf16.msra.mxu0 %v34
  %45 = vmatprep.subr.bf16.mxu0 0
  %46 = vmatpush1.bf16.msra.mxu0 0
  %47 = vmatprep.subr.bf16.mxu0 0
  %48 = vmatpush1.bf16.msra.mxu0 0
  %49 = vmatprep.subr.bf16.mxu0 0
  %50 = vmatpush1.bf16.msra.mxu0 0
  %51 = vmatprep.subr.bf16.mxu0 0
  %52 = vmatpush1.bf16.msra.mxu0 0
  %53 = vmatprep.subr.bf16.mxu0 0
  %54 = vmatpush1.bf16.msra.mxu0 0
  %55 = vmatprep.subr.bf16.mxu0 0
  %56 = vmatpush1.bf16.msra.mxu0 0
  %57 = vmatprep.subr.bf16.mxu0 0
  %58 = vmatpush1.bf16.msra.mxu0 0
  %59 = vmatprep.subr.bf16.mxu0 0
  %60 = vmatpush1.bf16.msra.mxu0 0
  %61 = vmatprep.subr.bf16.mxu0 0
  %62 = vmatpush1.bf16.msra.mxu0 0
  %63 = vmatprep.subr.bf16.mxu0 0
  %64 = vmatpush1.bf16.msra.mxu0 0
  %65 = vmatprep.subr.bf16.mxu0 0
  %66 = vmatpush1.bf16.msra.mxu0 0
  %67 = vmatprep.subr.bf16.mxu0 0
  %68 = vmatpush1.bf16.msra.mxu0 0
  %69 = vmatprep.subr.bf16.mxu0 0
  %70 = vmatpush1.bf16.msra.mxu0 0
  %71 = vmatprep.subr.bf16.mxu0 0
  %72 = vmatpush1.bf16.msra.mxu0 0
  %73 = vmatprep.subr.bf16.mxu0 0
  %74 = vmatpush1.bf16.msra.mxu0 0
  %75 = vmatprep.mubr.bf16.mxu0 0
  %76 = vmatmul.mubr.bf16.gmra.mrb[0].mxu0 %v38
  %v77 = vpop.f32.mrb[0].mxu0
  %v78 = vadd.f32 %v28, %v77
  %v79 = vpop.f32.mrb[0].mxu0
  %v80 = vpop.f32.mrb[0].mxu0
  %v81 = vadd.f32 %v28, %v80
  %v82 = vpop.f32.mrb[0].mxu0
  %83 = vmatprep.mubr.bf16.mxu0 0
  %84 = vmatmul.mubr.bf16.gmra.mrb[0].mxu0 %v41
  %v85 = vpop.f32.mrb[0].mxu0
  %v86 = vadd.f32 %v28, %v85
  %v87 = vpop.f32.mrb[0].mxu0
  %v88 = vpop.f32.mrb[0].mxu0
  %v89 = vadd.f32 %v28, %v88
  %v90 = vpop.f32.mrb[0].mxu0
  %91 = vdwg.mxu0
  %92 = vst [vmem:[%s3] sm:$0xff] %v78
  %93 = vst [vmem:[%s3 + $0x8] sm:$0xff] %v81
  %94 = vst [vmem:[%s3 + $0x10] sm:$0xff] %v86
  %95 = vst [vmem:[%s3 + $0x18] sm:$0xff] %v89
  // Predicated region
  $region14: #{mimn_forward.23} parent=0 // pred_check
    _
  $region15: #{mimn_forward.23} parent=0 // pred_check_branch
    %97 = sbr.rel (0) target = $region17
  $region16: #{mimn_forward.23} parent=0 // pred_region
    _
  $region17: #{mimn_forward.23} parent=0 // pred_fallthru
    _
  // Predicated region
  $region18: #{mimn_forward.23} parent=0 // pred_check
    _
  $region19: #{mimn_forward.23} parent=0 // pred_check_branch
    %99 = sbr.rel (0) target = $region21
  $region20: #{mimn_forward.23} parent=0 // pred_region
    _
  $region21: #{mimn_forward.23} parent=0 // pred_fallthru
    _

// kernel: mimn_forward.24
$region0: #{mimn_forward.24}
  #allocation0 [shape = 'u32[]', space=smem, size = 0x4, offset = 0x4, fixed_abs, tag = 'smem constant byte address 0x4 - core index']
  #allocation1 [shape = 'u32[144,128]{1,0:T(1,128)}', space=vmem, size = 0x12000, scoped, tag = 'internal scratch']
  #allocation2 [shape = 'f32[4,64]{1,0:T(4,128)}', space=vmem, size = 0x800, scoped, tag = 'scratch operand']
  #allocation3 [shape = 'f32[4,64]{1,0:T(4,128)}', space=vmem, size = 0x800, scoped, tag = 'scratch operand']
  %s0 = inlined_call_operand.vmem [shape: f32[8,4,256], index: 0, kind: input, shape index: {}]
  %s1 = inlined_call_operand.vmem [shape: bf16[64,256], index: 1, kind: input, shape index: {}]
  %s2 = inlined_call_operand.vmem [shape: f32[8,4,64], index: 2, kind: output, shape index: {}]
  %s3 = sld [smem:[#allocation0]]
  $region29: #{mimn_forward.24} parent=0
    _
  %s5 = ssub.s32 1, %s3
  %s6 = scalar_select 0, %s5, %s3
  // Predicated region
  $region2: #{mimn_forward.24} parent=0 // pred_check
    _
  $region3: #{mimn_forward.24} parent=0 // pred_check_branch
    %8 = sbr.rel (0) target = $region5
  $region4: #{mimn_forward.24} parent=0 // pred_region
    _
  $region5: #{mimn_forward.24} parent=0 // pred_fallthru
    _
  // Predicated region
  $region6: #{mimn_forward.24} parent=0 // pred_check
    _
  $region7: #{mimn_forward.24} parent=0 // pred_check_branch
    %10 = sbr.rel (0) target = $region9
  $region8: #{mimn_forward.24} parent=0 // pred_region
    _
  $region9: #{mimn_forward.24} parent=0 // pred_fallthru
    _
  %p12 = scmp.eq.s32.totalorder 0, 0
  // Predicated region
  $region10: #{mimn_forward.24} parent=0 // pred_check
    %p13 = pneg %p12
  $region11: #{mimn_forward.24} parent=0 // pred_check_branch
    %15 = sbr.rel (%p13) target = $region13
  $region12: #{mimn_forward.24} parent=0 // pred_region
    %vm16 = vcmask 519168
    %17 = vst.msk [vmem:[#allocation2] sm:$0xf] %vm16, 0.0
    %18 = vst.msk [vmem:[#allocation3] sm:$0xf] %vm16, 0.0
  $region13: #{mimn_forward.24} parent=0 // pred_fallthru
    _
  %v19 = vld [vmem:[%s1] sm:$0xff]
  %v20 = vld [vmem:[%s1 + $0x8] sm:$0xff]
  %v21 = vld [vmem:[%s1 + $0x10] sm:$0xff]
  %v22 = vld [vmem:[%s1 + $0x18] sm:$0xff]
  %v23 = vld [vmem:[%s1 + $0x20] sm:$0xff]
  %v24 = vld [vmem:[%s1 + $0x28] sm:$0xff]
  %v25 = vld [vmem:[%s1 + $0x30] sm:$0xff]
  %v26 = vld [vmem:[%s1 + $0x38] sm:$0xff]
  %v27 = vld [vmem:[#allocation2] sm:$0xf]
  %v28 = vld [vmem:[#allocation3] sm:$0xf]
  loop: start=0, step=1, limit=8
  $region14: #{mimn_forward.24} parent=0 // loop_pre_header
    _
  $region15: #{mimn_forward.24} parent=0 // loop_header
    %s30 = sphi 0, %s34
    %p31 = scmp.ge.s32.totalorder %s30, 8
    %v35 = vphi %v27, %v168
    %v36 = vphi %v28, %v175
  $region16: #{mimn_forward.24} parent=0 // loop_header_branch
    %33 = sbr.rel (%p31) target = $region20
  $region17: #{mimn_forward.24} parent=0 // loop_body
    %s37 = smul.u32 %s30, 2
    %s38 = smul.addr %s37, 4
    %s39 = scalar_lea.vmem %s0, %s38
    %v40 = vld [vmem:[%s39] sm:$0xff]
    %v41 = vpack.c.bf16 %v35, %v35
    %v50 = vunpack.c.l.b16 %v19
    %v51 = vunpack.c.h.b16 %v19
    %v52 = vunpack.c.l.b16 %v20
    %v53 = vunpack.c.h.b16 %v20
    %v54 = vunpack.c.l.b16 %v21
    %v55 = vunpack.c.h.b16 %v21
    %v56 = vunpack.c.l.b16 %v22
    %v57 = vunpack.c.h.b16 %v22
    %v58 = vunpack.c.l.b16 %v23
    %v59 = vunpack.c.h.b16 %v23
    %v60 = vunpack.c.l.b16 %v24
    %v61 = vunpack.c.h.b16 %v24
    %v62 = vunpack.c.l.b16 %v25
    %v63 = vunpack.c.h.b16 %v25
    %v64 = vunpack.c.l.b16 %v26
    %v65 = vunpack.c.h.b16 %v26
    %v66 = vpack.c.b16 %v52, %v50
    %v67 = vpack.c.b16 %v53, %v51
    %v68 = vpack.c.b16 %v56, %v54
    %v69 = vpack.c.b16 %v57, %v55
    %v70 = vpack.c.b16 %v60, %v58
    %v71 = vpack.c.b16 %v61, %v59
    %v72 = vpack.c.b16 %v64, %v62
    %v73 = vpack.c.b16 %v65, %v63
    %vm82 = vcmask 523264
    %v84 = vsel %vm82, %v41, 0
    %86 = vmatprep.subr.bf16.mxu0 %v67
    %87 = vmatpush1.bf16.msra.mxu0 %v66
    %88 = vmatprep.subr.bf16.mxu0 %v69
    %89 = vmatpush1.bf16.msra.mxu0 %v68
    %90 = vmatprep.subr.bf16.mxu0 %v71
    %91 = vmatpush1.bf16.msra.mxu0 %v70
    %92 = vmatprep.subr.bf16.mxu0 %v73
    %93 = vmatpush1.bf16.msra.mxu0 %v72
    %94 = vmatprep.subr.bf16.mxu0 0
    %95 = vmatpush1.bf16.msra.mxu0 0
    %96 = vmatprep.subr.bf16.mxu0 0
    %97 = vmatpush1.bf16.msra.mxu0 0
    %98 = vmatprep.subr.bf16.mxu0 0
    %99 = vmatpush1.bf16.msra.mxu0 0
    %100 = vmatprep.subr.bf16.mxu0 0
    %101 = vmatpush1.bf16.msra.mxu0 0
    %102 = vmatprep.subr.bf16.mxu0 0
    %103 = vmatpush1.bf16.msra.mxu0 0
    %104 = vmatprep.subr.bf16.mxu0 0
    %105 = vmatpush1.bf16.msra.mxu0 0
    %106 = vmatprep.subr.bf16.mxu0 0
    %107 = vmatpush1.bf16.msra.mxu0 0
    %108 = vmatprep.subr.bf16.mxu0 0
    %109 = vmatpush1.bf16.msra.mxu0 0
    %110 = vmatprep.subr.bf16.mxu0 0
    %111 = vmatpush1.bf16.msra.mxu0 0
    %112 = vmatprep.subr.bf16.mxu0 0
    %113 = vmatpush1.bf16.msra.mxu0 0
    %114 = vmatprep.subr.bf16.mxu0 0
    %115 = vmatpush1.bf16.msra.mxu0 0
    %116 = vmatprep.subr.bf16.mxu0 0
    %117 = vmatpush1.bf16.msra.mxu0 0
    %118 = vmatprep.mubr.bf16.mxu0 0
    %119 = vmatmul.mubr.bf16.gmra.mrb[0].mxu0 %v84
    %v120 = vpop.f32.mrb[0].mxu0
    %v121 = vadd.f32 0.0, %v120
    %v122 = vpop.f32.mrb[0].mxu0
    %v123 = vadd.f32 0.0, %v122
    %v124 = vpop.f32.mrb[0].mxu0
    %v125 = vpop.f32.mrb[0].mxu0
    %126 = vdwg.mxu0
    %v129 = vcombine.low %v121, %v123
    %v131 = vadd.f32 %v40, %v129
    %v132 = vxor.u32 %v131, 2147483648
    %v133 = vmul.f32 %v132, 1.442695
    %v134 = vpow.pop %v133
    %v135 = vadd.f32 %v134, 1.0
    %v136 = vrcp.pop %v135
    %v137 = vmul.f32 1.0, %v136
    %v139 = vrot.slane %v131, 4
    %v141 = vtanh.pop %v139
    %142 = vrot.lane.b32.xlu0 %v131, 64
    %v143 = vpop.permute.xlu0 %142
    %v144 = vrot.slane %v143, 4
    %v146 = vxor.u32 %v144, 2147483648
    %v147 = vmul.f32 %v146, 1.442695
    %v148 = vpow.pop %v147
    %v149 = vadd.f32 %v148, 1.0
    %v150 = vrcp.pop %v149
    %v151 = vmul.f32 1.0, %v150
    %153 = vrot.lane.b32.xlu0 %v36, 64
    %v154 = vpop.permute.xlu0 %153
    %v156 = vmul.f32 %v137, %v154
    %v157 = vmul.f32 %v137, %v141
    %159 = vrot.lane.b32.xlu0 %v157, 64
    %v160 = vpop.permute.xlu0 %159
    %v162 = vadd.f32 %v156, %v160
    %v163 = vtanh.pop %v162
    %165 = vrot.lane.b32.xlu0 %v163, 64
    %v166 = vpop.permute.xlu0 %165
    %v168 = vmul.f32 %v151, %v166
    %s169 = smul.u32 %s30, 4
    %s170 = scalar_lea.vmem %s2, %s169
    %vm171 = vcmask 519168
    %172 = vst.msk [vmem:[%s170] sm:$0xf] %vm171, %v168
    %174 = vrot.lane.b32.xlu0 %v162, 64
    %v175 = vpop.permute.xlu0 %174
  $region18: #{mimn_forward.24} parent=0 // loop_footer
    %s34 = sadd.s32 1, %s30
  $region19: #{mimn_forward.24} parent=0 // loop_footer_branch
    %29 = sbr.rel target = $region15
  $region20: #{mimn_forward.24} parent=0 // loop_exit
    _
  %vm177 = vcmask 519168
  %178 = vst.msk [vmem:[#allocation2] sm:$0xf] %vm177, %v35
  %179 = vst.msk [vmem:[#allocation3] sm:$0xf] %vm177, %v36
  // Predicated region
  $region21: #{mimn_forward.24} parent=0 // pred_check
    _
  $region22: #{mimn_forward.24} parent=0 // pred_check_branch
    %181 = sbr.rel (0) target = $region24
  $region23: #{mimn_forward.24} parent=0 // pred_region
    _
  $region24: #{mimn_forward.24} parent=0 // pred_fallthru
    _
  // Predicated region
  $region25: #{mimn_forward.24} parent=0 // pred_check
    _
  $region26: #{mimn_forward.24} parent=0 // pred_check_branch
    %183 = sbr.rel (0) target = $region28
  $region27: #{mimn_forward.24} parent=0 // pred_region
    _
  $region28: #{mimn_forward.24} parent=0 // pred_fallthru
    _

// kernel: mimn_forward.25
$region0: #{mimn_forward.25}
  #allocation0 [shape = 'u32[]', space=smem, size = 0x4, offset = 0x4, fixed_abs, tag = 'smem constant byte address 0x4 - core index']
  #allocation1 [shape = 'u32[144,128]{1,0:T(1,128)}', space=vmem, size = 0x12000, scoped, tag = 'internal scratch']
  %s0 = inlined_call_operand.vmem [shape: f32[2,8,64], index: 0, kind: input, shape index: {}]
  %s1 = inlined_call_operand.vmem [shape: f32[2,6,64], index: 1, kind: input, shape index: {}]
  %s2 = inlined_call_operand.vmem [shape: f32[2,8,1], index: 2, kind: input, shape index: {}]
  %s3 = inlined_call_operand.vmem [shape: f32[2,1,6], index: 3, kind: input, shape index: {}]
  %s4 = inlined_call_operand.vmem [shape: f32[2,6,1], index: 4, kind: input, shape index: {}]
  %s5 = inlined_call_operand.vmem [shape: f32[2,8,64], index: 5, kind: output, shape index: {0}]
  %s6 = inlined_call_operand.vmem [shape: f32[2,6,64], index: 6, kind: output, shape index: {1}]
  %7 = xla_tuple %s5, %s6
  %s8 = sld [smem:[#allocation0]]
  $region61: #{mimn_forward.25} parent=0
    _
  %s10 = ssub.s32 1, %s8
  %s11 = scalar_select 0, %s10, %s8
  loop: start=0, step=1, limit=4
  $region2: #{mimn_forward.25} parent=0 // loop_pre_header
    _
  $region3: #{mimn_forward.25} parent=0 // loop_header
    %s13 = sphi 0, %s17
    %p14 = scmp.ge.s32.totalorder %s13, 4
    %s23 = sphi 0, %s25
    %s26 = sphi 0, %s23
    %s27 = sphi 0, %s26
    %s43 = sphi 0, %s27
    %s49 = sphi 0, %s51
    %s52 = sphi 0, %s49
    %s53 = sphi 0, %s52
    %s69 = sphi 0, %s53
    %s75 = sphi 0, %s77
    %s78 = sphi 0, %s75
    %s79 = sphi 0, %s78
    %s95 = sphi 0, %s79
    %s101 = sphi 0, %s103
    %s104 = sphi 0, %s101
    %s105 = sphi 0, %s104
    %s121 = sphi 0, %s105
    %s127 = sphi 0, %s129
    %s130 = sphi 0, %s127
    %s131 = sphi 0, %s130
    %s147 = sphi 0, %s131
    %s153 = sphi 0, %s155
    %s156 = sphi 0, %s153
    %s157 = sphi 0, %s156
    %s173 = sphi 0, %s157
    %s179 = sphi 0, %s181
    %s182 = sphi 0, %s179
    %s183 = sphi 0, %s182
    %s199 = sphi 0, %s183
  $region4: #{mimn_forward.25} parent=0 // loop_header_branch
    %16 = sbr.rel (%p14) target = $region8
  $region5: #{mimn_forward.25} parent=0 // loop_body
    %s18 = ssub.s32 %s13, 1
    %s19 = ssub.s32 %s13, 2
    %s20 = sadd.s32 %s13, 1
    %s21 = ssub.s32 %s13, %s20
    %p22 = scmp.eq.s32.totalorder %s21, 0
    %s24 = sadd.s32 %s23, 1
    %s25 = scalar_select %p22, %s23, %s24
    %p28 = pneg %p22
    %p29 = scmp.eq.s32.totalorder %s13, 1
    %p30 = por %p28, %p29
    %p31 = scmp.ne.s32.totalorder %s23, %s26
    %p32 = scmp.eq.s32.totalorder %s13, 0
    %p33 = por %p31, %p32
    %p34 = scmp.ne.s32.totalorder %s23, %s26
    %p35 = scmp.eq.s32.totalorder %s18, 1
    %p36 = por %p34, %p35
    %p37 = scmp.ne.s32.totalorder %s26, %s27
    %p38 = scmp.eq.s32.totalorder %s18, 0
    %p39 = por %p37, %p38
    %p40 = scmp.ne.s32.totalorder %s26, %s27
    %p41 = scmp.eq.s32.totalorder %s19, 1
    %p42 = por %p40, %p41
    %p44 = scmp.ne.s32.totalorder %s27, %s43
    %p45 = scmp.eq.s32.totalorder %s19, 0
    %p46 = por %p44, %p45
    %s47 = ssub.s32 %s13, %s20
    %p48 = scmp.eq.s32.totalorder %s47, 0
    %s50 = sadd.s32 %s49, 1
    %s51 = scalar_select %p48, %s49, %s50
    %p54 = pneg %p48
    %p55 = scmp.eq.s32.totalorder %s13, 1
    %p56 = por %p54, %p55
    %p57 = scmp.ne.s32.totalorder %s49, %s52
    %p58 = scmp.eq.s32.totalorder %s13, 0
    %p59 = por %p57, %p58
    %p60 = scmp.ne.s32.totalorder %s49, %s52
    %p61 = scmp.eq.s32.totalorder %s18, 1
    %p62 = por %p60, %p61
    %p63 = scmp.ne.s32.totalorder %s52, %s53
    %p64 = scmp.eq.s32.totalorder %s18, 0
    %p65 = por %p63, %p64
    %p66 = scmp.ne.s32.totalorder %s52, %s53
    %p67 = scmp.eq.s32.totalorder %s19, 1
    %p68 = por %p66, %p67
    %p70 = scmp.ne.s32.totalorder %s53, %s69
    %p71 = scmp.eq.s32.totalorder %s19, 0
    %p72 = por %p70, %p71
    %s73 = ssub.s32 %s13, %s20
    %p74 = scmp.eq.s32.totalorder %s73, 0
    %s76 = sadd.s32 %s75, 1
    %s77 = scalar_select %p74, %s75, %s76
    %p80 = pneg %p74
    %p81 = scmp.eq.s32.totalorder %s13, 1
    %p82 = por %p80, %p81
    %p83 = scmp.ne.s32.totalorder %s75, %s78
    %p84 = scmp.eq.s32.totalorder %s13, 0
    %p85 = por %p83, %p84
    %p86 = scmp.ne.s32.totalorder %s75, %s78
    %p87 = scmp.eq.s32.totalorder %s18, 1
    %p88 = por %p86, %p87
    %p89 = scmp.ne.s32.totalorder %s78, %s79
    %p90 = scmp.eq.s32.totalorder %s18, 0
    %p91 = por %p89, %p90
    %p92 = scmp.ne.s32.totalorder %s78, %s79
    %p93 = scmp.eq.s32.totalorder %s19, 1
    %p94 = por %p92, %p93
    %p96 = scmp.ne.s32.totalorder %s79, %s95
    %p97 = scmp.eq.s32.totalorder %s19, 0
    %p98 = por %p96, %p97
    %s99 = ssub.s32 %s13, %s20
    %p100 = scmp.eq.s32.totalorder %s99, 0
    %s102 = sadd.s32 %s101, 1
    %s103 = scalar_select %p100, %s101, %s102
    %p106 = pneg %p100
    %p107 = scmp.eq.s32.totalorder %s13, 1
    %p108 = por %p106, %p107
    %p109 = scmp.ne.s32.totalorder %s101, %s104
    %p110 = scmp.eq.s32.totalorder %s13, 0
    %p111 = por %p109, %p110
    %p112 = scmp.ne.s32.totalorder %s101, %s104
    %p113 = scmp.eq.s32.totalorder %s18, 1
    %p114 = por %p112, %p113
    %p115 = scmp.ne.s32.totalorder %s104, %s105
    %p116 = scmp.eq.s32.totalorder %s18, 0
    %p117 = por %p115, %p116
    %p118 = scmp.ne.s32.totalorder %s104, %s105
    %p119 = scmp.eq.s32.totalorder %s19, 1
    %p120 = por %p118, %p119
    %p122 = scmp.ne.s32.totalorder %s105, %s121
    %p123 = scmp.eq.s32.totalorder %s19, 0
    %p124 = por %p122, %p123
    %s125 = ssub.s32 %s13, %s20
    %p126 = scmp.eq.s32.totalorder %s125, 0
    %s128 = sadd.s32 %s127, 1
    %s129 = scalar_select %p126, %s127, %s128
    %p132 = pneg %p126
    %p133 = scmp.eq.s32.totalorder %s13, 1
    %p134 = por %p132, %p133
    %p135 = scmp.ne.s32.totalorder %s127, %s130
    %p136 = scmp.eq.s32.totalorder %s13, 0
    %p137 = por %p135, %p136
    %p138 = scmp.ne.s32.totalorder %s127, %s130
    %p139 = scmp.eq.s32.totalorder %s18, 1
    %p140 = por %p138, %p139
    %p141 = scmp.ne.s32.totalorder %s130, %s131
    %p142 = scmp.eq.s32.totalorder %s18, 0
    %p143 = por %p141, %p142
    %p144 = scmp.ne.s32.totalorder %s130, %s131
    %p145 = scmp.eq.s32.totalorder %s19, 1
    %p146 = por %p144, %p145
    %p148 = scmp.ne.s32.totalorder %s131, %s147
    %p149 = scmp.eq.s32.totalorder %s19, 0
    %p150 = por %p148, %p149
    %s151 = ssub.s32 %s13, %s20
    %p152 = scmp.eq.s32.totalorder %s151, 0
    %s154 = sadd.s32 %s153, 1
    %s155 = scalar_select %p152, %s153, %s154
    %p158 = pneg %p152
    %p159 = scmp.eq.s32.totalorder %s13, 1
    %p160 = por %p158, %p159
    %p161 = scmp.ne.s32.totalorder %s153, %s156
    %p162 = scmp.eq.s32.totalorder %s13, 0
    %p163 = por %p161, %p162
    %p164 = scmp.ne.s32.totalorder %s153, %s156
    %p165 = scmp.eq.s32.totalorder %s18, 1
    %p166 = por %p164, %p165
    %p167 = scmp.ne.s32.totalorder %s156, %s157
    %p168 = scmp.eq.s32.totalorder %s18, 0
    %p169 = por %p167, %p168
    %p170 = scmp.ne.s32.totalorder %s156, %s157
    %p171 = scmp.eq.s32.totalorder %s19, 1
    %p172 = por %p170, %p171
    %p174 = scmp.ne.s32.totalorder %s157, %s173
    %p175 = scmp.eq.s32.totalorder %s19, 0
    %p176 = por %p174, %p175
    %s177 = ssub.s32 %s13, %s20
    %p178 = scmp.eq.s32.totalorder %s177, 0
    %s180 = sadd.s32 %s179, 1
    %s181 = scalar_select %p178, %s179, %s180
    %p184 = pneg %p178
    %p185 = scmp.eq.s32.totalorder %s13, 1
    %p186 = por %p184, %p185
    %p187 = scmp.ne.s32.totalorder %s179, %s182
    %p188 = scmp.eq.s32.totalorder %s13, 0
    %p189 = por %p187, %p188
    %p190 = scmp.ne.s32.totalorder %s179, %s182
    %p191 = scmp.eq.s32.totalorder %s18, 1
    %p192 = por %p190, %p191
    %p193 = scmp.ne.s32.totalorder %s182, %s183
    %p194 = scmp.eq.s32.totalorder %s18, 0
    %p195 = por %p193, %p194
    %p196 = scmp.ne.s32.totalorder %s182, %s183
    %p197 = scmp.eq.s32.totalorder %s19, 1
    %p198 = por %p196, %p197
    %p200 = scmp.ne.s32.totalorder %s183, %s199
    %p201 = scmp.eq.s32.totalorder %s19, 0
    %p202 = por %p200, %p201
    %p203 = scmp.le.s32.totalorder 1, %s13
    %p204 = scmp.lt.s32.totalorder %s13, 3
    %p205 = pnand %p203, %p204
    %p206 = pneg %p205
    // Predicated region
    $region9: #{mimn_forward.25} parent=5 // pred_check
      _
    $region10: #{mimn_forward.25} parent=5 // pred_check_branch
      %208 = sbr.rel (%p205) target = $region12
    $region11: #{mimn_forward.25} parent=5 // pred_region
      %s209 = ssub.s32 %s13, 1
    $region12: #{mimn_forward.25} parent=5 // pred_fallthru
      _
    %p210 = scmp.lt.s32.totalorder %s13, 2
    // Predicated region
    $region13: #{mimn_forward.25} parent=5 // pred_check
      %p211 = pneg %p210
    $region14: #{mimn_forward.25} parent=5 // pred_check_branch
      %213 = sbr.rel (%p211) target = $region16
    $region15: #{mimn_forward.25} parent=5 // pred_region
      // Predicated region
      $region17: #{mimn_forward.25} parent=15 // pred_check
        %p214 = pneg %p33
      $region18: #{mimn_forward.25} parent=15 // pred_check_branch
        %216 = sbr.rel (%p214) target = $region20
      $region19: #{mimn_forward.25} parent=15 // pred_region
        %p217 = scmp.lt.s32.totalorder %s13, 1
        %s218 = scalar_select %p217, %s13, 1
        %s219 = smul.addr %s218, 8
        %s220 = scalar_lea.vmem %s0, %s219
      $region20: #{mimn_forward.25} parent=15 // pred_fallthru
        _
      // Predicated region
      $region21: #{mimn_forward.25} parent=15 // pred_check
        %p221 = pneg %p59
      $region22: #{mimn_forward.25} parent=15 // pred_check_branch
        %223 = sbr.rel (%p221) target = $region24
      $region23: #{mimn_forward.25} parent=15 // pred_region
        %p224 = scmp.lt.s32.totalorder %s13, 1
        %s225 = scalar_select %p224, %s13, 1
        %s226 = smul.addr %s225, 8
        %s227 = scalar_lea.vmem %s1, %s226
      $region24: #{mimn_forward.25} parent=15 // pred_fallthru
        _
      // Predicated region
      $region25: #{mimn_forward.25} parent=15 // pred_check
        %p228 = pneg %p85
      $region26: #{mimn_forward.25} parent=15 // pred_check_branch
        %230 = sbr.rel (%p228) target = $region28
      $region27: #{mimn_forward.25} parent=15 // pred_region
        %p231 = scmp.lt.s32.totalorder %s13, 1
        %s232 = scalar_select %p231, %s13, 1
        %s233 = smul.addr %s232, 8
        %s234 = scalar_lea.vmem %s2, %s233
      $region28: #{mimn_forward.25} parent=15 // pred_fallthru
        _
      // Predicated region
      $region29: #{mimn_forward.25} parent=15 // pred_check
        %p235 = pneg %p111
      $region30: #{mimn_forward.25} parent=15 // pred_check_branch
        %237 = sbr.rel (%p235) target = $region32
      $region31: #{mimn_forward.25} parent=15 // pred_region
        %p238 = scmp.lt.s32.totalorder %s13, 1
        %s239 = scalar_select %p238, %s13, 1
        %s240 = scalar_lea.vmem %s3, %s239
      $region32: #{mimn_forward.25} parent=15 // pred_fallthru
        _
      // Predicated region
      $region33: #{mimn_forward.25} parent=15 // pred_check
        %p241 = pneg %p137
      $region34: #{mimn_forward.25} parent=15 // pred_check_branch
        %243 = sbr.rel (%p241) target = $region36
      $region35: #{mimn_forward.25} parent=15 // pred_region
        %p244 = scmp.lt.s32.totalorder %s13, 1
        %s245 = scalar_select %p244, %s13, 1
        %s246 = smul.addr %s245, 8
        %s247 = scalar_lea.vmem %s4, %s246
      $region36: #{mimn_forward.25} parent=15 // pred_fallthru
        _
    $region16: #{mimn_forward.25} parent=5 // pred_fallthru
      _
    %p248 = scmp.le.s32.totalorder 1, %s13
    %p249 = scmp.lt.s32.totalorder %s13, 3
    %p250 = pnand %p248, %p249
    %p251 = pneg %p250
    // Predicated region
    $region37: #{mimn_forward.25} parent=5 // pred_check
      _
    $region38: #{mimn_forward.25} parent=5 // pred_check_branch
      %253 = sbr.rel (%p250) target = $region40
    $region39: #{mimn_forward.25} parent=5 // pred_region
      %s254 = ssub.s32 %s13, 1
      %p255 = scmp.lt.s32.totalorder %s18, 1
      %s256 = scalar_select %p255, %s18, 1
      %s257 = smul.addr %s256, 8
      %s258 = scalar_lea.vmem %s0, %s257
      %p259 = pneg %p39
      %p260 = pneg %p36
      %p261 = scmp.lt.s32.totalorder %s18, 1
      %s262 = scalar_select %p261, %s18, 1
      %s263 = smul.addr %s262, 8
      %s264 = scalar_lea.vmem %s1, %s263
      %p265 = pneg %p65
      %p266 = pneg %p62
      %p267 = scmp.lt.s32.totalorder %s18, 1
      %s268 = scalar_select %p267, %s18, 1
      %s269 = smul.addr %s268, 8
      %s270 = scalar_lea.vmem %s2, %s269
      %p271 = pneg %p91
      %p272 = pneg %p88
      %p273 = scmp.lt.s32.totalorder %s18, 1
      %s274 = scalar_select %p273, %s18, 1
      %s275 = scalar_lea.vmem %s3, %s274
      %p276 = pneg %p117
      %p277 = pneg %p114
      %p278 = scmp.lt.s32.totalorder %s18, 1
      %s279 = scalar_select %p278, %s18, 1
      %s280 = smul.addr %s279, 8
      %s281 = scalar_lea.vmem %s4, %s280
      %p282 = pneg %p143
      %p283 = pneg %p140
      %p284 = pneg %p169
      %p285 = pneg %p166
      %p286 = scmp.lt.s32.totalorder %s18, 1
      %s287 = scalar_select %p286, %s18, 1
      %s288 = smul.addr %s287, 8
      %s289 = scalar_lea.vmem %s5, %s288
      %p290 = pneg %p195
      %p291 = pneg %p192
      %p292 = scmp.lt.s32.totalorder %s18, 1
      %s293 = scalar_select %p292, %s18, 1
      %s294 = smul.addr %s293, 8
      %s295 = scalar_lea.vmem %s6, %s294
      %p296 = scmp.lt.s32.totalorder %s18, 1
      %s297 = scalar_select %p296, %s18, 1
      %s298 = smul.addr %s297, 8
      %s299 = scalar_lea.vmem %s0, %s298
      %p300 = scmp.lt.s32.totalorder %s18, 1
      %s301 = scalar_select %p300, %s18, 1
      %s302 = smul.addr %s301, 8
      %s303 = scalar_lea.vmem %s1, %s302
      %p304 = scmp.lt.s32.totalorder %s18, 1
      %s305 = scalar_select %p304, %s18, 1
      %s306 = smul.addr %s305, 8
      %s307 = scalar_lea.vmem %s2, %s306
      %p308 = scmp.lt.s32.totalorder %s18, 1
      %s309 = scalar_select %p308, %s18, 1
      %s310 = scalar_lea.vmem %s3, %s309
      %p311 = scmp.lt.s32.totalorder %s18, 1
      %s312 = scalar_select %p311, %s18, 1
      %s313 = smul.addr %s312, 8
      %s314 = scalar_lea.vmem %s4, %s313
      %p315 = scmp.lt.s32.totalorder %s18, 1
      %s316 = scalar_select %p315, %s18, 1
      %s317 = smul.addr %s316, 8
      %s318 = scalar_lea.vmem %s5, %s317
      %p319 = scmp.lt.s32.totalorder %s18, 1
      %s320 = scalar_select %p319, %s18, 1
      %s321 = smul.addr %s320, 8
      %s322 = scalar_lea.vmem %s6, %s321
      %v324 = vld [vmem:[%s299] sm:$0xff]
      %v325 = vld [vmem:[%s303] sm:$0x3f]
      %v326 = vld [vmem:[%s307] sm:$0xff]
      %v327 = vld [vmem:[%s310] sm:$0x1]
      %v328 = vld [vmem:[%s314] sm:$0x3f]
      %v329 = vpack.c.bf16 %v324, %v324
      %v330 = vpack.c.bf16 %v325, %v325
      %vm331 = vcmask 523264
      %v333 = vsel %vm331, %v329, 0
      %v336 = vsel %vm331, %v330, 0
      %338 = vmatprep.subr.bf16.mxu0 0
      %339 = vmatpush1.bf16.xpose.msra.mxu0 %v336
      %340 = vmatprep.subr.bf16.mxu0 0
      %341 = vmatpush1.bf16.xpose.msra.mxu0 0
      %342 = vmatprep.subr.bf16.mxu0 0
      %343 = vmatpush1.bf16.xpose.msra.mxu0 0
      %344 = vmatprep.subr.bf16.mxu0 0
      %345 = vmatpush1.bf16.xpose.msra.mxu0 0
      %346 = vmatprep.subr.bf16.mxu0 0
      %347 = vmatpush1.bf16.xpose.msra.mxu0 0
      %348 = vmatprep.subr.bf16.mxu0 0
      %349 = vmatpush1.bf16.xpose.msra.mxu0 0
      %350 = vmatprep.subr.bf16.mxu0 0
      %351 = vmatpush1.bf16.xpose.msra.mxu0 0
      %352 = vmatprep.subr.bf16.mxu0 0
      %353 = vmatpush1.bf16.xpose.msra.mxu0 0
      %354 = vmatprep.subr.bf16.mxu0 0
      %355 = vmatpush1.bf16.xpose.msra.mxu0 0
      %356 = vmatprep.subr.bf16.mxu0 0
      %357 = vmatpush1.bf16.xpose.msra.mxu0 0
      %358 = vmatprep.subr.bf16.mxu0 0
      %359 = vmatpush1.bf16.xpose.msra.mxu0 0
      %360 = vmatprep.subr.bf16.mxu0 0
      %361 = vmatpush1.bf16.xpose.msra.mxu0 0
      %362 = vmatprep.subr.bf16.mxu0 0
      %363 = vmatpush1.bf16.xpose.msra.mxu0 0
      %364 = vmatprep.subr.bf16.mxu0 0
      %365 = vmatpush1.bf16.xpose.msra.mxu0 0
      %366 = vmatprep.subr.bf16.mxu0 0
      %367 = vmatpush1.bf16.xpose.msra.mxu0 0
      %368 = vmatprep.subr.bf16.mxu0 0
      %369 = vmatpush1.bf16.xpose.msra.mxu0 0
      %370 = vmatprep.mubr.bf16.mxu0 0
      %371 = vmatmul.mubr.bf16.gmra.mrb[0].mxu0 %v333
      %v372 = vpop.f32.mrb[0].mxu0
      %v373 = vadd.f32 0.0, %v372
      %v374 = vpop.f32.mrb[0].mxu0
      %v375 = vpop.f32.mrb[0].mxu0
      %v376 = vpop.f32.mrb[0].mxu0
      %377 = vdwg.mxu0
      %v378 = vsub.f32 %v327, 1.0
      %v379 = vmul.f32 %v378, 10000000.0
      %v381 = vlaneseq
      %v382 = vshrl.u32 %v381, 7
      %v383 = vsub.s32 0, %v382
      %v384 = vrot.slane %v379, %v383
      %v386 = vadd.f32 %v373, %v384
      %vm387 = vcmask 48128
      %v388 = vsel %vm387, %v386, -inf
      %389 = vmax.xlane.f32.xlu0 %v388
      %v390 = vpop.xlane.xlu0 %389
      %v391 = vsub.f32 %v386, %v390
      %v392 = vmul.f32 %v391, 1.442695
      %v393 = vpow.pop %v392
      %v395 = vlaneseq
      %v396 = vshrl.u32 %v395, 7
      %v397 = vsub.s32 0, %v396
      %v398 = vrot.slane %v327, %v397
      %v400 = vmul.f32 %v393, %v398
      %v401 = vsel %vm387, %v400, 0.0
      %402 = vadd.xlane.f32.xlu0 %v401
      %v403 = vpop.xlane.xlu0 %402
      %v404 = vadd.f32 %v403, 1e-13
      %v405 = vrcp.pop %v404
      %v406 = vmul.f32 %v400, %v405
      %v407 = vpack.c.bf16 %v406, %v406
      %v409 = vsel %vm387, %v407, 0
      %vm411 = vcmask 1042432
      %v412 = vsel %vm411, %v330, 0
      %414 = vmatprep.subr.bf16.mxu0 0
      %415 = vmatpush1.bf16.msra.mxu0 %v412
      %416 = vmatprep.subr.bf16.mxu0 0
      %417 = vmatpush1.bf16.msra.mxu0 0
      %418 = vmatprep.subr.bf16.mxu0 0
      %419 = vmatpush1.bf16.msra.mxu0 0
      %420 = vmatprep.subr.bf16.mxu0 0
      %421 = vmatpush1.bf16.msra.mxu0 0
      %422 = vmatprep.subr.bf16.mxu0 0
      %423 = vmatpush1.bf16.msra.mxu0 0
      %424 = vmatprep.subr.bf16.mxu0 0
      %425 = vmatpush1.bf16.msra.mxu0 0
      %426 = vmatprep.subr.bf16.mxu0 0
      %427 = vmatpush1.bf16.msra.mxu0 0
      %428 = vmatprep.subr.bf16.mxu0 0
      %429 = vmatpush1.bf16.msra.mxu0 0
      %430 = vmatprep.subr.bf16.mxu0 0
      %431 = vmatpush1.bf16.msra.mxu0 0
      %432 = vmatprep.subr.bf16.mxu0 0
      %433 = vmatpush1.bf16.msra.mxu0 0
      %434 = vmatprep.subr.bf16.mxu0 0
      %435 = vmatpush1.bf16.msra.mxu0 0
      %436 = vmatprep.subr.bf16.mxu0 0
      %437 = vmatpush1.bf16.msra.mxu0 0
      %438 = vmatprep.subr.bf16.mxu0 0
      %439 = vmatpush1.bf16.msra.mxu0 0
      %440 = vmatprep.subr.bf16.mxu0 0
      %441 = vmatpush1.bf16.msra.mxu0 0
      %442 = vmatprep.subr.bf16.mxu0 0
      %443 = vmatpush1.bf16.msra.mxu0 0
      %444 = vmatprep.subr.bf16.mxu0 0
      %445 = vmatpush1.bf16.msra.mxu0 0
      %446 = vmatprep.mubr.bf16.mxu0 0
      %447 = vmatmul.mubr.bf16.gmra.mrb[0].mxu0 %v409
      %v448 = vpop.f32.mrb[0].mxu0
      %v449 = vadd.f32 0.0, %v448
      %v450 = vpop.f32.mrb[0].mxu0
      %v451 = vpop.f32.mrb[0].mxu0
      %v452 = vpop.f32.mrb[0].mxu0
      %453 = vdwg.mxu0
      %455 = vset.pattern.permute.xlu0 0
      %456 = vperm.xlu0 %455, %v326
      %v457 = vpop.permute.xlu0 %456
      %v459 = vmul.f32 %v449, %v457
      %460 = vst.msk [vmem:[%s318] sm:$0xff] %vm331, %v459
      %v461 = vsub.f32 %v326, 1.0
      %v462 = vmul.f32 %v461, 10000000.0
      %464 = vset.pattern.permute.xlu0 0
      %465 = vperm.xlu0 %464, %v462
      %v466 = vpop.permute.xlu0 %465
      %v468 = vadd.f32 %v373, %v466
      %v469 = vsel %vm387, %v468, -inf
      %v470 = vrot.slane %v469, 4
      %v471 = vmax.f32 %v469, %v470
      %v472 = vrot.slane %v471, 2
      %v473 = vmax.f32 %v471, %v472
      %v474 = vrot.slane %v473, 1
      %v475 = vmax.f32 %v473, %v474
      %v476 = vsub.f32 %v468, %v475
      %v477 = vmul.f32 %v476, 1.442695
      %v478 = vpow.pop %v477
      %v479 = vmul.f32 %v478, %v457
      %v480 = vsel %vm387, %v479, 0.0
      %v481 = vrot.slane %v480, 4
      %v482 = vadd.f32 %v480, %v481
      %v483 = vrot.slane %v482, 2
      %v484 = vadd.f32 %v482, %v483
      %v485 = vrot.slane %v484, 1
      %v486 = vadd.f32 %v484, %v485
      %v487 = vadd.f32 %v486, 1e-13
      %v488 = vrcp.pop %v487
      %v489 = vmul.f32 %v479, %v488
      %v490 = vpack.c.bf16 %v489, %v489
      %491 = vxpose.xlu0.c.b16.start [1/8] %v490, 128
      %492 = vxpose.xlu0.c.b16.cont [2/8] 0, 128
      %493 = vxpose.xlu0.c.b16.cont [3/8] 0, 128
      %494 = vxpose.xlu0.c.b16.cont [4/8] 0, 128
      %495 = vxpose.xlu0.c.b16.cont [5/8] 0, 128
      %496 = vxpose.xlu0.c.b16.cont [6/8] 0, 128
      %497 = vxpose.xlu0.c.b16.cont [7/8] 0, 128
      %498 = vxpose.xlu0.c.b16.end [8/8] 0, 128
      %v499 = vpop.trf.xlu0
      %v500 = vpop.trf.xlu0
      %v501 = vpop.trf.xlu0
      %v502 = vpop.trf.xlu0
      %v503 = vpop.trf.xlu0
      %v504 = vpop.trf.xlu0
      %v505 = vpop.trf.xlu0
      %v506 = vpop.trf.xlu0
      %vm507 = vcmask 64512
      %v509 = vsel %vm507, %v499, 0
      %vm511 = vcmask 1043456
      %v512 = vsel %vm511, %v329, 0
      %514 = vmatprep.subr.bf16.mxu0 0
      %515 = vmatpush1.bf16.msra.mxu0 %v512
      %516 = vmatprep.subr.bf16.mxu0 0
      %517 = vmatpush1.bf16.msra.mxu0 0
      %518 = vmatprep.subr.bf16.mxu0 0
      %519 = vmatpush1.bf16.msra.mxu0 0
      %520 = vmatprep.subr.bf16.mxu0 0
      %521 = vmatpush1.bf16.msra.mxu0 0
      %522 = vmatprep.subr.bf16.mxu0 0
      %523 = vmatpush1.bf16.msra.mxu0 0
      %524 = vmatprep.subr.bf16.mxu0 0
      %525 = vmatpush1.bf16.msra.mxu0 0
      %526 = vmatprep.subr.bf16.mxu0 0
      %527 = vmatpush1.bf16.msra.mxu0 0
      %528 = vmatprep.subr.bf16.mxu0 0
      %529 = vmatpush1.bf16.msra.mxu0 0
      %530 = vmatprep.subr.bf16.mxu0 0
      %531 = vmatpush1.bf16.msra.mxu0 0
      %532 = vmatprep.subr.bf16.mxu0 0
      %533 = vmatpush1.bf16.msra.mxu0 0
      %534 = vmatprep.subr.bf16.mxu0 0
      %535 = vmatpush1.bf16.msra.mxu0 0
      %536 = vmatprep.subr.bf16.mxu0 0
      %537 = vmatpush1.bf16.msra.mxu0 0
      %538 = vmatprep.subr.bf16.mxu0 0
      %539 = vmatpush1.bf16.msra.mxu0 0
      %540 = vmatprep.subr.bf16.mxu0 0
      %541 = vmatpush1.bf16.msra.mxu0 0
      %542 = vmatprep.subr.bf16.mxu0 0
      %543 = vmatpush1.bf16.msra.mxu0 0
      %544 = vmatprep.subr.bf16.mxu0 0
      %545 = vmatpush1.bf16.msra.mxu0 0
      %546 = vmatprep.mubr.bf16.mxu0 0
      %547 = vmatmul.mubr.bf16.gmra.mrb[0].mxu0 %v509
      %v548 = vpop.f32.mrb[0].mxu0
      %v549 = vadd.f32 0.0, %v548
      %v550 = vpop.f32.mrb[0].mxu0
      %v551 = vpop.f32.mrb[0].mxu0
      %v552 = vpop.f32.mrb[0].mxu0
      %553 = vdwg.mxu0
      %555 = vset.pattern.permute.xlu0 0
      %556 = vperm.xlu0 %555, %v328
      %v557 = vpop.permute.xlu0 %556
      %v559 = vmul.f32 %v549, %v557
      %vm560 = vcmask 521216
      %561 = vst.msk [vmem:[%s322] sm:$0x3f] %vm560, %v559
      %p562 = scmp.lt.s32.totalorder %s18, 1
      %s563 = scalar_select %p562, %s18, 1
      %s564 = smul.addr %s563, 8
      %s565 = scalar_lea.vmem %s5, %s564
      %p566 = scmp.lt.s32.totalorder %s18, 1
      %s567 = scalar_select %p566, %s18, 1
      %s568 = smul.addr %s567, 8
      %s569 = scalar_lea.vmem %s6, %s568
      // Predicated region
      $region41: #{mimn_forward.25} parent=39 // pred_check
        %p570 = pneg %p166
      $region42: #{mimn_forward.25} parent=39 // pred_check_branch
        %572 = sbr.rel (%p570) target = $region44
      $region43: #{mimn_forward.25} parent=39 // pred_region
        _
      $region44: #{mimn_forward.25} parent=39 // pred_fallthru
        _
      // Predicated region
      $region45: #{mimn_forward.25} parent=39 // pred_check
        %p573 = pneg %p192
      $region46: #{mimn_forward.25} parent=39 // pred_check_branch
        %575 = sbr.rel (%p573) target = $region48
      $region47: #{mimn_forward.25} parent=39 // pred_region
        _
      $region48: #{mimn_forward.25} parent=39 // pred_fallthru
        _
    $region40: #{mimn_forward.25} parent=5 // pred_fallthru
      _
    %p576 = scmp.le.s32.totalorder 2, %s13
    // Predicated region
    $region49: #{mimn_forward.25} parent=5 // pred_check
      %p577 = pneg %p576
    $region50: #{mimn_forward.25} parent=5 // pred_check_branch
      %579 = sbr.rel (%p577) target = $region52
    $region51: #{mimn_forward.25} parent=5 // pred_region
      %s580 = ssub.s32 %s13, 2
      // Predicated region
      $region53: #{mimn_forward.25} parent=51 // pred_check
        %p581 = pneg %p172
      $region54: #{mimn_forward.25} parent=51 // pred_check_branch
        %583 = sbr.rel (%p581) target = $region56
      $region55: #{mimn_forward.25} parent=51 // pred_region
        %p584 = scmp.lt.s32.totalorder %s19, 1
        %s585 = scalar_select %p584, %s19, 1
        %s586 = smul.addr %s585, 8
        %s587 = scalar_lea.vmem %s5, %s586
      $region56: #{mimn_forward.25} parent=51 // pred_fallthru
        _
      // Predicated region
      $region57: #{mimn_forward.25} parent=51 // pred_check
        %p588 = pneg %p198
      $region58: #{mimn_forward.25} parent=51 // pred_check_branch
        %590 = sbr.rel (%p588) target = $region60
      $region59: #{mimn_forward.25} parent=51 // pred_region
        %p591 = scmp.lt.s32.totalorder %s19, 1
        %s592 = scalar_select %p591, %s19, 1
        %s593 = smul.addr %s592, 8
        %s594 = scalar_lea.vmem %s6, %s593
      $region60: #{mimn_forward.25} parent=51 // pred_fallthru
        _
    $region52: #{mimn_forward.25} parent=5 // pred_fallthru
      _
  $region6: #{mimn_forward.25} parent=0 // loop_footer
    %s17 = sadd.s32 1, %s13
  $region7: #{mimn_forward.25} parent=0 // loop_footer_branch
    %12 = sbr.rel target = $region3
  $region8: #{mimn_forward.25} parent=0 // loop_exit
    _

// kernel: mimn_forward.26
$region0: #{mimn_forward.26}
  #allocation0 [shape = 'u32[]', space=smem, size = 0x4, offset = 0x4, fixed_abs, tag = 'smem constant byte address 0x4 - core index']
  #allocation1 [shape = 'u32[144,128]{1,0:T(1,128)}', space=vmem, size = 0x12000, scoped, tag = 'internal scratch']
  %s0 = inlined_call_operand.vmem [shape: f32[32,128], index: 0, kind: input, shape index: {}]
  %s1 = inlined_call_operand.vmem [shape: bf16[128,32], index: 1, kind: input, shape index: {}]
  %s2 = inlined_call_operand.vmem [shape: f32[1,32], index: 2, kind: input, shape index: {}]
  %s3 = inlined_call_operand.vmem [shape: f32[32,64], index: 3, kind: input, shape index: {}]
  %s4 = inlined_call_operand.vmem [shape: bf16[32,32], index: 4, kind: input, shape index: {}]
  %s5 = inlined_call_operand.vmem [shape: bf16[64,32], index: 5, kind: input, shape index: {}]
  %s6 = inlined_call_operand.vmem [shape: f32[1,32], index: 6, kind: input, shape index: {}]
  %s7 = inlined_call_operand.vmem [shape: f32[32,32], index: 7, kind: output, shape index: {}]
  %s8 = sld [smem:[#allocation0]]
  $region38: #{mimn_forward.26} parent=0
    _
  %s10 = ssub.s32 1, %s8
  %s11 = scalar_select 0, %s10, %s8
  // Predicated region
  $region2: #{mimn_forward.26} parent=0 // pred_check
    _
  $region3: #{mimn_forward.26} parent=0 // pred_check_branch
    %13 = sbr.rel (0) target = $region5
  $region4: #{mimn_forward.26} parent=0 // pred_region
    _
  $region5: #{mimn_forward.26} parent=0 // pred_fallthru
    _
  // Predicated region
  $region6: #{mimn_forward.26} parent=0 // pred_check
    _
  $region7: #{mimn_forward.26} parent=0 // pred_check_branch
    %15 = sbr.rel (0) target = $region9
  $region8: #{mimn_forward.26} parent=0 // pred_region
    _
  $region9: #{mimn_forward.26} parent=0 // pred_fallthru
    _
  // Predicated region
  $region10: #{mimn_forward.26} parent=0 // pred_check
    _
  $region11: #{mimn_forward.26} parent=0 // pred_check_branch
    %17 = sbr.rel (0) target = $region13
  $region12: #{mimn_forward.26} parent=0 // pred_region
    _
  $region13: #{mimn_forward.26} parent=0 // pred_fallthru
    _
  // Predicated region
  $region14: #{mimn_forward.26} parent=0 // pred_check
    _
  $region15: #{mimn_forward.26} parent=0 // pred_check_branch
    %19 = sbr.rel (0) target = $region17
  $region16: #{mimn_forward.26} parent=0 // pred_region
    _
  $region17: #{mimn_forward.26} parent=0 // pred_fallthru
    _
  // Predicated region
  $region18: #{mimn_forward.26} parent=0 // pred_check
    _
  $region19: #{mimn_forward.26} parent=0 // pred_check_branch
    %21 = sbr.rel (0) target = $region21
  $region20: #{mimn_forward.26} parent=0 // pred_region
    _
  $region21: #{mimn_forward.26} parent=0 // pred_fallthru
    _
  // Predicated region
  $region22: #{mimn_forward.26} parent=0 // pred_check
    _
  $region23: #{mimn_forward.26} parent=0 // pred_check_branch
    %23 = sbr.rel (0) target = $region25
  $region24: #{mimn_forward.26} parent=0 // pred_region
    _
  $region25: #{mimn_forward.26} parent=0 // pred_fallthru
    _
  // Predicated region
  $region26: #{mimn_forward.26} parent=0 // pred_check
    _
  $region27: #{mimn_forward.26} parent=0 // pred_check_branch
    %25 = sbr.rel (0) target = $region29
  $region28: #{mimn_forward.26} parent=0 // pred_region
    _
  $region29: #{mimn_forward.26} parent=0 // pred_fallthru
    _
  %v27 = vld [vmem:[%s0] sm:$0xff]
  %v28 = vld [vmem:[%s0 + $0x8] sm:$0xff]
  %v29 = vld [vmem:[%s0 + $0x10] sm:$0xff]
  %v30 = vld [vmem:[%s0 + $0x18] sm:$0xff]
  %v31 = vpack.c.bf16 %v28, %v27
  %v32 = vpack.c.bf16 %v30, %v29
  %v33 = vld [vmem:[%s1] sm:$0xf]
  %v34 = vld [vmem:[%s1 + $0x4] sm:$0xf]
  %v35 = vld [vmem:[%s1 + $0x8] sm:$0xf]
  %v36 = vld [vmem:[%s1 + $0xc] sm:$0xf]
  %v37 = vld [vmem:[%s1 + $0x10] sm:$0xf]
  %v38 = vld [vmem:[%s1 + $0x14] sm:$0xf]
  %v39 = vld [vmem:[%s1 + $0x18] sm:$0xf]
  %v40 = vld [vmem:[%s1 + $0x1c] sm:$0xf]
  %v41 = vld [vmem:[%s1 + $0x20] sm:$0xf]
  %v42 = vld [vmem:[%s1 + $0x24] sm:$0xf]
  %v43 = vld [vmem:[%s1 + $0x28] sm:$0xf]
  %v44 = vld [vmem:[%s1 + $0x2c] sm:$0xf]
  %v45 = vld [vmem:[%s1 + $0x30] sm:$0xf]
  %v46 = vld [vmem:[%s1 + $0x34] sm:$0xf]
  %v47 = vld [vmem:[%s1 + $0x38] sm:$0xf]
  %v48 = vld [vmem:[%s1 + $0x3c] sm:$0xf]
  %v49 = vld [vmem:[%s2] sm:$0x1]
  %v51 = vlaneseq
  %v52 = vshrl.u32 %v51, 7
  %v53 = vsub.s32 0, %v52
  %v54 = vrot.slane %v49, %v53
  %v72 = vunpack.c.l.b16 %v33
  %v73 = vunpack.c.l.b16 %v34
  %v74 = vunpack.c.l.b16 %v35
  %v75 = vunpack.c.l.b16 %v36
  %v76 = vunpack.c.l.b16 %v37
  %v77 = vunpack.c.l.b16 %v38
  %v78 = vunpack.c.l.b16 %v39
  %v79 = vunpack.c.l.b16 %v40
  %v80 = vunpack.c.l.b16 %v41
  %v81 = vunpack.c.l.b16 %v42
  %v82 = vunpack.c.l.b16 %v43
  %v83 = vunpack.c.l.b16 %v44
  %v84 = vunpack.c.l.b16 %v45
  %v85 = vunpack.c.l.b16 %v46
  %v86 = vunpack.c.l.b16 %v47
  %v87 = vunpack.c.l.b16 %v48
  %v88 = vpack.c.b16 %v73, %v72
  %v89 = vpack.c.b16 %v75, %v74
  %v90 = vpack.c.b16 %v77, %v76
  %v91 = vpack.c.b16 %v79, %v78
  %v92 = vpack.c.b16 %v81, %v80
  %v93 = vpack.c.b16 %v83, %v82
  %v94 = vpack.c.b16 %v85, %v84
  %v95 = vpack.c.b16 %v87, %v86
  %104 = vmatprep.subr.bf16.mxu0 0
  %105 = vmatpush1.bf16.msra.mxu0 %v88
  %106 = vmatprep.subr.bf16.mxu0 0
  %107 = vmatpush1.bf16.msra.mxu0 %v89
  %108 = vmatprep.subr.bf16.mxu0 0
  %109 = vmatpush1.bf16.msra.mxu0 %v90
  %110 = vmatprep.subr.bf16.mxu0 0
  %111 = vmatpush1.bf16.msra.mxu0 %v91
  %112 = vmatprep.subr.bf16.mxu0 0
  %113 = vmatpush1.bf16.msra.mxu0 %v92
  %114 = vmatprep.subr.bf16.mxu0 0
  %115 = vmatpush1.bf16.msra.mxu0 %v93
  %116 = vmatprep.subr.bf16.mxu0 0
  %117 = vmatpush1.bf16.msra.mxu0 %v94
  %118 = vmatprep.subr.bf16.mxu0 0
  %119 = vmatpush1.bf16.msra.mxu0 %v95
  %120 = vmatprep.subr.bf16.mxu0 0
  %121 = vmatpush1.bf16.msra.mxu0 0
  %122 = vmatprep.subr.bf16.mxu0 0
  %123 = vmatpush1.bf16.msra.mxu0 0
  %124 = vmatprep.subr.bf16.mxu0 0
  %125 = vmatpush1.bf16.msra.mxu0 0
  %126 = vmatprep.subr.bf16.mxu0 0
  %127 = vmatpush1.bf16.msra.mxu0 0
  %128 = vmatprep.subr.bf16.mxu0 0
  %129 = vmatpush1.bf16.msra.mxu0 0
  %130 = vmatprep.subr.bf16.mxu0 0
  %131 = vmatpush1.bf16.msra.mxu0 0
  %132 = vmatprep.subr.bf16.mxu0 0
  %133 = vmatpush1.bf16.msra.mxu0 0
  %134 = vmatprep.subr.bf16.mxu0 0
  %135 = vmatpush1.bf16.msra.mxu0 0
  %136 = vmatprep.mubr.bf16.mxu0 0
  %137 = vmatmul.mubr.bf16.gmra.mrb[0].mxu0 %v31
  %v138 = vpop.f32.mrb[0].mxu0
  %v139 = vadd.f32 %v54, %v138
  %v140 = vpop.f32.mrb[0].mxu0
  %v141 = vpop.f32.mrb[0].mxu0
  %v142 = vadd.f32 %v54, %v141
  %v143 = vpop.f32.mrb[0].mxu0
  %144 = vmatprep.mubr.bf16.mxu0 0
  %145 = vmatmul.mubr.bf16.gmra.mrb[0].mxu0 %v32
  %v146 = vpop.f32.mrb[0].mxu0
  %v147 = vadd.f32 %v54, %v146
  %v148 = vpop.f32.mrb[0].mxu0
  %v149 = vpop.f32.mrb[0].mxu0
  %v150 = vadd.f32 %v54, %v149
  %v151 = vpop.f32.mrb[0].mxu0
  %152 = vdwg.mxu0
  %v153 = vmax.f32 %v139, 0.0
  %v154 = vmax.f32 %v142, 0.0
  %v155 = vmax.f32 %v147, 0.0
  %v156 = vmax.f32 %v150, 0.0
  %v157 = vpack.c.bf16 %v154, %v153
  %v158 = vpack.c.bf16 %v156, %v155
  %v159 = vld [vmem:[%s4] sm:$0xf]
  %v160 = vld [vmem:[%s4 + $0x4] sm:$0xf]
  %v161 = vld [vmem:[%s4 + $0x8] sm:$0xf]
  %v162 = vld [vmem:[%s4 + $0xc] sm:$0xf]
  %v163 = vld [vmem:[%s3] sm:$0xff]
  %v164 = vld [vmem:[%s3 + $0x8] sm:$0xff]
  %v165 = vld [vmem:[%s3 + $0x10] sm:$0xff]
  %v166 = vld [vmem:[%s3 + $0x18] sm:$0xff]
  %v167 = vpack.c.bf16 %v164, %v163
  %v168 = vpack.c.bf16 %v166, %v165
  %v169 = vld [vmem:[%s5] sm:$0xf]
  %v170 = vld [vmem:[%s5 + $0x4] sm:$0xf]
  %v171 = vld [vmem:[%s5 + $0x8] sm:$0xf]
  %v172 = vld [vmem:[%s5 + $0xc] sm:$0xf]
  %v173 = vld [vmem:[%s5 + $0x10] sm:$0xf]
  %v174 = vld [vmem:[%s5 + $0x14] sm:$0xf]
  %v175 = vld [vmem:[%s5 + $0x18] sm:$0xf]
  %v176 = vld [vmem:[%s5 + $0x1c] sm:$0xf]
  %v185 = vunpack.c.l.b16 %v169
  %v186 = vunpack.c.l.b16 %v170
  %v187 = vunpack.c.l.b16 %v171
  %v188 = vunpack.c.l.b16 %v172
  %v189 = vunpack.c.l.b16 %v173
  %v190 = vunpack.c.l.b16 %v174
  %v191 = vunpack.c.l.b16 %v175
  %v192 = vunpack.c.l.b16 %v176
  %v193 = vpack.c.b16 %v186, %v185
  %v194 = vpack.c.b16 %v188, %v187
  %v195 = vpack.c.b16 %v190, %v189
  %v196 = vpack.c.b16 %v192, %v191
  %vm201 = vcmask 523264
  %v203 = vsel %vm201, %v167, 0
  %v206 = vsel %vm201, %v168, 0
  %208 = vmatprep.subr.bf16.mxu0 0
  %209 = vmatpush1.bf16.msra.mxu0 %v193
  %210 = vmatprep.subr.bf16.mxu0 0
  %211 = vmatpush1.bf16.msra.mxu0 %v194
  %212 = vmatprep.subr.bf16.mxu0 0
  %213 = vmatpush1.bf16.msra.mxu0 %v195
  %214 = vmatprep.subr.bf16.mxu0 0
  %215 = vmatpush1.bf16.msra.mxu0 %v196
  %216 = vmatprep.subr.bf16.mxu0 0
  %217 = vmatpush1.bf16.msra.mxu0 0
  %218 = vmatprep.subr.bf16.mxu0 0
  %219 = vmatpush1.bf16.msra.mxu0 0
  %220 = vmatprep.subr.bf16.mxu0 0
  %221 = vmatpush1.bf16.msra.mxu0 0
  %222 = vmatprep.subr.bf16.mxu0 0
  %223 = vmatpush1.bf16.msra.mxu0 0
  %224 = vmatprep.subr.bf16.mxu0 0
  %225 = vmatpush1.bf16.msra.mxu0 0
  %226 = vmatprep.subr.bf16.mxu0 0
  %227 = vmatpush1.bf16.msra.mxu0 0
  %228 = vmatprep.subr.bf16.mxu0 0
  %229 = vmatpush1.bf16.msra.mxu0 0
  %230 = vmatprep.subr.bf16.mxu0 0
  %231 = vmatpush1.bf16.msra.mxu0 0
  %232 = vmatprep.subr.bf16.mxu0 0
  %233 = vmatpush1.bf16.msra.mxu0 0
  %234 = vmatprep.subr.bf16.mxu0 0
  %235 = vmatpush1.bf16.msra.mxu0 0
  %236 = vmatprep.subr.bf16.mxu0 0
  %237 = vmatpush1.bf16.msra.mxu0 0
  %238 = vmatprep.subr.bf16.mxu0 0
  %239 = vmatpush1.bf16.msra.mxu0 0
  %240 = vmatprep.mubr.bf16.mxu0 0
  %241 = vmatmul.mubr.bf16.gmra.mrb[0].mxu0 %v203
  %v242 = vpop.f32.mrb[0].mxu0
  %v243 = vadd.f32 0.0, %v242
  %v244 = vpop.f32.mrb[0].mxu0
  %v245 = vpop.f32.mrb[0].mxu0
  %v246 = vadd.f32 0.0, %v245
  %v247 = vpop.f32.mrb[0].mxu0
  %248 = vmatprep.mubr.bf16.mxu0 0
  %249 = vmatmul.mubr.bf16.gmra.mrb[0].mxu0 %v206
  %v250 = vpop.f32.mrb[0].mxu0
  %v251 = vadd.f32 0.0, %v250
  %v252 = vpop.f32.mrb[0].mxu0
  %v253 = vpop.f32.mrb[0].mxu0
  %v254 = vadd.f32 0.0, %v253
  %v255 = vpop.f32.mrb[0].mxu0
  %256 = vdwg.mxu0
  %v261 = vunpack.c.l.b16 %v159
  %v262 = vunpack.c.l.b16 %v160
  %v263 = vunpack.c.l.b16 %v161
  %v264 = vunpack.c.l.b16 %v162
  %v265 = vpack.c.b16 %v262, %v261
  %v266 = vpack.c.b16 %v264, %v263
  %vm269 = vcmask 261120
  %v271 = vsel %vm269, %v157, 0
  %v274 = vsel %vm269, %v158, 0
  %276 = vmatprep.subr.bf16.mxu0 0
  %277 = vmatpush1.bf16.msra.mxu0 %v265
  %278 = vmatprep.subr.bf16.mxu0 0
  %279 = vmatpush1.bf16.msra.mxu0 %v266
  %280 = vmatprep.subr.bf16.mxu0 0
  %281 = vmatpush1.bf16.msra.mxu0 0
  %282 = vmatprep.subr.bf16.mxu0 0
  %283 = vmatpush1.bf16.msra.mxu0 0
  %284 = vmatprep.subr.bf16.mxu0 0
  %285 = vmatpush1.bf16.msra.mxu0 0
  %286 = vmatprep.subr.bf16.mxu0 0
  %287 = vmatpush1.bf16.msra.mxu0 0
  %288 = vmatprep.subr.bf16.mxu0 0
  %289 = vmatpush1.bf16.msra.mxu0 0
  %290 = vmatprep.subr.bf16.mxu0 0
  %291 = vmatpush1.bf16.msra.mxu0 0
  %292 = vmatprep.subr.bf16.mxu0 0
  %293 = vmatpush1.bf16.msra.mxu0 0
  %294 = vmatprep.subr.bf16.mxu0 0
  %295 = vmatpush1.bf16.msra.mxu0 0
  %296 = vmatprep.subr.bf16.mxu0 0
  %297 = vmatpush1.bf16.msra.mxu0 0
  %298 = vmatprep.subr.bf16.mxu0 0
  %299 = vmatpush1.bf16.msra.mxu0 0
  %300 = vmatprep.subr.bf16.mxu0 0
  %301 = vmatpush1.bf16.msra.mxu0 0
  %302 = vmatprep.subr.bf16.mxu0 0
  %303 = vmatpush1.bf16.msra.mxu0 0
  %304 = vmatprep.subr.bf16.mxu0 0
  %305 = vmatpush1.bf16.msra.mxu0 0
  %306 = vmatprep.subr.bf16.mxu0 0
  %307 = vmatpush1.bf16.msra.mxu0 0
  %308 = vmatprep.mubr.bf16.mxu0 0
  %309 = vmatmul.mubr.bf16.gmra.mrb[0].mxu0 %v271
  %v310 = vpop.f32.mrb[0].mxu0
  %v311 = vadd.f32 %v243, %v310
  %v312 = vpop.f32.mrb[0].mxu0
  %v313 = vpop.f32.mrb[0].mxu0
  %v314 = vadd.f32 %v246, %v313
  %v315 = vpop.f32.mrb[0].mxu0
  %316 = vmatprep.mubr.bf16.mxu0 0
  %317 = vmatmul.mubr.bf16.gmra.mrb[0].mxu0 %v274
  %v318 = vpop.f32.mrb[0].mxu0
  %v319 = vadd.f32 %v251, %v318
  %v320 = vpop.f32.mrb[0].mxu0
  %v321 = vpop.f32.mrb[0].mxu0
  %v322 = vadd.f32 %v254, %v321
  %v323 = vpop.f32.mrb[0].mxu0
  %324 = vdwg.mxu0
  %v325 = vld [vmem:[%s6] sm:$0x1]
  %v327 = vlaneseq
  %v328 = vshrl.u32 %v327, 7
  %v329 = vsub.s32 0, %v328
  %v330 = vrot.slane %v325, %v329
  %v332 = vadd.f32 %v311, %v330
  %v333 = vadd.f32 %v314, %v330
  %v334 = vadd.f32 %v319, %v330
  %v335 = vadd.f32 %v322, %v330
  %v336 = vmax.f32 %v332, 0.0
  %v337 = vmax.f32 %v333, 0.0
  %v338 = vmax.f32 %v334, 0.0
  %v339 = vmax.f32 %v335, 0.0
  %340 = vst.msk [vmem:[%s7] sm:$0xff] %vm269, %v336
  %341 = vst.msk [vmem:[%s7 + $0x8] sm:$0xff] %vm269, %v337
  %342 = vst.msk [vmem:[%s7 + $0x10] sm:$0xff] %vm269, %v338
  %343 = vst.msk [vmem:[%s7 + $0x18] sm:$0xff] %vm269, %v339
  // Predicated region
  $region30: #{mimn_forward.26} parent=0 // pred_check
    _
  $region31: #{mimn_forward.26} parent=0 // pred_check_branch
    %345 = sbr.rel (0) target = $region33
  $region32: #{mimn_forward.26} parent=0 // pred_region
    _
  $region33: #{mimn_forward.26} parent=0 // pred_fallthru
    _
  // Predicated region
  $region34: #{mimn_forward.26} parent=0 // pred_check
    _
  $region35: #{mimn_forward.26} parent=0 // pred_check_branch
    %347 = sbr.rel (0) target = $region37
  $region36: #{mimn_forward.26} parent=0 // pred_region
    _
  $region37: #{mimn_forward.26} parent=0 // pred_fallthru
    _

// kernel: mimn_forward.28
$region0: #{mimn_forward.28}
  #allocation0 [shape = 'u32[]', space=smem, size = 0x4, offset = 0x4, fixed_abs, tag = 'smem constant byte address 0x4 - core index']
  #allocation1 [shape = 'u32[144,128]{1,0:T(1,128)}', space=vmem, size = 0x12000, scoped, tag = 'internal scratch']
  %s0 = inlined_call_operand.vmem [shape: f32[32,32], index: 0, kind: input, shape index: {}]
  %s1 = inlined_call_operand.vmem [shape: bf16[32,128], index: 1, kind: input, shape index: {}]
  %s2 = inlined_call_operand.vmem [shape: f32[1,128], index: 2, kind: input, shape index: {}]
  %s3 = inlined_call_operand.vmem [shape: f32[32,128], index: 3, kind: output, shape index: {}]
  %s4 = sld [smem:[#allocation0]]
  $region22: #{mimn_forward.28} parent=0
    _
  %s6 = ssub.s32 1, %s4
  %s7 = scalar_select 0, %s6, %s4
  // Predicated region
  $region2: #{mimn_forward.28} parent=0 // pred_check
    _
  $region3: #{mimn_forward.28} parent=0 // pred_check_branch
    %9 = sbr.rel (0) target = $region5
  $region4: #{mimn_forward.28} parent=0 // pred_region
    _
  $region5: #{mimn_forward.28} parent=0 // pred_fallthru
    _
  // Predicated region
  $region6: #{mimn_forward.28} parent=0 // pred_check
    _
  $region7: #{mimn_forward.28} parent=0 // pred_check_branch
    %11 = sbr.rel (0) target = $region9
  $region8: #{mimn_forward.28} parent=0 // pred_region
    _
  $region9: #{mimn_forward.28} parent=0 // pred_fallthru
    _
  // Predicated region
  $region10: #{mimn_forward.28} parent=0 // pred_check
    _
  $region11: #{mimn_forward.28} parent=0 // pred_check_branch
    %13 = sbr.rel (0) target = $region13
  $region12: #{mimn_forward.28} parent=0 // pred_region
    _
  $region13: #{mimn_forward.28} parent=0 // pred_fallthru
    _
  %v15 = vld [vmem:[%s0] sm:$0xff]
  %v16 = vld [vmem:[%s0 + $0x8] sm:$0xff]
  %v17 = vld [vmem:[%s0 + $0x10] sm:$0xff]
  %v18 = vld [vmem:[%s0 + $0x18] sm:$0xff]
  %v19 = vpack.c.bf16 %v16, %v15
  %v20 = vpack.c.bf16 %v18, %v17
  %v21 = vld [vmem:[%s1] sm:$0xf]
  %v22 = vld [vmem:[%s1 + $0x4] sm:$0xf]
  %v23 = vld [vmem:[%s1 + $0x8] sm:$0xf]
  %v24 = vld [vmem:[%s1 + $0xc] sm:$0xf]
  %v25 = vld [vmem:[%s2] sm:$0x1]
  %v27 = vlaneseq
  %v28 = vshrl.u32 %v27, 7
  %v29 = vsub.s32 0, %v28
  %v30 = vrot.slane %v25, %v29
  %v36 = vunpack.c.l.b16 %v21
  %v37 = vunpack.c.l.b16 %v22
  %v38 = vunpack.c.l.b16 %v23
  %v39 = vunpack.c.l.b16 %v24
  %v40 = vpack.c.b16 %v37, %v36
  %v41 = vpack.c.b16 %v39, %v38
  %vm44 = vcmask 261120
  %v46 = vsel %vm44, %v19, 0
  %v49 = vsel %vm44, %v20, 0
  %51 = vmatprep.subr.bf16.mxu0 0
  %52 = vmatpush1.bf16.msra.mxu0 %v40
  %53 = vmatprep.subr.bf16.mxu0 0
  %54 = vmatpush1.bf16.msra.mxu0 %v41
  %55 = vmatprep.subr.bf16.mxu0 0
  %56 = vmatpush1.bf16.msra.mxu0 0
  %57 = vmatprep.subr.bf16.mxu0 0
  %58 = vmatpush1.bf16.msra.mxu0 0
  %59 = vmatprep.subr.bf16.mxu0 0
  %60 = vmatpush1.bf16.msra.mxu0 0
  %61 = vmatprep.subr.bf16.mxu0 0
  %62 = vmatpush1.bf16.msra.mxu0 0
  %63 = vmatprep.subr.bf16.mxu0 0
  %64 = vmatpush1.bf16.msra.mxu0 0
  %65 = vmatprep.subr.bf16.mxu0 0
  %66 = vmatpush1.bf16.msra.mxu0 0
  %67 = vmatprep.subr.bf16.mxu0 0
  %68 = vmatpush1.bf16.msra.mxu0 0
  %69 = vmatprep.subr.bf16.mxu0 0
  %70 = vmatpush1.bf16.msra.mxu0 0
  %71 = vmatprep.subr.bf16.mxu0 0
  %72 = vmatpush1.bf16.msra.mxu0 0
  %73 = vmatprep.subr.bf16.mxu0 0
  %74 = vmatpush1.bf16.msra.mxu0 0
  %75 = vmatprep.subr.bf16.mxu0 0
  %76 = vmatpush1.bf16.msra.mxu0 0
  %77 = vmatprep.subr.bf16.mxu0 0
  %78 = vmatpush1.bf16.msra.mxu0 0
  %79 = vmatprep.subr.bf16.mxu0 0
  %80 = vmatpush1.bf16.msra.mxu0 0
  %81 = vmatprep.subr.bf16.mxu0 0
  %82 = vmatpush1.bf16.msra.mxu0 0
  %83 = vmatprep.mubr.bf16.mxu0 0
  %84 = vmatmul.mubr.bf16.gmra.mrb[0].mxu0 %v46
  %v85 = vpop.f32.mrb[0].mxu0
  %v86 = vadd.f32 %v30, %v85
  %v87 = vpop.f32.mrb[0].mxu0
  %v88 = vpop.f32.mrb[0].mxu0
  %v89 = vadd.f32 %v30, %v88
  %v90 = vpop.f32.mrb[0].mxu0
  %91 = vmatprep.mubr.bf16.mxu0 0
  %92 = vmatmul.mubr.bf16.gmra.mrb[0].mxu0 %v49
  %v93 = vpop.f32.mrb[0].mxu0
  %v94 = vadd.f32 %v30, %v93
  %v95 = vpop.f32.mrb[0].mxu0
  %v96 = vpop.f32.mrb[0].mxu0
  %v97 = vadd.f32 %v30, %v96
  %v98 = vpop.f32.mrb[0].mxu0
  %99 = vdwg.mxu0
  %100 = vst [vmem:[%s3] sm:$0xff] %v86
  %101 = vst [vmem:[%s3 + $0x8] sm:$0xff] %v89
  %102 = vst [vmem:[%s3 + $0x10] sm:$0xff] %v94
  %103 = vst [vmem:[%s3 + $0x18] sm:$0xff] %v97
  // Predicated region
  $region14: #{mimn_forward.28} parent=0 // pred_check
    _
  $region15: #{mimn_forward.28} parent=0 // pred_check_branch
    %105 = sbr.rel (0) target = $region17
  $region16: #{mimn_forward.28} parent=0 // pred_region
    _
  $region17: #{mimn_forward.28} parent=0 // pred_fallthru
    _
  // Predicated region
  $region18: #{mimn_forward.28} parent=0 // pred_check
    _
  $region19: #{mimn_forward.28} parent=0 // pred_check_branch
    %107 = sbr.rel (0) target = $region21
  $region20: #{mimn_forward.28} parent=0 // pred_region
    _
  $region21: #{mimn_forward.28} parent=0 // pred_fallthru
    _

// kernel: mimn_forward.30
$region0: #{mimn_forward.30}
  #allocation0 [shape = 'u32[]', space=smem, size = 0x4, offset = 0x4, fixed_abs, tag = 'smem constant byte address 0x4 - core index']
  #allocation1 [shape = 'u32[144,128]{1,0:T(1,128)}', space=vmem, size = 0x12000, scoped, tag = 'internal scratch']
  %s0 = inlined_call_operand.vmem [shape: f32[32,64], index: 0, kind: input, shape index: {}]
  %s1 = inlined_call_operand.vmem [shape: bf16[64,64], index: 1, kind: input, shape index: {}]
  %s2 = inlined_call_operand.vmem [shape: f32[1,64], index: 2, kind: input, shape index: {}]
  %s3 = inlined_call_operand.vmem [shape: f32[32,64], index: 3, kind: input, shape index: {}, may-alias: {3,4}]
  %s4 = inlined_call_operand.vmem [shape: f32[32,64], index: 4, kind: output, shape index: {}, may-alias: {3,4}]
  %s5 = sld [smem:[#allocation0]]
  $region26: #{mimn_forward.30} parent=0
    _
  %s7 = ssub.s32 1, %s5
  %s8 = scalar_select 0, %s7, %s5
  // Predicated region
  $region2: #{mimn_forward.30} parent=0 // pred_check
    _
  $region3: #{mimn_forward.30} parent=0 // pred_check_branch
    %10 = sbr.rel (0) target = $region5
  $region4: #{mimn_forward.30} parent=0 // pred_region
    _
  $region5: #{mimn_forward.30} parent=0 // pred_fallthru
    _
  // Predicated region
  $region6: #{mimn_forward.30} parent=0 // pred_check
    _
  $region7: #{mimn_forward.30} parent=0 // pred_check_branch
    %12 = sbr.rel (0) target = $region9
  $region8: #{mimn_forward.30} parent=0 // pred_region
    _
  $region9: #{mimn_forward.30} parent=0 // pred_fallthru
    _
  // Predicated region
  $region10: #{mimn_forward.30} parent=0 // pred_check
    _
  $region11: #{mimn_forward.30} parent=0 // pred_check_branch
    %14 = sbr.rel (0) target = $region13
  $region12: #{mimn_forward.30} parent=0 // pred_region
    _
  $region13: #{mimn_forward.30} parent=0 // pred_fallthru
    _
  // Predicated region
  $region14: #{mimn_forward.30} parent=0 // pred_check
    _
  $region15: #{mimn_forward.30} parent=0 // pred_check_branch
    %16 = sbr.rel (0) target = $region17
  $region16: #{mimn_forward.30} parent=0 // pred_region
    _
  $region17: #{mimn_forward.30} parent=0 // pred_fallthru
    _
  %v18 = vld [vmem:[%s0] sm:$0xff]
  %v19 = vld [vmem:[%s0 + $0x8] sm:$0xff]
  %v20 = vld [vmem:[%s0 + $0x10] sm:$0xff]
  %v21 = vld [vmem:[%s0 + $0x18] sm:$0xff]
  %v22 = vld [vmem:[%s3] sm:$0xff]
  %v23 = vld [vmem:[%s3 + $0x8] sm:$0xff]
  %v24 = vld [vmem:[%s3 + $0x10] sm:$0xff]
  %v25 = vld [vmem:[%s3 + $0x18] sm:$0xff]
  %v26 = vpack.c.bf16 %v19, %v18
  %v27 = vpack.c.bf16 %v21, %v20
  %v28 = vld [vmem:[%s1] sm:$0xf]
  %v29 = vld [vmem:[%s1 + $0x4] sm:$0xf]
  %v30 = vld [vmem:[%s1 + $0x8] sm:$0xf]
  %v31 = vld [vmem:[%s1 + $0xc] sm:$0xf]
  %v32 = vld [vmem:[%s1 + $0x10] sm:$0xf]
  %v33 = vld [vmem:[%s1 + $0x14] sm:$0xf]
  %v34 = vld [vmem:[%s1 + $0x18] sm:$0xf]
  %v35 = vld [vmem:[%s1 + $0x1c] sm:$0xf]
  %v36 = vld [vmem:[%s2] sm:$0x1]
  %v38 = vlaneseq
  %v39 = vshrl.u32 %v38, 7
  %v40 = vsub.s32 0, %v39
  %v41 = vrot.slane %v36, %v40
  %v51 = vunpack.c.l.b16 %v28
  %v52 = vunpack.c.l.b16 %v29
  %v53 = vunpack.c.l.b16 %v30
  %v54 = vunpack.c.l.b16 %v31
  %v55 = vunpack.c.l.b16 %v32
  %v56 = vunpack.c.l.b16 %v33
  %v57 = vunpack.c.l.b16 %v34
  %v58 = vunpack.c.l.b16 %v35
  %v59 = vpack.c.b16 %v52, %v51
  %v60 = vpack.c.b16 %v54, %v53
  %v61 = vpack.c.b16 %v56, %v55
  %v62 = vpack.c.b16 %v58, %v57
  %vm67 = vcmask 523264
  %v69 = vsel %vm67, %v26, 0
  %v72 = vsel %vm67, %v27, 0
  %74 = vmatprep.subr.bf16.mxu0 0
  %75 = vmatpush1.bf16.msra.mxu0 %v59
  %76 = vmatprep.subr.bf16.mxu0 0
  %77 = vmatpush1.bf16.msra.mxu0 %v60
  %78 = vmatprep.subr.bf16.mxu0 0
  %79 = vmatpush1.bf16.msra.mxu0 %v61
  %80 = vmatprep.subr.bf16.mxu0 0
  %81 = vmatpush1.bf16.msra.mxu0 %v62
  %82 = vmatprep.subr.bf16.mxu0 0
  %83 = vmatpush1.bf16.msra.mxu0 0
  %84 = vmatprep.subr.bf16.mxu0 0
  %85 = vmatpush1.bf16.msra.mxu0 0
  %86 = vmatprep.subr.bf16.mxu0 0
  %87 = vmatpush1.bf16.msra.mxu0 0
  %88 = vmatprep.subr.bf16.mxu0 0
  %89 = vmatpush1.bf16.msra.mxu0 0
  %90 = vmatprep.subr.bf16.mxu0 0
  %91 = vmatpush1.bf16.msra.mxu0 0
  %92 = vmatprep.subr.bf16.mxu0 0
  %93 = vmatpush1.bf16.msra.mxu0 0
  %94 = vmatprep.subr.bf16.mxu0 0
  %95 = vmatpush1.bf16.msra.mxu0 0
  %96 = vmatprep.subr.bf16.mxu0 0
  %97 = vmatpush1.bf16.msra.mxu0 0
  %98 = vmatprep.subr.bf16.mxu0 0
  %99 = vmatpush1.bf16.msra.mxu0 0
  %100 = vmatprep.subr.bf16.mxu0 0
  %101 = vmatpush1.bf16.msra.mxu0 0
  %102 = vmatprep.subr.bf16.mxu0 0
  %103 = vmatpush1.bf16.msra.mxu0 0
  %104 = vmatprep.subr.bf16.mxu0 0
  %105 = vmatpush1.bf16.msra.mxu0 0
  %106 = vmatprep.mubr.bf16.mxu0 0
  %107 = vmatmul.mubr.bf16.gmra.mrb[0].mxu0 %v69
  %v108 = vpop.f32.mrb[0].mxu0
  %v109 = vadd.f32 %v41, %v108
  %v110 = vpop.f32.mrb[0].mxu0
  %v111 = vpop.f32.mrb[0].mxu0
  %v112 = vadd.f32 %v41, %v111
  %v113 = vpop.f32.mrb[0].mxu0
  %114 = vmatprep.mubr.bf16.mxu0 0
  %115 = vmatmul.mubr.bf16.gmra.mrb[0].mxu0 %v72
  %v116 = vpop.f32.mrb[0].mxu0
  %v117 = vadd.f32 %v41, %v116
  %v118 = vpop.f32.mrb[0].mxu0
  %v119 = vpop.f32.mrb[0].mxu0
  %v120 = vadd.f32 %v41, %v119
  %v121 = vpop.f32.mrb[0].mxu0
  %122 = vdwg.mxu0
  %v123 = vxor.u32 %v109, 2147483648
  %v124 = vxor.u32 %v112, 2147483648
  %v125 = vxor.u32 %v117, 2147483648
  %v126 = vxor.u32 %v120, 2147483648
  %v127 = vmul.f32 %v123, 1.442695
  %v128 = vpow.pop %v127
  %v129 = vmul.f32 %v124, 1.442695
  %v130 = vpow.pop %v129
  %v131 = vmul.f32 %v125, 1.442695
  %v132 = vpow.pop %v131
  %v133 = vmul.f32 %v126, 1.442695
  %v134 = vpow.pop %v133
  %v135 = vadd.f32 %v128, 1.0
  %v136 = vadd.f32 %v130, 1.0
  %v137 = vadd.f32 %v132, 1.0
  %v138 = vadd.f32 %v134, 1.0
  %v139 = vrcp.pop %v135
  %v140 = vmul.f32 1.0, %v139
  %v141 = vrcp.pop %v136
  %v142 = vmul.f32 1.0, %v141
  %v143 = vrcp.pop %v137
  %v144 = vmul.f32 1.0, %v143
  %v145 = vrcp.pop %v138
  %v146 = vmul.f32 1.0, %v145
  %v147 = vmul.f32 %v140, %v18
  %v148 = vmul.f32 %v142, %v19
  %v149 = vmul.f32 %v144, %v20
  %v150 = vmul.f32 %v146, %v21
  %v151 = vsub.f32 1.0, %v140
  %v152 = vsub.f32 1.0, %v142
  %v153 = vsub.f32 1.0, %v144
  %v154 = vsub.f32 1.0, %v146
  %v155 = vmul.f32 %v151, %v22
  %v156 = vmul.f32 %v152, %v23
  %v157 = vmul.f32 %v153, %v24
  %v158 = vmul.f32 %v154, %v25
  %v159 = vadd.f32 %v147, %v155
  %v160 = vadd.f32 %v148, %v156
  %v161 = vadd.f32 %v149, %v157
  %v162 = vadd.f32 %v150, %v158
  %163 = vst.msk [vmem:[%s4] sm:$0xff] %vm67, %v159
  %164 = vst.msk [vmem:[%s4 + $0x8] sm:$0xff] %vm67, %v160
  %165 = vst.msk [vmem:[%s4 + $0x10] sm:$0xff] %vm67, %v161
  %166 = vst.msk [vmem:[%s4 + $0x18] sm:$0xff] %vm67, %v162
  // Predicated region
  $region18: #{mimn_forward.30} parent=0 // pred_check
    _
  $region19: #{mimn_forward.30} parent=0 // pred_check_branch
    %168 = sbr.rel (0) target = $region21
  $region20: #{mimn_forward.30} parent=0 // pred_region
    _
  $region21: #{mimn_forward.30} parent=0 // pred_fallthru
    _
  // Predicated region
  $region22: #{mimn_forward.30} parent=0 // pred_check
    _
  $region23: #{mimn_forward.30} parent=0 // pred_check_branch
    %170 = sbr.rel (0) target = $region25
  $region24: #{mimn_forward.30} parent=0 // pred_region
    _
  $region25: #{mimn_forward.30} parent=0 // pred_fallthru
    _

// kernel: mimn_forward.41
$region0: #{mimn_forward.41}
  #allocation0 [shape = 'u32[]', space=smem, size = 0x4, offset = 0x4, fixed_abs, tag = 'smem constant byte address 0x4 - core index']
  #allocation1 [shape = 'u32[144,128]{1,0:T(1,128)}', space=vmem, size = 0x12000, scoped, tag = 'internal scratch']
  %s0 = inlined_call_operand.vmem [shape: f32[4,8,64], index: 0, kind: input, shape index: {}]
  %s1 = inlined_call_operand.vmem [shape: f32[4,8,1], index: 1, kind: input, shape index: {}]
  %s2 = inlined_call_operand.vmem [shape: f32[4,1,128], index: 2, kind: output, shape index: {}]
  %s3 = sld [smem:[#allocation0]]
  $region41: #{mimn_forward.41} parent=0
    _
  %s5 = ssub.s32 1, %s3
  %s6 = scalar_select 0, %s5, %s3
  loop: start=0, step=1, limit=6
  $region2: #{mimn_forward.41} parent=0 // loop_pre_header
    _
  $region3: #{mimn_forward.41} parent=0 // loop_header
    %s8 = sphi 0, %s12
    %p9 = scmp.ge.s32.totalorder %s8, 6
    %s18 = sphi 0, %s20
    %s21 = sphi 0, %s18
    %s22 = sphi 0, %s21
    %s38 = sphi 0, %s22
    %s44 = sphi 0, %s46
    %s47 = sphi 0, %s44
    %s48 = sphi 0, %s47
    %s64 = sphi 0, %s48
    %s70 = sphi 0, %s72
    %s73 = sphi 0, %s70
    %s74 = sphi 0, %s73
    %s90 = sphi 0, %s74
  $region4: #{mimn_forward.41} parent=0 // loop_header_branch
    %11 = sbr.rel (%p9) target = $region8
  $region5: #{mimn_forward.41} parent=0 // loop_body
    %s13 = ssub.s32 %s8, 1
    %s14 = ssub.s32 %s8, 2
    %s15 = sadd.s32 %s8, 1
    %s16 = ssub.s32 %s8, %s15
    %p17 = scmp.eq.s32.totalorder %s16, 0
    %s19 = sadd.s32 %s18, 1
    %s20 = scalar_select %p17, %s18, %s19
    %p23 = pneg %p17
    %p24 = scmp.eq.s32.totalorder %s8, 3
    %p25 = por %p23, %p24
    %p26 = scmp.ne.s32.totalorder %s18, %s21
    %p27 = scmp.eq.s32.totalorder %s8, 0
    %p28 = por %p26, %p27
    %p29 = scmp.ne.s32.totalorder %s18, %s21
    %p30 = scmp.eq.s32.totalorder %s13, 3
    %p31 = por %p29, %p30
    %p32 = scmp.ne.s32.totalorder %s21, %s22
    %p33 = scmp.eq.s32.totalorder %s13, 0
    %p34 = por %p32, %p33
    %p35 = scmp.ne.s32.totalorder %s21, %s22
    %p36 = scmp.eq.s32.totalorder %s14, 3
    %p37 = por %p35, %p36
    %p39 = scmp.ne.s32.totalorder %s22, %s38
    %p40 = scmp.eq.s32.totalorder %s14, 0
    %p41 = por %p39, %p40
    %s42 = ssub.s32 %s8, %s15
    %p43 = scmp.eq.s32.totalorder %s42, 0
    %s45 = sadd.s32 %s44, 1
    %s46 = scalar_select %p43, %s44, %s45
    %p49 = pneg %p43
    %p50 = scmp.eq.s32.totalorder %s8, 3
    %p51 = por %p49, %p50
    %p52 = scmp.ne.s32.totalorder %s44, %s47
    %p53 = scmp.eq.s32.totalorder %s8, 0
    %p54 = por %p52, %p53
    %p55 = scmp.ne.s32.totalorder %s44, %s47
    %p56 = scmp.eq.s32.totalorder %s13, 3
    %p57 = por %p55, %p56
    %p58 = scmp.ne.s32.totalorder %s47, %s48
    %p59 = scmp.eq.s32.totalorder %s13, 0
    %p60 = por %p58, %p59
    %p61 = scmp.ne.s32.totalorder %s47, %s48
    %p62 = scmp.eq.s32.totalorder %s14, 3
    %p63 = por %p61, %p62
    %p65 = scmp.ne.s32.totalorder %s48, %s64
    %p66 = scmp.eq.s32.totalorder %s14, 0
    %p67 = por %p65, %p66
    %s68 = ssub.s32 %s8, %s15
    %p69 = scmp.eq.s32.totalorder %s68, 0
    %s71 = sadd.s32 %s70, 1
    %s72 = scalar_select %p69, %s70, %s71
    %p75 = pneg %p69
    %p76 = scmp.eq.s32.totalorder %s8, 3
    %p77 = por %p75, %p76
    %p78 = scmp.ne.s32.totalorder %s70, %s73
    %p79 = scmp.eq.s32.totalorder %s8, 0
    %p80 = por %p78, %p79
    %p81 = scmp.ne.s32.totalorder %s70, %s73
    %p82 = scmp.eq.s32.totalorder %s13, 3
    %p83 = por %p81, %p82
    %p84 = scmp.ne.s32.totalorder %s73, %s74
    %p85 = scmp.eq.s32.totalorder %s13, 0
    %p86 = por %p84, %p85
    %p87 = scmp.ne.s32.totalorder %s73, %s74
    %p88 = scmp.eq.s32.totalorder %s14, 3
    %p89 = por %p87, %p88
    %p91 = scmp.ne.s32.totalorder %s74, %s90
    %p92 = scmp.eq.s32.totalorder %s14, 0
    %p93 = por %p91, %p92
    %p94 = scmp.le.s32.totalorder 1, %s8
    %p95 = scmp.lt.s32.totalorder %s8, 5
    %p96 = pnand %p94, %p95
    %p97 = pneg %p96
    // Predicated region
    $region9: #{mimn_forward.41} parent=5 // pred_check
      _
    $region10: #{mimn_forward.41} parent=5 // pred_check_branch
      %99 = sbr.rel (%p96) target = $region12
    $region11: #{mimn_forward.41} parent=5 // pred_region
      %s100 = ssub.s32 %s8, 1
    $region12: #{mimn_forward.41} parent=5 // pred_fallthru
      _
    %p101 = scmp.lt.s32.totalorder %s8, 4
    // Predicated region
    $region13: #{mimn_forward.41} parent=5 // pred_check
      %p102 = pneg %p101
    $region14: #{mimn_forward.41} parent=5 // pred_check_branch
      %104 = sbr.rel (%p102) target = $region16
    $region15: #{mimn_forward.41} parent=5 // pred_region
      // Predicated region
      $region17: #{mimn_forward.41} parent=15 // pred_check
        %p105 = pneg %p28
      $region18: #{mimn_forward.41} parent=15 // pred_check_branch
        %107 = sbr.rel (%p105) target = $region20
      $region19: #{mimn_forward.41} parent=15 // pred_region
        %p108 = scmp.lt.s32.totalorder %s8, 3
        %s109 = scalar_select %p108, %s8, 3
        %s110 = smul.addr %s109, 8
        %s111 = scalar_lea.vmem %s0, %s110
      $region20: #{mimn_forward.41} parent=15 // pred_fallthru
        _
      // Predicated region
      $region21: #{mimn_forward.41} parent=15 // pred_check
        %p112 = pneg %p54
      $region22: #{mimn_forward.41} parent=15 // pred_check_branch
        %114 = sbr.rel (%p112) target = $region24
      $region23: #{mimn_forward.41} parent=15 // pred_region
        %p115 = scmp.lt.s32.totalorder %s8, 3
        %s116 = scalar_select %p115, %s8, 3
        %s117 = smul.addr %s116, 8
        %s118 = scalar_lea.vmem %s1, %s117
      $region24: #{mimn_forward.41} parent=15 // pred_fallthru
        _
    $region16: #{mimn_forward.41} parent=5 // pred_fallthru
      _
    %p119 = scmp.le.s32.totalorder 1, %s8
    %p120 = scmp.lt.s32.totalorder %s8, 5
    %p121 = pnand %p119, %p120
    %p122 = pneg %p121
    // Predicated region
    $region25: #{mimn_forward.41} parent=5 // pred_check
      _
    $region26: #{mimn_forward.41} parent=5 // pred_check_branch
      %124 = sbr.rel (%p121) target = $region28
    $region27: #{mimn_forward.41} parent=5 // pred_region
      %s125 = ssub.s32 %s8, 1
      %p126 = scmp.lt.s32.totalorder %s13, 3
      %s127 = scalar_select %p126, %s13, 3
      %s128 = smul.addr %s127, 8
      %s129 = scalar_lea.vmem %s0, %s128
      %p130 = pneg %p34
      %p131 = pneg %p31
      %p132 = scmp.lt.s32.totalorder %s13, 3
      %s133 = scalar_select %p132, %s13, 3
      %s134 = smul.addr %s133, 8
      %s135 = scalar_lea.vmem %s1, %s134
      %p136 = pneg %p60
      %p137 = pneg %p57
      %p138 = pneg %p86
      %p139 = pneg %p83
      %p140 = scmp.lt.s32.totalorder %s13, 3
      %s141 = scalar_select %p140, %s13, 3
      %s142 = scalar_lea.vmem %s2, %s141
      %p143 = scmp.lt.s32.totalorder %s13, 3
      %s144 = scalar_select %p143, %s13, 3
      %s145 = smul.addr %s144, 8
      %s146 = scalar_lea.vmem %s0, %s145
      %p147 = scmp.lt.s32.totalorder %s13, 3
      %s148 = scalar_select %p147, %s13, 3
      %s149 = smul.addr %s148, 8
      %s150 = scalar_lea.vmem %s1, %s149
      %p151 = scmp.lt.s32.totalorder %s13, 3
      %s152 = scalar_select %p151, %s13, 3
      %s153 = scalar_lea.vmem %s2, %s152
      %v154 = vld [vmem:[%s146] sm:$0xff]
      %v155 = vld [vmem:[%s150] sm:$0xff]
      %vm156 = vcmask 7168
      %v157 = vsel %vm156, %v155, 0.0
      %v158 = vrot.slane %v157, 4
      %v159 = vadd.f32 %v157, %v158
      %v160 = vrot.slane %v159, 2
      %v161 = vadd.f32 %v159, %v160
      %v162 = vrot.slane %v161, 1
      %v163 = vadd.f32 %v161, %v162
      %165 = vset.pattern.permute.xlu0 0
      %166 = vperm.xlu0 %165, %v155
      %v167 = vpop.permute.xlu0 %166
      %v169 = vmul.f32 %v154, %v167
      %vm170 = vcmask 523264
      %v171 = vsel %vm170, %v169, 0.0
      %v172 = vrot.slane %v171, 4
      %v173 = vadd.f32 %v171, %v172
      %v174 = vrot.slane %v173, 2
      %v175 = vadd.f32 %v173, %v174
      %v176 = vrot.slane %v175, 1
      %v177 = vadd.f32 %v175, %v176
      %v178 = vrcp.pop %v163
      %180 = vset.pattern.permute.xlu0 0
      %181 = vperm.xlu0 %180, %v178
      %v182 = vpop.permute.xlu0 %181
      %v184 = vmul.f32 %v177, %v182
      %v185 = vsub.f32 1.0, %v155
      %v186 = vmul.f32 %v185, -10000000.0
      %188 = vset.pattern.permute.xlu0 0
      %189 = vperm.xlu0 %188, %v186
      %v190 = vpop.permute.xlu0 %189
      %v192 = vadd.f32 %v169, %v190
      %v193 = vsel %vm170, %v192, -inf
      %v194 = vrot.slane %v193, 4
      %v195 = vmax.f32 %v193, %v194
      %v196 = vrot.slane %v195, 2
      %v197 = vmax.f32 %v195, %v196
      %v198 = vrot.slane %v197, 1
      %v199 = vmax.f32 %v197, %v198
      %201 = vrot.lane.b32.xlu0 %v199, 64
      %v202 = vpop.permute.xlu0 %201
      %v204 = vsel %vm170, %v184, %v202
      %205 = vst [vmem:[%s153] sm:$0x1] %v204
      %p206 = scmp.lt.s32.totalorder %s13, 3
      %s207 = scalar_select %p206, %s13, 3
      %s208 = scalar_lea.vmem %s2, %s207
      // Predicated region
      $region29: #{mimn_forward.41} parent=27 // pred_check
        %p209 = pneg %p83
      $region30: #{mimn_forward.41} parent=27 // pred_check_branch
        %211 = sbr.rel (%p209) target = $region32
      $region31: #{mimn_forward.41} parent=27 // pred_region
        _
      $region32: #{mimn_forward.41} parent=27 // pred_fallthru
        _
    $region28: #{mimn_forward.41} parent=5 // pred_fallthru
      _
    %p212 = scmp.le.s32.totalorder 2, %s8
    // Predicated region
    $region33: #{mimn_forward.41} parent=5 // pred_check
      %p213 = pneg %p212
    $region34: #{mimn_forward.41} parent=5 // pred_check_branch
      %215 = sbr.rel (%p213) target = $region36
    $region35: #{mimn_forward.41} parent=5 // pred_region
      %s216 = ssub.s32 %s8, 2
      // Predicated region
      $region37: #{mimn_forward.41} parent=35 // pred_check
        %p217 = pneg %p89
      $region38: #{mimn_forward.41} parent=35 // pred_check_branch
        %219 = sbr.rel (%p217) target = $region40
      $region39: #{mimn_forward.41} parent=35 // pred_region
        %p220 = scmp.lt.s32.totalorder %s14, 3
        %s221 = scalar_select %p220, %s14, 3
        %s222 = scalar_lea.vmem %s2, %s221
      $region40: #{mimn_forward.41} parent=35 // pred_fallthru
        _
    $region36: #{mimn_forward.41} parent=5 // pred_fallthru
      _
  $region6: #{mimn_forward.41} parent=0 // loop_footer
    %s12 = sadd.s32 1, %s8
  $region7: #{mimn_forward.41} parent=0 // loop_footer_branch
    %7 = sbr.rel target = $region3
  $region8: #{mimn_forward.41} parent=0 // loop_exit
    _

// kernel: mimn_forward.31
$region0: #{mimn_forward.31}
  #allocation0 [shape = 'u32[]', space=smem, size = 0x4, offset = 0x4, fixed_abs, tag = 'smem constant byte address 0x4 - core index']
  #allocation1 [shape = 'u32[144,128]{1,0:T(1,128)}', space=vmem, size = 0x12000, scoped, tag = 'internal scratch']
  %s0 = inlined_call_operand.vmem [shape: f32[32,64], index: 0, kind: input, shape index: {}]
  %s1 = inlined_call_operand.vmem [shape: bf16[64,32], index: 1, kind: input, shape index: {}]
  %s2 = inlined_call_operand.vmem [shape: f32[1,32], index: 2, kind: input, shape index: {}]
  %s3 = inlined_call_operand.vmem [shape: f32[32,64], index: 3, kind: input, shape index: {}]
  %s4 = inlined_call_operand.vmem [shape: bf16[32,32], index: 4, kind: input, shape index: {}]
  %s5 = inlined_call_operand.vmem [shape: bf16[64,32], index: 5, kind: input, shape index: {}]
  %s6 = inlined_call_operand.vmem [shape: f32[1,32], index: 6, kind: input, shape index: {}]
  %s7 = inlined_call_operand.vmem [shape: f32[32,32], index: 7, kind: output, shape index: {}]
  %s8 = sld [smem:[#allocation0]]
  $region38: #{mimn_forward.31} parent=0
    _
  %s10 = ssub.s32 1, %s8
  %s11 = scalar_select 0, %s10, %s8
  // Predicated region
  $region2: #{mimn_forward.31} parent=0 // pred_check
    _
  $region3: #{mimn_forward.31} parent=0 // pred_check_branch
    %13 = sbr.rel (0) target = $region5
  $region4: #{mimn_forward.31} parent=0 // pred_region
    _
  $region5: #{mimn_forward.31} parent=0 // pred_fallthru
    _
  // Predicated region
  $region6: #{mimn_forward.31} parent=0 // pred_check
    _
  $region7: #{mimn_forward.31} parent=0 // pred_check_branch
    %15 = sbr.rel (0) target = $region9
  $region8: #{mimn_forward.31} parent=0 // pred_region
    _
  $region9: #{mimn_forward.31} parent=0 // pred_fallthru
    _
  // Predicated region
  $region10: #{mimn_forward.31} parent=0 // pred_check
    _
  $region11: #{mimn_forward.31} parent=0 // pred_check_branch
    %17 = sbr.rel (0) target = $region13
  $region12: #{mimn_forward.31} parent=0 // pred_region
    _
  $region13: #{mimn_forward.31} parent=0 // pred_fallthru
    _
  // Predicated region
  $region14: #{mimn_forward.31} parent=0 // pred_check
    _
  $region15: #{mimn_forward.31} parent=0 // pred_check_branch
    %19 = sbr.rel (0) target = $region17
  $region16: #{mimn_forward.31} parent=0 // pred_region
    _
  $region17: #{mimn_forward.31} parent=0 // pred_fallthru
    _
  // Predicated region
  $region18: #{mimn_forward.31} parent=0 // pred_check
    _
  $region19: #{mimn_forward.31} parent=0 // pred_check_branch
    %21 = sbr.rel (0) target = $region21
  $region20: #{mimn_forward.31} parent=0 // pred_region
    _
  $region21: #{mimn_forward.31} parent=0 // pred_fallthru
    _
  // Predicated region
  $region22: #{mimn_forward.31} parent=0 // pred_check
    _
  $region23: #{mimn_forward.31} parent=0 // pred_check_branch
    %23 = sbr.rel (0) target = $region25
  $region24: #{mimn_forward.31} parent=0 // pred_region
    _
  $region25: #{mimn_forward.31} parent=0 // pred_fallthru
    _
  // Predicated region
  $region26: #{mimn_forward.31} parent=0 // pred_check
    _
  $region27: #{mimn_forward.31} parent=0 // pred_check_branch
    %25 = sbr.rel (0) target = $region29
  $region28: #{mimn_forward.31} parent=0 // pred_region
    _
  $region29: #{mimn_forward.31} parent=0 // pred_fallthru
    _
  %v27 = vld [vmem:[%s0] sm:$0xff]
  %v28 = vld [vmem:[%s0 + $0x8] sm:$0xff]
  %v29 = vld [vmem:[%s0 + $0x10] sm:$0xff]
  %v30 = vld [vmem:[%s0 + $0x18] sm:$0xff]
  %v31 = vpack.c.bf16 %v28, %v27
  %v32 = vpack.c.bf16 %v30, %v29
  %v33 = vld [vmem:[%s1] sm:$0xf]
  %v34 = vld [vmem:[%s1 + $0x4] sm:$0xf]
  %v35 = vld [vmem:[%s1 + $0x8] sm:$0xf]
  %v36 = vld [vmem:[%s1 + $0xc] sm:$0xf]
  %v37 = vld [vmem:[%s1 + $0x10] sm:$0xf]
  %v38 = vld [vmem:[%s1 + $0x14] sm:$0xf]
  %v39 = vld [vmem:[%s1 + $0x18] sm:$0xf]
  %v40 = vld [vmem:[%s1 + $0x1c] sm:$0xf]
  %v41 = vld [vmem:[%s2] sm:$0x1]
  %v43 = vlaneseq
  %v44 = vshrl.u32 %v43, 7
  %v45 = vsub.s32 0, %v44
  %v46 = vrot.slane %v41, %v45
  %v56 = vunpack.c.l.b16 %v33
  %v57 = vunpack.c.l.b16 %v34
  %v58 = vunpack.c.l.b16 %v35
  %v59 = vunpack.c.l.b16 %v36
  %v60 = vunpack.c.l.b16 %v37
  %v61 = vunpack.c.l.b16 %v38
  %v62 = vunpack.c.l.b16 %v39
  %v63 = vunpack.c.l.b16 %v40
  %v64 = vpack.c.b16 %v57, %v56
  %v65 = vpack.c.b16 %v59, %v58
  %v66 = vpack.c.b16 %v61, %v60
  %v67 = vpack.c.b16 %v63, %v62
  %vm72 = vcmask 523264
  %v74 = vsel %vm72, %v31, 0
  %v77 = vsel %vm72, %v32, 0
  %79 = vmatprep.subr.bf16.mxu0 0
  %80 = vmatpush1.bf16.msra.mxu0 %v64
  %81 = vmatprep.subr.bf16.mxu0 0
  %82 = vmatpush1.bf16.msra.mxu0 %v65
  %83 = vmatprep.subr.bf16.mxu0 0
  %84 = vmatpush1.bf16.msra.mxu0 %v66
  %85 = vmatprep.subr.bf16.mxu0 0
  %86 = vmatpush1.bf16.msra.mxu0 %v67
  %87 = vmatprep.subr.bf16.mxu0 0
  %88 = vmatpush1.bf16.msra.mxu0 0
  %89 = vmatprep.subr.bf16.mxu0 0
  %90 = vmatpush1.bf16.msra.mxu0 0
  %91 = vmatprep.subr.bf16.mxu0 0
  %92 = vmatpush1.bf16.msra.mxu0 0
  %93 = vmatprep.subr.bf16.mxu0 0
  %94 = vmatpush1.bf16.msra.mxu0 0
  %95 = vmatprep.subr.bf16.mxu0 0
  %96 = vmatpush1.bf16.msra.mxu0 0
  %97 = vmatprep.subr.bf16.mxu0 0
  %98 = vmatpush1.bf16.msra.mxu0 0
  %99 = vmatprep.subr.bf16.mxu0 0
  %100 = vmatpush1.bf16.msra.mxu0 0
  %101 = vmatprep.subr.bf16.mxu0 0
  %102 = vmatpush1.bf16.msra.mxu0 0
  %103 = vmatprep.subr.bf16.mxu0 0
  %104 = vmatpush1.bf16.msra.mxu0 0
  %105 = vmatprep.subr.bf16.mxu0 0
  %106 = vmatpush1.bf16.msra.mxu0 0
  %107 = vmatprep.subr.bf16.mxu0 0
  %108 = vmatpush1.bf16.msra.mxu0 0
  %109 = vmatprep.subr.bf16.mxu0 0
  %110 = vmatpush1.bf16.msra.mxu0 0
  %111 = vmatprep.mubr.bf16.mxu0 0
  %112 = vmatmul.mubr.bf16.gmra.mrb[0].mxu0 %v74
  %v113 = vpop.f32.mrb[0].mxu0
  %v114 = vadd.f32 %v46, %v113
  %v115 = vpop.f32.mrb[0].mxu0
  %v116 = vpop.f32.mrb[0].mxu0
  %v117 = vadd.f32 %v46, %v116
  %v118 = vpop.f32.mrb[0].mxu0
  %119 = vmatprep.mubr.bf16.mxu0 0
  %120 = vmatmul.mubr.bf16.gmra.mrb[0].mxu0 %v77
  %v121 = vpop.f32.mrb[0].mxu0
  %v122 = vadd.f32 %v46, %v121
  %v123 = vpop.f32.mrb[0].mxu0
  %v124 = vpop.f32.mrb[0].mxu0
  %v125 = vadd.f32 %v46, %v124
  %v126 = vpop.f32.mrb[0].mxu0
  %127 = vdwg.mxu0
  %v128 = vmax.f32 %v114, 0.0
  %v129 = vmax.f32 %v117, 0.0
  %v130 = vmax.f32 %v122, 0.0
  %v131 = vmax.f32 %v125, 0.0
  %v132 = vpack.c.bf16 %v129, %v128
  %v133 = vpack.c.bf16 %v131, %v130
  %v134 = vld [vmem:[%s4] sm:$0xf]
  %v135 = vld [vmem:[%s4 + $0x4] sm:$0xf]
  %v136 = vld [vmem:[%s4 + $0x8] sm:$0xf]
  %v137 = vld [vmem:[%s4 + $0xc] sm:$0xf]
  %v138 = vld [vmem:[%s3] sm:$0xff]
  %v139 = vld [vmem:[%s3 + $0x8] sm:$0xff]
  %v140 = vld [vmem:[%s3 + $0x10] sm:$0xff]
  %v141 = vld [vmem:[%s3 + $0x18] sm:$0xff]
  %v142 = vpack.c.bf16 %v139, %v138
  %v143 = vpack.c.bf16 %v141, %v140
  %v144 = vld [vmem:[%s5] sm:$0xf]
  %v145 = vld [vmem:[%s5 + $0x4] sm:$0xf]
  %v146 = vld [vmem:[%s5 + $0x8] sm:$0xf]
  %v147 = vld [vmem:[%s5 + $0xc] sm:$0xf]
  %v148 = vld [vmem:[%s5 + $0x10] sm:$0xf]
  %v149 = vld [vmem:[%s5 + $0x14] sm:$0xf]
  %v150 = vld [vmem:[%s5 + $0x18] sm:$0xf]
  %v151 = vld [vmem:[%s5 + $0x1c] sm:$0xf]
  %v160 = vunpack.c.l.b16 %v144
  %v161 = vunpack.c.l.b16 %v145
  %v162 = vunpack.c.l.b16 %v146
  %v163 = vunpack.c.l.b16 %v147
  %v164 = vunpack.c.l.b16 %v148
  %v165 = vunpack.c.l.b16 %v149
  %v166 = vunpack.c.l.b16 %v150
  %v167 = vunpack.c.l.b16 %v151
  %v168 = vpack.c.b16 %v161, %v160
  %v169 = vpack.c.b16 %v163, %v162
  %v170 = vpack.c.b16 %v165, %v164
  %v171 = vpack.c.b16 %v167, %v166
  %v177 = vsel %vm72, %v142, 0
  %v180 = vsel %vm72, %v143, 0
  %182 = vmatprep.subr.bf16.mxu0 0
  %183 = vmatpush1.bf16.msra.mxu0 %v168
  %184 = vmatprep.subr.bf16.mxu0 0
  %185 = vmatpush1.bf16.msra.mxu0 %v169
  %186 = vmatprep.subr.bf16.mxu0 0
  %187 = vmatpush1.bf16.msra.mxu0 %v170
  %188 = vmatprep.subr.bf16.mxu0 0
  %189 = vmatpush1.bf16.msra.mxu0 %v171
  %190 = vmatprep.subr.bf16.mxu0 0
  %191 = vmatpush1.bf16.msra.mxu0 0
  %192 = vmatprep.subr.bf16.mxu0 0
  %193 = vmatpush1.bf16.msra.mxu0 0
  %194 = vmatprep.subr.bf16.mxu0 0
  %195 = vmatpush1.bf16.msra.mxu0 0
  %196 = vmatprep.subr.bf16.mxu0 0
  %197 = vmatpush1.bf16.msra.mxu0 0
  %198 = vmatprep.subr.bf16.mxu0 0
  %199 = vmatpush1.bf16.msra.mxu0 0
  %200 = vmatprep.subr.bf16.mxu0 0
  %201 = vmatpush1.bf16.msra.mxu0 0
  %202 = vmatprep.subr.bf16.mxu0 0
  %203 = vmatpush1.bf16.msra.mxu0 0
  %204 = vmatprep.subr.bf16.mxu0 0
  %205 = vmatpush1.bf16.msra.mxu0 0
  %206 = vmatprep.subr.bf16.mxu0 0
  %207 = vmatpush1.bf16.msra.mxu0 0
  %208 = vmatprep.subr.bf16.mxu0 0
  %209 = vmatpush1.bf16.msra.mxu0 0
  %210 = vmatprep.subr.bf16.mxu0 0
  %211 = vmatpush1.bf16.msra.mxu0 0
  %212 = vmatprep.subr.bf16.mxu0 0
  %213 = vmatpush1.bf16.msra.mxu0 0
  %214 = vmatprep.mubr.bf16.mxu0 0
  %215 = vmatmul.mubr.bf16.gmra.mrb[0].mxu0 %v177
  %v216 = vpop.f32.mrb[0].mxu0
  %v217 = vadd.f32 0.0, %v216
  %v218 = vpop.f32.mrb[0].mxu0
  %v219 = vpop.f32.mrb[0].mxu0
  %v220 = vadd.f32 0.0, %v219
  %v221 = vpop.f32.mrb[0].mxu0
  %222 = vmatprep.mubr.bf16.mxu0 0
  %223 = vmatmul.mubr.bf16.gmra.mrb[0].mxu0 %v180
  %v224 = vpop.f32.mrb[0].mxu0
  %v225 = vadd.f32 0.0, %v224
  %v226 = vpop.f32.mrb[0].mxu0
  %v227 = vpop.f32.mrb[0].mxu0
  %v228 = vadd.f32 0.0, %v227
  %v229 = vpop.f32.mrb[0].mxu0
  %230 = vdwg.mxu0
  %v235 = vunpack.c.l.b16 %v134
  %v236 = vunpack.c.l.b16 %v135
  %v237 = vunpack.c.l.b16 %v136
  %v238 = vunpack.c.l.b16 %v137
  %v239 = vpack.c.b16 %v236, %v235
  %v240 = vpack.c.b16 %v238, %v237
  %vm243 = vcmask 261120
  %v245 = vsel %vm243, %v132, 0
  %v248 = vsel %vm243, %v133, 0
  %250 = vmatprep.subr.bf16.mxu0 0
  %251 = vmatpush1.bf16.msra.mxu0 %v239
  %252 = vmatprep.subr.bf16.mxu0 0
  %253 = vmatpush1.bf16.msra.mxu0 %v240
  %254 = vmatprep.subr.bf16.mxu0 0
  %255 = vmatpush1.bf16.msra.mxu0 0
  %256 = vmatprep.subr.bf16.mxu0 0
  %257 = vmatpush1.bf16.msra.mxu0 0
  %258 = vmatprep.subr.bf16.mxu0 0
  %259 = vmatpush1.bf16.msra.mxu0 0
  %260 = vmatprep.subr.bf16.mxu0 0
  %261 = vmatpush1.bf16.msra.mxu0 0
  %262 = vmatprep.subr.bf16.mxu0 0
  %263 = vmatpush1.bf16.msra.mxu0 0
  %264 = vmatprep.subr.bf16.mxu0 0
  %265 = vmatpush1.bf16.msra.mxu0 0
  %266 = vmatprep.subr.bf16.mxu0 0
  %267 = vmatpush1.bf16.msra.mxu0 0
  %268 = vmatprep.subr.bf16.mxu0 0
  %269 = vmatpush1.bf16.msra.mxu0 0
  %270 = vmatprep.subr.bf16.mxu0 0
  %271 = vmatpush1.bf16.msra.mxu0 0
  %272 = vmatprep.subr.bf16.mxu0 0
  %273 = vmatpush1.bf16.msra.mxu0 0
  %274 = vmatprep.subr.bf16.mxu0 0
  %275 = vmatpush1.bf16.msra.mxu0 0
  %276 = vmatprep.subr.bf16.mxu0 0
  %277 = vmatpush1.bf16.msra.mxu0 0
  %278 = vmatprep.subr.bf16.mxu0 0
  %279 = vmatpush1.bf16.msra.mxu0 0
  %280 = vmatprep.subr.bf16.mxu0 0
  %281 = vmatpush1.bf16.msra.mxu0 0
  %282 = vmatprep.mubr.bf16.mxu0 0
  %283 = vmatmul.mubr.bf16.gmra.mrb[0].mxu0 %v245
  %v284 = vpop.f32.mrb[0].mxu0
  %v285 = vadd.f32 %v217, %v284
  %v286 = vpop.f32.mrb[0].mxu0
  %v287 = vpop.f32.mrb[0].mxu0
  %v288 = vadd.f32 %v220, %v287
  %v289 = vpop.f32.mrb[0].mxu0
  %290 = vmatprep.mubr.bf16.mxu0 0
  %291 = vmatmul.mubr.bf16.gmra.mrb[0].mxu0 %v248
  %v292 = vpop.f32.mrb[0].mxu0
  %v293 = vadd.f32 %v225, %v292
  %v294 = vpop.f32.mrb[0].mxu0
  %v295 = vpop.f32.mrb[0].mxu0
  %v296 = vadd.f32 %v228, %v295
  %v297 = vpop.f32.mrb[0].mxu0
  %298 = vdwg.mxu0
  %v299 = vld [vmem:[%s6] sm:$0x1]
  %v301 = vlaneseq
  %v302 = vshrl.u32 %v301, 7
  %v303 = vsub.s32 0, %v302
  %v304 = vrot.slane %v299, %v303
  %v306 = vadd.f32 %v285, %v304
  %v307 = vadd.f32 %v288, %v304
  %v308 = vadd.f32 %v293, %v304
  %v309 = vadd.f32 %v296, %v304
  %v310 = vmax.f32 %v306, 0.0
  %v311 = vmax.f32 %v307, 0.0
  %v312 = vmax.f32 %v308, 0.0
  %v313 = vmax.f32 %v309, 0.0
  %314 = vst.msk [vmem:[%s7] sm:$0xff] %vm243, %v310
  %315 = vst.msk [vmem:[%s7 + $0x8] sm:$0xff] %vm243, %v311
  %316 = vst.msk [vmem:[%s7 + $0x10] sm:$0xff] %vm243, %v312
  %317 = vst.msk [vmem:[%s7 + $0x18] sm:$0xff] %vm243, %v313
  // Predicated region
  $region30: #{mimn_forward.31} parent=0 // pred_check
    _
  $region31: #{mimn_forward.31} parent=0 // pred_check_branch
    %319 = sbr.rel (0) target = $region33
  $region32: #{mimn_forward.31} parent=0 // pred_region
    _
  $region33: #{mimn_forward.31} parent=0 // pred_fallthru
    _
  // Predicated region
  $region34: #{mimn_forward.31} parent=0 // pred_check
    _
  $region35: #{mimn_forward.31} parent=0 // pred_check_branch
    %321 = sbr.rel (0) target = $region37
  $region36: #{mimn_forward.31} parent=0 // pred_region
    _
  $region37: #{mimn_forward.31} parent=0 // pred_fallthru
    _

// kernel: mimn_forward.42
$region0: #{mimn_forward.42}
  #allocation0 [shape = 'u32[]', space=smem, size = 0x4, offset = 0x4, fixed_abs, tag = 'smem constant byte address 0x4 - core index']
  #allocation1 [shape = 'u32[144,128]{1,0:T(1,128)}', space=vmem, size = 0x12000, scoped, tag = 'internal scratch']
  %s0 = inlined_call_operand.vmem [shape: f32[2,256], index: 0, kind: input, shape index: {}]
  %s1 = inlined_call_operand.vmem [shape: bf16[256,32], index: 1, kind: input, shape index: {}]
  %s2 = inlined_call_operand.vmem [shape: f32[1,32], index: 2, kind: input, shape index: {}]
  %s3 = inlined_call_operand.vmem [shape: f32[2,32], index: 3, kind: output, shape index: {}]
  %s4 = sld [smem:[#allocation0]]
  $region22: #{mimn_forward.42} parent=0
    _
  %s6 = ssub.s32 1, %s4
  %s7 = scalar_select 0, %s6, %s4
  // Predicated region
  $region2: #{mimn_forward.42} parent=0 // pred_check
    _
  $region3: #{mimn_forward.42} parent=0 // pred_check_branch
    %9 = sbr.rel (0) target = $region5
  $region4: #{mimn_forward.42} parent=0 // pred_region
    _
  $region5: #{mimn_forward.42} parent=0 // pred_fallthru
    _
  // Predicated region
  $region6: #{mimn_forward.42} parent=0 // pred_check
    _
  $region7: #{mimn_forward.42} parent=0 // pred_check_branch
    %11 = sbr.rel (0) target = $region9
  $region8: #{mimn_forward.42} parent=0 // pred_region
    _
  $region9: #{mimn_forward.42} parent=0 // pred_fallthru
    _
  // Predicated region
  $region10: #{mimn_forward.42} parent=0 // pred_check
    _
  $region11: #{mimn_forward.42} parent=0 // pred_check_branch
    %13 = sbr.rel (0) target = $region13
  $region12: #{mimn_forward.42} parent=0 // pred_region
    _
  $region13: #{mimn_forward.42} parent=0 // pred_fallthru
    _
  %v15 = vld [vmem:[%s0] sm:$0xf]
  %v18 = vunpack.c.l.s4 1983009808
  %v19 = vunpack.c.0.s8 %v18
  %v20 = vlaneseq
  %v21 = vshrl.u32 %v20, 7
  %v22 = vsub.s32 %v19, %v21
  %v23 = vrot.slane %v15, %v22
  %v24 = vcombine.high %v23, %v23
  %v27 = vpack.c.bf16 %v23, %v23
  %v28 = vpack.c.bf16 %v24, %v24
  %v29 = vld [vmem:[%s1] sm:$0xf]
  %v30 = vld [vmem:[%s1 + $0x4] sm:$0xf]
  %v31 = vld [vmem:[%s1 + $0x8] sm:$0xf]
  %v32 = vld [vmem:[%s1 + $0xc] sm:$0xf]
  %v33 = vld [vmem:[%s1 + $0x10] sm:$0xf]
  %v34 = vld [vmem:[%s1 + $0x14] sm:$0xf]
  %v35 = vld [vmem:[%s1 + $0x18] sm:$0xf]
  %v36 = vld [vmem:[%s1 + $0x1c] sm:$0xf]
  %v37 = vld [vmem:[%s1 + $0x20] sm:$0xf]
  %v38 = vld [vmem:[%s1 + $0x24] sm:$0xf]
  %v39 = vld [vmem:[%s1 + $0x28] sm:$0xf]
  %v40 = vld [vmem:[%s1 + $0x2c] sm:$0xf]
  %v41 = vld [vmem:[%s1 + $0x30] sm:$0xf]
  %v42 = vld [vmem:[%s1 + $0x34] sm:$0xf]
  %v43 = vld [vmem:[%s1 + $0x38] sm:$0xf]
  %v44 = vld [vmem:[%s1 + $0x3c] sm:$0xf]
  %v45 = vld [vmem:[%s1 + $0x40] sm:$0xf]
  %v46 = vld [vmem:[%s1 + $0x44] sm:$0xf]
  %v47 = vld [vmem:[%s1 + $0x48] sm:$0xf]
  %v48 = vld [vmem:[%s1 + $0x4c] sm:$0xf]
  %v49 = vld [vmem:[%s1 + $0x50] sm:$0xf]
  %v50 = vld [vmem:[%s1 + $0x54] sm:$0xf]
  %v51 = vld [vmem:[%s1 + $0x58] sm:$0xf]
  %v52 = vld [vmem:[%s1 + $0x5c] sm:$0xf]
  %v53 = vld [vmem:[%s1 + $0x60] sm:$0xf]
  %v54 = vld [vmem:[%s1 + $0x64] sm:$0xf]
  %v55 = vld [vmem:[%s1 + $0x68] sm:$0xf]
  %v56 = vld [vmem:[%s1 + $0x6c] sm:$0xf]
  %v57 = vld [vmem:[%s1 + $0x70] sm:$0xf]
  %v58 = vld [vmem:[%s1 + $0x74] sm:$0xf]
  %v59 = vld [vmem:[%s1 + $0x78] sm:$0xf]
  %v60 = vld [vmem:[%s1 + $0x7c] sm:$0xf]
  %v61 = vld [vmem:[%s2] sm:$0x1]
  %v63 = vlaneseq
  %v64 = vshrl.u32 %v63, 7
  %v65 = vsub.s32 0, %v64
  %v66 = vrot.slane %v61, %v65
  %v100 = vunpack.c.l.b16 %v29
  %v101 = vunpack.c.l.b16 %v30
  %v102 = vunpack.c.l.b16 %v31
  %v103 = vunpack.c.l.b16 %v32
  %v104 = vunpack.c.l.b16 %v33
  %v105 = vunpack.c.l.b16 %v34
  %v106 = vunpack.c.l.b16 %v35
  %v107 = vunpack.c.l.b16 %v36
  %v108 = vunpack.c.l.b16 %v37
  %v109 = vunpack.c.l.b16 %v38
  %v110 = vunpack.c.l.b16 %v39
  %v111 = vunpack.c.l.b16 %v40
  %v112 = vunpack.c.l.b16 %v41
  %v113 = vunpack.c.l.b16 %v42
  %v114 = vunpack.c.l.b16 %v43
  %v115 = vunpack.c.l.b16 %v44
  %v116 = vunpack.c.l.b16 %v45
  %v117 = vunpack.c.l.b16 %v46
  %v118 = vunpack.c.l.b16 %v47
  %v119 = vunpack.c.l.b16 %v48
  %v120 = vunpack.c.l.b16 %v49
  %v121 = vunpack.c.l.b16 %v50
  %v122 = vunpack.c.l.b16 %v51
  %v123 = vunpack.c.l.b16 %v52
  %v124 = vunpack.c.l.b16 %v53
  %v125 = vunpack.c.l.b16 %v54
  %v126 = vunpack.c.l.b16 %v55
  %v127 = vunpack.c.l.b16 %v56
  %v128 = vunpack.c.l.b16 %v57
  %v129 = vunpack.c.l.b16 %v58
  %v130 = vunpack.c.l.b16 %v59
  %v131 = vunpack.c.l.b16 %v60
  %v132 = vpack.c.b16 %v101, %v100
  %v133 = vpack.c.b16 %v103, %v102
  %v134 = vpack.c.b16 %v105, %v104
  %v135 = vpack.c.b16 %v107, %v106
  %v136 = vpack.c.b16 %v109, %v108
  %v137 = vpack.c.b16 %v111, %v110
  %v138 = vpack.c.b16 %v113, %v112
  %v139 = vpack.c.b16 %v115, %v114
  %v140 = vpack.c.b16 %v117, %v116
  %v141 = vpack.c.b16 %v119, %v118
  %v142 = vpack.c.b16 %v121, %v120
  %v143 = vpack.c.b16 %v123, %v122
  %v144 = vpack.c.b16 %v125, %v124
  %v145 = vpack.c.b16 %v127, %v126
  %v146 = vpack.c.b16 %v129, %v128
  %v147 = vpack.c.b16 %v131, %v130
  %164 = vmatprep.subr.bf16.mxu0 0
  %165 = vmatpush1.bf16.msra.mxu0 %v132
  %166 = vmatprep.subr.bf16.mxu0 0
  %167 = vmatpush1.bf16.msra.mxu0 %v133
  %168 = vmatprep.subr.bf16.mxu0 0
  %169 = vmatpush1.bf16.msra.mxu0 %v134
  %170 = vmatprep.subr.bf16.mxu0 0
  %171 = vmatpush1.bf16.msra.mxu0 %v135
  %172 = vmatprep.subr.bf16.mxu0 0
  %173 = vmatpush1.bf16.msra.mxu0 %v136
  %174 = vmatprep.subr.bf16.mxu0 0
  %175 = vmatpush1.bf16.msra.mxu0 %v137
  %176 = vmatprep.subr.bf16.mxu0 0
  %177 = vmatpush1.bf16.msra.mxu0 %v138
  %178 = vmatprep.subr.bf16.mxu0 0
  %179 = vmatpush1.bf16.msra.mxu0 %v139
  %180 = vmatprep.subr.bf16.mxu0 0
  %181 = vmatpush1.bf16.msra.mxu0 %v140
  %182 = vmatprep.subr.bf16.mxu0 0
  %183 = vmatpush1.bf16.msra.mxu0 %v141
  %184 = vmatprep.subr.bf16.mxu0 0
  %185 = vmatpush1.bf16.msra.mxu0 %v142
  %186 = vmatprep.subr.bf16.mxu0 0
  %187 = vmatpush1.bf16.msra.mxu0 %v143
  %188 = vmatprep.subr.bf16.mxu0 0
  %189 = vmatpush1.bf16.msra.mxu0 %v144
  %190 = vmatprep.subr.bf16.mxu0 0
  %191 = vmatpush1.bf16.msra.mxu0 %v145
  %192 = vmatprep.subr.bf16.mxu0 0
  %193 = vmatpush1.bf16.msra.mxu0 %v146
  %194 = vmatprep.subr.bf16.mxu0 0
  %195 = vmatpush1.bf16.msra.mxu0 %v147
  %196 = vmatprep.mubr.bf16.mxu0 %v28
  %197 = vmatmul.mubr.bf16.gmra.mrb[0].mxu0 %v27
  %v198 = vpop.f32.mrb[0].mxu0
  %v199 = vadd.f32 %v66, %v198
  %v200 = vpop.f32.mrb[0].mxu0
  %v201 = vpop.f32.mrb[0].mxu0
  %v202 = vpop.f32.mrb[0].mxu0
  %203 = vdwg.mxu0
  %v204 = vtanh.pop %v199
  %vm205 = vcmask 254976
  %206 = vst.msk [vmem:[%s3] sm:$0x3] %vm205, %v204
  // Predicated region
  $region14: #{mimn_forward.42} parent=0 // pred_check
    _
  $region15: #{mimn_forward.42} parent=0 // pred_check_branch
    %208 = sbr.rel (0) target = $region17
  $region16: #{mimn_forward.42} parent=0 // pred_region
    _
  $region17: #{mimn_forward.42} parent=0 // pred_fallthru
    _
  // Predicated region
  $region18: #{mimn_forward.42} parent=0 // pred_check
    _
  $region19: #{mimn_forward.42} parent=0 // pred_check_branch
    %210 = sbr.rel (0) target = $region21
  $region20: #{mimn_forward.42} parent=0 // pred_region
    _
  $region21: #{mimn_forward.42} parent=0 // pred_fallthru
    _

// kernel: mimn_forward.43
$region0: #{mimn_forward.43}
  #allocation0 [shape = 'u32[]', space=smem, size = 0x4, offset = 0x4, fixed_abs, tag = 'smem constant byte address 0x4 - core index']
  #allocation1 [shape = 'u32[144,128]{1,0:T(1,128)}', space=vmem, size = 0x12000, scoped, tag = 'internal scratch']
  %s0 = inlined_call_operand.vmem [shape: f32[2,32], index: 0, kind: input, shape index: {}]
  %s1 = inlined_call_operand.vmem [shape: bf16[32,3], index: 1, kind: input, shape index: {}]
  %s2 = inlined_call_operand.vmem [shape: f32[1,3], index: 2, kind: input, shape index: {}]
  %s3 = inlined_call_operand.vmem [shape: f32[2,3], index: 3, kind: output, shape index: {}]
  %s4 = sld [smem:[#allocation0]]
  $region22: #{mimn_forward.43} parent=0
    _
  %s6 = ssub.s32 1, %s4
  %s7 = scalar_select 0, %s6, %s4
  // Predicated region
  $region2: #{mimn_forward.43} parent=0 // pred_check
    _
  $region3: #{mimn_forward.43} parent=0 // pred_check_branch
    %9 = sbr.rel (0) target = $region5
  $region4: #{mimn_forward.43} parent=0 // pred_region
    _
  $region5: #{mimn_forward.43} parent=0 // pred_fallthru
    _
  // Predicated region
  $region6: #{mimn_forward.43} parent=0 // pred_check
    _
  $region7: #{mimn_forward.43} parent=0 // pred_check_branch
    %11 = sbr.rel (0) target = $region9
  $region8: #{mimn_forward.43} parent=0 // pred_region
    _
  $region9: #{mimn_forward.43} parent=0 // pred_fallthru
    _
  // Predicated region
  $region10: #{mimn_forward.43} parent=0 // pred_check
    _
  $region11: #{mimn_forward.43} parent=0 // pred_check_branch
    %13 = sbr.rel (0) target = $region13
  $region12: #{mimn_forward.43} parent=0 // pred_region
    _
  $region13: #{mimn_forward.43} parent=0 // pred_fallthru
    _
  %v15 = vld [vmem:[%s0] sm:$0x3]
  %v16 = vpack.c.bf16 %v15, %v15
  %v17 = vld [vmem:[%s1] sm:$0xf]
  %v18 = vld [vmem:[%s1 + $0x4] sm:$0xf]
  %v19 = vld [vmem:[%s1 + $0x8] sm:$0xf]
  %v20 = vld [vmem:[%s1 + $0xc] sm:$0xf]
  %v21 = vld [vmem:[%s2] sm:$0x1]
  %v23 = vlaneseq
  %v24 = vshrl.u32 %v23, 7
  %v25 = vsub.s32 0, %v24
  %v26 = vrot.slane %v21, %v25
  %v32 = vunpack.c.l.b16 %v17
  %v33 = vunpack.c.l.b16 %v18
  %v34 = vunpack.c.l.b16 %v19
  %v35 = vunpack.c.l.b16 %v20
  %v36 = vpack.c.b16 %v33, %v32
  %v37 = vpack.c.b16 %v35, %v34
  %vm40 = vcmask 261120
  %v42 = vsel %vm40, %v16, 0
  %44 = vmatprep.subr.bf16.mxu0 0
  %45 = vmatpush1.bf16.msra.mxu0 %v36
  %46 = vmatprep.subr.bf16.mxu0 0
  %47 = vmatpush1.bf16.msra.mxu0 %v37
  %48 = vmatprep.subr.bf16.mxu0 0
  %49 = vmatpush1.bf16.msra.mxu0 0
  %50 = vmatprep.subr.bf16.mxu0 0
  %51 = vmatpush1.bf16.msra.mxu0 0
  %52 = vmatprep.subr.bf16.mxu0 0
  %53 = vmatpush1.bf16.msra.mxu0 0
  %54 = vmatprep.subr.bf16.mxu0 0
  %55 = vmatpush1.bf16.msra.mxu0 0
  %56 = vmatprep.subr.bf16.mxu0 0
  %57 = vmatpush1.bf16.msra.mxu0 0
  %58 = vmatprep.subr.bf16.mxu0 0
  %59 = vmatpush1.bf16.msra.mxu0 0
  %60 = vmatprep.subr.bf16.mxu0 0
  %61 = vmatpush1.bf16.msra.mxu0 0
  %62 = vmatprep.subr.bf16.mxu0 0
  %63 = vmatpush1.bf16.msra.mxu0 0
  %64 = vmatprep.subr.bf16.mxu0 0
  %65 = vmatpush1.bf16.msra.mxu0 0
  %66 = vmatprep.subr.bf16.mxu0 0
  %67 = vmatpush1.bf16.msra.mxu0 0
  %68 = vmatprep.subr.bf16.mxu0 0
  %69 = vmatpush1.bf16.msra.mxu0 0
  %70 = vmatprep.subr.bf16.mxu0 0
  %71 = vmatpush1.bf16.msra.mxu0 0
  %72 = vmatprep.subr.bf16.mxu0 0
  %73 = vmatpush1.bf16.msra.mxu0 0
  %74 = vmatprep.subr.bf16.mxu0 0
  %75 = vmatpush1.bf16.msra.mxu0 0
  %76 = vmatprep.mubr.bf16.mxu0 0
  %77 = vmatmul.mubr.bf16.gmra.mrb[0].mxu0 %v42
  %v78 = vpop.f32.mrb[0].mxu0
  %v79 = vadd.f32 %v26, %v78
  %v80 = vpop.f32.mrb[0].mxu0
  %v81 = vpop.f32.mrb[0].mxu0
  %v82 = vpop.f32.mrb[0].mxu0
  %83 = vdwg.mxu0
  %vm84 = vcmask 17408
  %85 = vst.msk [vmem:[%s3] sm:$0x3] %vm84, %v79
  // Predicated region
  $region14: #{mimn_forward.43} parent=0 // pred_check
    _
  $region15: #{mimn_forward.43} parent=0 // pred_check_branch
    %87 = sbr.rel (0) target = $region17
  $region16: #{mimn_forward.43} parent=0 // pred_region
    _
  $region17: #{mimn_forward.43} parent=0 // pred_fallthru
    _
  // Predicated region
  $region18: #{mimn_forward.43} parent=0 // pred_check
    _
  $region19: #{mimn_forward.43} parent=0 // pred_check_branch
    %89 = sbr.rel (0) target = $region21
  $region20: #{mimn_forward.43} parent=0 // pred_region
    _
  $region21: #{mimn_forward.43} parent=0 // pred_fallthru
    _

</llo_original>
